<compile_context>
chip_gen: v7x
topology: tpu7x:2x2x1
jax: 0.10.0
libtpu: 0.0.40
codegen_flags: <defaults>
</compile_context>

<pallas_src>
import functools
import math

import jax
import jax.numpy as jnp
from jax.experimental import pallas as pl
from jax.experimental.pallas import tpu as pltpu  # noqa: F401

# ----------------------------- model hyper-params -----------------------------
BSZ = 2            # batch of images / text groups
NUM_CAPTIONS = 3   # captions per image
IMG = 16           # image spatial size
IMG_C = 3          # image channels
PATCH = 8          # patch size  -> 4 patches + cls = seq 5
WIDTH = 32         # transformer width (vision & text)
HEADS = 2
DH = WIDTH // HEADS
CTX = 8            # text context length
VOCAB = 64
EMBED = 32         # shared embedding dim

N_PATCH = (IMG // PATCH) * (IMG // PATCH)   # 4 patches / image
S_IMG = N_PATCH + 1                         # 5 (cls + patches)

_BF16 = jnp.bfloat16
_F32 = jnp.float32
_NEG = -1e30


# ============================ in-kernel building blocks ========================
def _mm(a, w, b=None):
    """a: fp32 [M, K], w: bf16 [K, N], b: fp32 [1, N] or None -> fp32 [M, N]."""
    out = jnp.dot(a.astype(_BF16), w, preferred_element_type=_F32)
    if b is not None:
        out = out + b
    return out


def _layernorm(x, g, b):
    mu = jnp.mean(x, axis=-1, keepdims=True)
    xc = x - mu
    var = jnp.mean(xc * xc, axis=-1, keepdims=True)
    return xc * jax.lax.rsqrt(var + 1e-5) * g + b


def _softmax_rows(s):
    m = jnp.max(s, axis=-1, keepdims=True)
    e = jnp.exp(s - m)
    return e * pl.reciprocal(jnp.sum(e, axis=-1, keepdims=True), approx=True)


def _quickgelu(x):
    # x * sigmoid(1.702 x) == x / (1 + exp(-1.702 x)); reciprocal on the EUP.
    return x * pl.reciprocal(1.0 + jnp.exp(-1.702 * x), approx=True)


def _attention_proj(qkv, attn_bias, w_out, b_out):
    """Multi-head attention + output projection, all heads in one call.

    qkv:       fp32 [R, 3*WIDTH] (heads contiguous along lanes)
    attn_bias: fp32 [R, R] additive mask (0 allowed / -1e30 masked); encodes both
               the block-diagonal per-sequence structure and (for text) causality.
    w_out:     bf16 [WIDTH, WIDTH], b_out: fp32 [1, WIDTH]
    """
    scale = 1.0 / math.sqrt(DH)
    out = None
    for h in range(HEADS):
        q = qkv[:, h * DH:(h + 1) * DH].astype(_BF16)
        k = qkv[:, WIDTH + h * DH:WIDTH + (h + 1) * DH].astype(_BF16)
        v = qkv[:, 2 * WIDTH + h * DH:2 * WIDTH + (h + 1) * DH].astype(_BF16)
        s = jax.lax.dot_general(
            q, k, dimension_numbers=(((1,), (1,)), ((), ())),
            preferred_element_type=_F32,
        ) * scale + attn_bias                                    # [R, R]
        p = _softmax_rows(s)
        o = jnp.dot(p.astype(_BF16), v, preferred_element_type=_F32)  # [R, DH]
        # concat(heads) @ w_out  ==  sum_h  o_h @ w_out[h*DH:(h+1)*DH, :]
        contrib = jnp.dot(o.astype(_BF16), w_out[h * DH:(h + 1) * DH, :],
                          preferred_element_type=_F32)
        out = contrib if out is None else out + contrib
    return out + b_out


def _residual_attention_block(x, attn_bias,
                              ln1_g, ln1_b, w_qkv, b_qkv, w_out, b_out,
                              ln2_g, ln2_b, w_fc, b_fc, w_cproj, b_cproj):
    """CLIP ResidualAttentionBlock on a flat [R, WIDTH] activation slab."""
    h = _layernorm(x, ln1_g, ln1_b)
    qkv = _mm(h, w_qkv, b_qkv)                                   # [R, 3W]
    x = x + _attention_proj(qkv, attn_bias, w_out, b_out)
    h2 = _layernorm(x, ln2_g, ln2_b)
    h2 = _quickgelu(_mm(h2, w_fc, b_fc))                         # [R, 4W]
    return x + _mm(h2, w_cproj, b_cproj)


# ================================ fused kernels ================================
def image_encoder_kernel(
    patches_ref, w_patch_ref, asm_sel_ref, asm_add_ref, cls_sel_ref, attn_bias_ref,
    ln_pre_g_ref, ln_pre_b_ref,
    ln1_g_ref, ln1_b_ref, w_qkv_ref, b_qkv_ref, w_out_ref, b_out_ref,
    ln2_g_ref, ln2_b_ref, w_fc_ref, b_fc_ref, w_cproj_ref, b_cproj_ref,
    ln_post_g_ref, ln_post_b_ref, proj_ref,
    o_ref,
):
    # conv(stride=patch) as one matmul over flattened non-overlapping patches.
    patch_emb = _mm(patches_ref[...], w_patch_ref[...])          # [N*P, W]
    # Assemble [N*(P+1), W]: cls rows + per-patch rows, plus positional embedding
    # (asm_sel scatters patch rows; asm_add carries cls + pos, built in glue).
    x = jnp.dot(asm_sel_ref[...], patch_emb,
                preferred_element_type=_F32) + asm_add_ref[...]  # [R, W]
    x = _layernorm(x, ln_pre_g_ref[...], ln_pre_b_ref[...])
    x = _residual_attention_block(
        x, attn_bias_ref[...],
        ln1_g_ref[...], ln1_b_ref[...], w_qkv_ref[...], b_qkv_ref[...],
        w_out_ref[...], b_out_ref[...],
        ln2_g_ref[...], ln2_b_ref[...], w_fc_ref[...], b_fc_ref[...],
        w_cproj_ref[...], b_cproj_ref[...],
    )
    # take the cls row of every image via a selection matmul -> [N, W]
    x_cls = jnp.dot(cls_sel_ref[...], x, preferred_element_type=_F32)
    x_cls = _layernorm(x_cls, ln_post_g_ref[...], ln_post_b_ref[...])
    o_ref[...] = _mm(x_cls, proj_ref[...]).astype(o_ref.dtype)   # [N, EMBED]


def text_encoder_kernel(
    x_ref, eot_sel_ref, attn_bias_ref,
    ln1_g_ref, ln1_b_ref, w_qkv_ref, b_qkv_ref, w_out_ref, b_out_ref,
    ln2_g_ref, ln2_b_ref, w_fc_ref, b_fc_ref, w_cproj_ref, b_cproj_ref,
    ln_final_g_ref, ln_final_b_ref, text_proj_ref,
    o_ref,
):
    x = _residual_attention_block(
        x_ref[...], attn_bias_ref[...],
        ln1_g_ref[...], ln1_b_ref[...], w_qkv_ref[...], b_qkv_ref[...],
        w_out_ref[...], b_out_ref[...],
        ln2_g_ref[...], ln2_b_ref[...], w_fc_ref[...], b_fc_ref[...],
        w_cproj_ref[...], b_cproj_ref[...],
    )
    x = _layernorm(x, ln_final_g_ref[...], ln_final_b_ref[...])
    # CLIP: features at the EOT token -> one selection matmul, [M, W]
    x_eot = jnp.dot(eot_sel_ref[...], x, preferred_element_type=_F32)
    o_ref[...] = _mm(x_eot, text_proj_ref[...]).astype(o_ref.dtype)   # [M, EMBED]


def clip_logits_kernel(t_ref, i_ref, s_ref, o_ref, *, bsz, ncap):
    t = t_ref[...]            # [B*C, D]
    im = i_ref[...]           # [B, D]
    tn = t * jax.lax.rsqrt(jnp.sum(t * t, axis=-1, keepdims=True))
    imn = im * jax.lax.rsqrt(jnp.sum(im * im, axis=-1, keepdims=True))
    scale = jnp.exp(s_ref[...])                                   # [1, 1]
    for b in range(bsz):
        sims = jax.lax.dot_general(
            imn[b:b + 1, :], tn[b * ncap:(b + 1) * ncap, :],
            dimension_numbers=(((1,), (1,)), ((), ())),
            preferred_element_type=_F32,
        )                                                         # [1, C]
        o_ref[pl.ds(b, 1), :] = (sims * scale).astype(o_ref.dtype)


# ================================ glue wrappers ================================
def _bf16(w):
    return w.astype(_BF16)


def _row(v):
    return v.reshape(1, -1).astype(_F32)


def encode_image(params, images):
    """images: [N, C, H, W] (NCHW) -> [N, EMBED]; one fused pallas_call."""
    p = params["visual"]
    blk = p["block"]
    N, C, H, W = images.shape
    ps = PATCH
    ph, pw = H // ps, W // ps
    n_patch = ph * pw
    S = n_patch + 1
    R = N * S

    # flatten non-overlapping patches (plain-JAX layout glue)
    patches = images.reshape(N, C, ph, ps, pw, ps)
    patches = patches.transpose(0, 2, 4, 1, 3, 5).reshape(N * n_patch, C * ps * ps)

    # assembly matrices: scatter patch rows + add (cls, positional embedding)
    row_ids = jnp.arange(R)
    seq_pos = row_ids % S
    img_idx = row_ids // S
    patch_idx = img_idx * n_patch + jnp.maximum(seq_pos - 1, 0)
    is_patch = seq_pos >= 1
    asm_sel = ((jnp.arange(N * n_patch)[None, :] == patch_idx[:, None])
               & is_patch[:, None]).astype(_F32)                       # [R, N*P]
    asm_add = p["pos_emb"][seq_pos] + jnp.where(
        (seq_pos == 0)[:, None], p["cls"][None, :], 0.0)               # [R, W]
    cls_sel = jax.nn.one_hot(jnp.arange(N) * S, R, dtype=_F32)         # [N, R]

    # block-diagonal (per-image), non-causal additive attention bias
    rr = row_ids[:, None] // S
    cc = row_ids[None, :] // S
    attn_bias = jnp.where(rr == cc, 0.0, _NEG).astype(_F32)            # [R, R]

    args = (
        patches.astype(_F32), _bf16(p["w_patch"]), asm_sel, asm_add, cls_sel,
        attn_bias,
        _row(p["ln_pre_g"]), _row(p["ln_pre_b"]),
        _row(blk["ln1_g"]), _row(blk["ln1_b"]),
        _bf16(blk["w_qkv"]), _row(blk["b_qkv"]),
        _bf16(blk["w_out"]), _row(blk["b_out"]),
        _row(blk["ln2_g"]), _row(blk["ln2_b"]),
        _bf16(blk["w_fc"]), _row(blk["b_fc"]),
        _bf16(blk["w_cproj"]), _row(blk["b_cproj"]),
        _row(p["ln_post_g"]), _row(p["ln_post_b"]),
        _bf16(p["proj"]),
    )
    return pl.pallas_call(
        image_encoder_kernel,
        out_shape=jax.ShapeDtypeStruct((N, EMBED), _F32),
    )(*args)


def encode_text(params, tokens):
    """tokens: [M, CTX] int32 -> [M, EMBED]; one fused pallas_call."""
    p = params["text"]
    blk = p["block"]
    M, S = tokens.shape
    R = M * S

    # embedding gather + positional embedding stays as plain-JAX glue
    x = (jnp.take(p["tok_emb"], tokens, axis=0) + p["pos_emb"][None]).reshape(R, WIDTH)
    x = x.astype(_F32)

    # EOT gather as a selection matmul (CLIP: argmax token id)
    eot = jnp.argmax(tokens, axis=-1)
    eot_sel = jax.nn.one_hot(jnp.arange(M) * S + eot, R, dtype=_F32)    # [M, R]

    # block-diagonal (per caption) + causal additive attention bias
    row_ids = jnp.arange(R)
    rr_seq = row_ids[:, None] // S
    cc_seq = row_ids[None, :] // S
    rr_pos = row_ids[:, None] % S
    cc_pos = row_ids[None, :] % S
    attn_bias = jnp.where((rr_seq == cc_seq) & (cc_pos <= rr_pos),
                          0.0, _NEG).astype(_F32)                       # [R, R]

    args = (
        x, eot_sel, attn_bias,
        _row(blk["ln1_g"]), _row(blk["ln1_b"]),
        _bf16(blk["w_qkv"]), _row(blk["b_qkv"]),
        _bf16(blk["w_out"]), _row(blk["b_out"]),
        _row(blk["ln2_g"]), _row(blk["ln2_b"]),
        _bf16(blk["w_fc"]), _row(blk["b_fc"]),
        _bf16(blk["w_cproj"]), _row(blk["b_cproj"]),
        _row(p["ln_final_g"]), _row(p["ln_final_b"]),
        _bf16(p["text_proj"]),
    )
    return pl.pallas_call(
        text_encoder_kernel,
        out_shape=jax.ShapeDtypeStruct((M, EMBED), _F32),
    )(*args)


def clip_logits(text_feat, img_feat, logit_scale):
    """text_feat: [B, C, D], img_feat: [B, D] -> logits_per_image [B, C]."""
    B, C, D = text_feat.shape
    kern = functools.partial(clip_logits_kernel, bsz=B, ncap=C)
    return pl.pallas_call(
        kern,
        out_shape=jax.ShapeDtypeStruct((B, C), _F32),
    )(text_feat.reshape(B * C, D).astype(_F32),
      img_feat.astype(_F32),
      jnp.reshape(logit_scale, (1, 1)).astype(_F32))


def clip_forward(params, images, tokens):
    """Mirrors CLIPModel.forward: returns logits_per_image of shape [bsz, num_captions]."""
    bsz, num_captions, ctx = tokens.shape
    text_feat = encode_text(params, tokens.reshape(-1, ctx))      # [bsz*nc, EMBED]
    text_feat = text_feat.reshape(bsz, num_captions, EMBED)
    img_feat = encode_image(params, images)                       # [bsz, EMBED]
    return clip_logits(text_feat, img_feat, params["logit_scale"])


# ============================== deterministic init =============================
def init_params(key):
    ks = iter(jax.random.split(key, 64))

    def nrm(shape, s=0.02):
        return (s * jax.random.normal(next(ks), shape, _F32)).astype(_F32)

    def block_params():
        return dict(
            ln1_g=jnp.ones((WIDTH,), _F32), ln1_b=jnp.zeros((WIDTH,), _F32),
            w_qkv=nrm((WIDTH, 3 * WIDTH)), b_qkv=jnp.zeros((3 * WIDTH,), _F32),
            w_out=nrm((WIDTH, WIDTH)), b_out=jnp.zeros((WIDTH,), _F32),
            ln2_g=jnp.ones((WIDTH,), _F32), ln2_b=jnp.zeros((WIDTH,), _F32),
            w_fc=nrm((WIDTH, 4 * WIDTH)), b_fc=jnp.zeros((4 * WIDTH,), _F32),
            w_cproj=nrm((4 * WIDTH, WIDTH)), b_cproj=jnp.zeros((WIDTH,), _F32),
        )

    visual = dict(
        w_patch=nrm((IMG_C * PATCH * PATCH, WIDTH)),   # CLIP patch conv, no bias
        cls=nrm((WIDTH,)),
        pos_emb=nrm((N_PATCH + 1, WIDTH)),
        ln_pre_g=jnp.ones((WIDTH,), _F32), ln_pre_b=jnp.zeros((WIDTH,), _F32),
        block=block_params(),
        ln_post_g=jnp.ones((WIDTH,), _F32), ln_post_b=jnp.zeros((WIDTH,), _F32),
        proj=nrm((WIDTH, EMBED)),
    )
    text = dict(
        tok_emb=nrm((VOCAB, WIDTH)),
        pos_emb=nrm((CTX, WIDTH)),
        block=block_params(),
        ln_final_g=jnp.ones((WIDTH,), _F32), ln_final_b=jnp.zeros((WIDTH,), _F32),
        text_proj=nrm((WIDTH, EMBED)),
    )
    return dict(
        visual=visual,
        text=text,
        logit_scale=jnp.asarray(math.log(1.0 / 0.07), _F32),
    )


# ===================================== main ====================================
if __name__ == "__main__":
    key = jax.random.PRNGKey(0)
    k_img, k_tok = jax.random.split(key)

    images = jax.random.normal(k_img, (BSZ, IMG_C, IMG, IMG), _F32)   # NCHW
    tokens = jax.random.randint(
        k_tok, (BSZ, NUM_CAPTIONS, CTX), 1, VOCAB, dtype=jnp.int32
    )  # pre-tokenized captions (see TODO(synk) above)

    params = init_params(jax.random.PRNGKey(42))

    logits = jax.jit(clip_forward)(params, images, tokens)
    logits = jax.block_until_ready(logits)

    assert logits.shape == (BSZ, NUM_CAPTIONS), logits.shape
    assert bool(jnp.all(jnp.isfinite(logits)))
    print("KERNEL_OK")
</pallas_src>

<mosaic_0001>
module attributes {stable_mosaic.version = 11 : i64} {
  func.func @text_encoder_kernel(%arg0: memref<48x32xf32, #tpu.memory_space<vmem>>, %arg1: memref<6x48xf32, #tpu.memory_space<vmem>>, %arg2: memref<48x48xf32, #tpu.memory_space<vmem>>, %arg3: memref<1x32xf32, #tpu.memory_space<vmem>>, %arg4: memref<1x32xf32, #tpu.memory_space<vmem>>, %arg5: memref<32x96xbf16, #tpu.memory_space<vmem>>, %arg6: memref<1x96xf32, #tpu.memory_space<vmem>>, %arg7: memref<32x32xbf16, #tpu.memory_space<vmem>>, %arg8: memref<1x32xf32, #tpu.memory_space<vmem>>, %arg9: memref<1x32xf32, #tpu.memory_space<vmem>>, %arg10: memref<1x32xf32, #tpu.memory_space<vmem>>, %arg11: memref<32x128xbf16, #tpu.memory_space<vmem>>, %arg12: memref<1x128xf32, #tpu.memory_space<vmem>>, %arg13: memref<128x32xbf16, #tpu.memory_space<vmem>>, %arg14: memref<1x32xf32, #tpu.memory_space<vmem>>, %arg15: memref<1x32xf32, #tpu.memory_space<vmem>>, %arg16: memref<1x32xf32, #tpu.memory_space<vmem>>, %arg17: memref<32x32xbf16, #tpu.memory_space<vmem>>, %arg18: memref<6x32xf32, #tpu.memory_space<vmem>>) attributes {dimension_semantics = [], scalar_prefetch = 0 : i64, scratch_operands = 0 : i64, tpu.core_type = #tpu.core_type<tc>} {
    %c0 = arith.constant 0 : index
    %c0_0 = arith.constant 0 : index
    %0 = vector.load %arg0[%c0, %c0_0] : memref<48x32xf32, #tpu.memory_space<vmem>>, vector<48x32xf32>
    %c0_1 = arith.constant 0 : index
    %c0_2 = arith.constant 0 : index
    %1 = vector.load %arg2[%c0_1, %c0_2] : memref<48x48xf32, #tpu.memory_space<vmem>>, vector<48x48xf32>
    %c0_3 = arith.constant 0 : index
    %c0_4 = arith.constant 0 : index
    %2 = vector.load %arg3[%c0_3, %c0_4] : memref<1x32xf32, #tpu.memory_space<vmem>>, vector<1x32xf32>
    %c0_5 = arith.constant 0 : index
    %c0_6 = arith.constant 0 : index
    %3 = vector.load %arg4[%c0_5, %c0_6] : memref<1x32xf32, #tpu.memory_space<vmem>>, vector<1x32xf32>
    %c0_7 = arith.constant 0 : index
    %c0_8 = arith.constant 0 : index
    %4 = vector.load %arg5[%c0_7, %c0_8] : memref<32x96xbf16, #tpu.memory_space<vmem>>, vector<32x96xbf16>
    %c0_9 = arith.constant 0 : index
    %c0_10 = arith.constant 0 : index
    %5 = vector.load %arg6[%c0_9, %c0_10] : memref<1x96xf32, #tpu.memory_space<vmem>>, vector<1x96xf32>
    %c0_11 = arith.constant 0 : index
    %c0_12 = arith.constant 0 : index
    %6 = vector.load %arg7[%c0_11, %c0_12] : memref<32x32xbf16, #tpu.memory_space<vmem>>, vector<32x32xbf16>
    %c0_13 = arith.constant 0 : index
    %c0_14 = arith.constant 0 : index
    %7 = vector.load %arg8[%c0_13, %c0_14] : memref<1x32xf32, #tpu.memory_space<vmem>>, vector<1x32xf32>
    %c0_15 = arith.constant 0 : index
    %c0_16 = arith.constant 0 : index
    %8 = vector.load %arg9[%c0_15, %c0_16] : memref<1x32xf32, #tpu.memory_space<vmem>>, vector<1x32xf32>
    %c0_17 = arith.constant 0 : index
    %c0_18 = arith.constant 0 : index
    %9 = vector.load %arg10[%c0_17, %c0_18] : memref<1x32xf32, #tpu.memory_space<vmem>>, vector<1x32xf32>
    %c0_19 = arith.constant 0 : index
    %c0_20 = arith.constant 0 : index
    %10 = vector.load %arg11[%c0_19, %c0_20] : memref<32x128xbf16, #tpu.memory_space<vmem>>, vector<32x128xbf16>
    %c0_21 = arith.constant 0 : index
    %c0_22 = arith.constant 0 : index
    %11 = vector.load %arg12[%c0_21, %c0_22] : memref<1x128xf32, #tpu.memory_space<vmem>>, vector<1x128xf32>
    %c0_23 = arith.constant 0 : index
    %c0_24 = arith.constant 0 : index
    %12 = vector.load %arg13[%c0_23, %c0_24] : memref<128x32xbf16, #tpu.memory_space<vmem>>, vector<128x32xbf16>
    %c0_25 = arith.constant 0 : index
    %c0_26 = arith.constant 0 : index
    %13 = vector.load %arg14[%c0_25, %c0_26] : memref<1x32xf32, #tpu.memory_space<vmem>>, vector<1x32xf32>
    %cst = arith.constant dense<0.000000e+00> : vector<48xf32>
    %14 = vector.multi_reduction <add>, %0, %cst [1] : vector<48x32xf32> to vector<48xf32>
    %15 = vector.shape_cast %14 : vector<48xf32> to vector<48x1xf32>
    %cst_27 = arith.constant 3.200000e+01 : f32
    %16 = vector.broadcast %cst_27 : f32 to vector<48x1xf32>
    %17 = arith.divf %15, %16 : vector<48x1xf32>
    %18 = vector.broadcast %17 : vector<48x1xf32> to vector<48x32xf32>
    %19 = arith.subf %0, %18 : vector<48x32xf32>
    %20 = arith.mulf %19, %19 : vector<48x32xf32>
    %cst_28 = arith.constant dense<0.000000e+00> : vector<48xf32>
    %21 = vector.multi_reduction <add>, %20, %cst_28 [1] : vector<48x32xf32> to vector<48xf32>
    %22 = vector.shape_cast %21 : vector<48xf32> to vector<48x1xf32>
    %cst_29 = arith.constant 3.200000e+01 : f32
    %23 = vector.broadcast %cst_29 : f32 to vector<48x1xf32>
    %24 = arith.divf %22, %23 : vector<48x1xf32>
    %cst_30 = arith.constant 9.99999974E-6 : f32
    %25 = vector.broadcast %cst_30 : f32 to vector<48x1xf32>
    %26 = arith.addf %24, %25 : vector<48x1xf32>
    %27 = math.rsqrt %26 : vector<48x1xf32>
    %28 = vector.broadcast %27 : vector<48x1xf32> to vector<48x32xf32>
    %29 = arith.mulf %19, %28 : vector<48x32xf32>
    %30 = vector.broadcast %2 : vector<1x32xf32> to vector<48x32xf32>
    %31 = arith.mulf %29, %30 : vector<48x32xf32>
    %32 = vector.broadcast %3 : vector<1x32xf32> to vector<48x32xf32>
    %33 = arith.addf %31, %32 : vector<48x32xf32>
    %34 = arith.truncf %33 : vector<48x32xf32> to vector<48x32xbf16>
    %cst_31 = arith.constant dense<0.000000e+00> : vector<48x96xf32>
    %35 = tpu.matmul %34, %4, %cst_31 {dimension_numbers = #tpu.dot_dimension_numbers<[1], [0], [0], [1], [0, 0, 1, 1], [], []>} : vector<48x32xbf16>, vector<32x96xbf16>, vector<48x96xf32> -> vector<48x96xf32>
    %36 = vector.broadcast %5 : vector<1x96xf32> to vector<48x96xf32>
    %37 = arith.addf %35, %36 : vector<48x96xf32>
    %38 = vector.extract_strided_slice %37 {offsets = [0, 0], sizes = [48, 16], strides = [1, 1]} : vector<48x96xf32> to vector<48x16xf32>
    %39 = arith.truncf %38 : vector<48x16xf32> to vector<48x16xbf16>
    %40 = vector.extract_strided_slice %37 {offsets = [0, 32], sizes = [48, 16], strides = [1, 1]} : vector<48x96xf32> to vector<48x16xf32>
    %41 = arith.truncf %40 : vector<48x16xf32> to vector<48x16xbf16>
    %42 = vector.extract_strided_slice %37 {offsets = [0, 64], sizes = [48, 16], strides = [1, 1]} : vector<48x96xf32> to vector<48x16xf32>
    %43 = arith.truncf %42 : vector<48x16xf32> to vector<48x16xbf16>
    %cst_32 = arith.constant dense<0.000000e+00> : vector<48x48xf32>
    %44 = tpu.matmul %39, %41, %cst_32 {dimension_numbers = #tpu.dot_dimension_numbers<[1], [1], [0], [0], [0, 0, 1, 0], [], []>} : vector<48x16xbf16>, vector<48x16xbf16>, vector<48x48xf32> -> vector<48x48xf32>
    %cst_33 = arith.constant 2.500000e-01 : f32
    %45 = vector.broadcast %cst_33 : f32 to vector<48x48xf32>
    %46 = arith.mulf %44, %45 : vector<48x48xf32>
    %47 = arith.addf %46, %1 : vector<48x48xf32>
    %cst_34 = arith.constant dense<0xFF800000> : vector<48xf32>
    %48 = vector.multi_reduction <maximumf>, %47, %cst_34 [1] : vector<48x48xf32> to vector<48xf32>
    %49 = vector.shape_cast %48 : vector<48xf32> to vector<48x1xf32>
    %50 = vector.broadcast %49 : vector<48x1xf32> to vector<48x48xf32>
    %51 = arith.subf %47, %50 : vector<48x48xf32>
    %52 = math.exp %51 : vector<48x48xf32>
    %cst_35 = arith.constant dense<0.000000e+00> : vector<48xf32>
    %53 = vector.multi_reduction <add>, %52, %cst_35 [1] : vector<48x48xf32> to vector<48xf32>
    %54 = vector.shape_cast %53 : vector<48xf32> to vector<48x1xf32>
    %55 = tpu.reciprocal %54 {approx = true} : vector<48x1xf32> -> vector<48x1xf32>
    %56 = vector.broadcast %55 : vector<48x1xf32> to vector<48x48xf32>
    %57 = arith.mulf %52, %56 : vector<48x48xf32>
    %58 = arith.truncf %57 : vector<48x48xf32> to vector<48x48xbf16>
    %cst_36 = arith.constant dense<0.000000e+00> : vector<48x16xf32>
    %59 = tpu.matmul %58, %43, %cst_36 {dimension_numbers = #tpu.dot_dimension_numbers<[1], [0], [0], [1], [0, 0, 1, 1], [], []>} : vector<48x48xbf16>, vector<48x16xbf16>, vector<48x16xf32> -> vector<48x16xf32>
    %60 = arith.truncf %59 : vector<48x16xf32> to vector<48x16xbf16>
    %61 = vector.extract_strided_slice %6 {offsets = [0, 0], sizes = [16, 32], strides = [1, 1]} : vector<32x32xbf16> to vector<16x32xbf16>
    %cst_37 = arith.constant dense<0.000000e+00> : vector<48x32xf32>
    %62 = tpu.matmul %60, %61, %cst_37 {dimension_numbers = #tpu.dot_dimension_numbers<[1], [0], [0], [1], [0, 0, 1, 1], [], []>} : vector<48x16xbf16>, vector<16x32xbf16>, vector<48x32xf32> -> vector<48x32xf32>
    %63 = vector.extract_strided_slice %37 {offsets = [0, 16], sizes = [48, 16], strides = [1, 1]} : vector<48x96xf32> to vector<48x16xf32>
    %64 = arith.truncf %63 : vector<48x16xf32> to vector<48x16xbf16>
    %65 = vector.extract_strided_slice %37 {offsets = [0, 48], sizes = [48, 16], strides = [1, 1]} : vector<48x96xf32> to vector<48x16xf32>
    %66 = arith.truncf %65 : vector<48x16xf32> to vector<48x16xbf16>
    %67 = vector.extract_strided_slice %37 {offsets = [0, 80], sizes = [48, 16], strides = [1, 1]} : vector<48x96xf32> to vector<48x16xf32>
    %68 = arith.truncf %67 : vector<48x16xf32> to vector<48x16xbf16>
    %cst_38 = arith.constant dense<0.000000e+00> : vector<48x48xf32>
    %69 = tpu.matmul %64, %66, %cst_38 {dimension_numbers = #tpu.dot_dimension_numbers<[1], [1], [0], [0], [0, 0, 1, 0], [], []>} : vector<48x16xbf16>, vector<48x16xbf16>, vector<48x48xf32> -> vector<48x48xf32>
    %cst_39 = arith.constant 2.500000e-01 : f32
    %70 = vector.broadcast %cst_39 : f32 to vector<48x48xf32>
    %71 = arith.mulf %69, %70 : vector<48x48xf32>
    %72 = arith.addf %71, %1 : vector<48x48xf32>
    %cst_40 = arith.constant dense<0xFF800000> : vector<48xf32>
    %73 = vector.multi_reduction <maximumf>, %72, %cst_40 [1] : vector<48x48xf32> to vector<48xf32>
    %74 = vector.shape_cast %73 : vector<48xf32> to vector<48x1xf32>
    %75 = vector.broadcast %74 : vector<48x1xf32> to vector<48x48xf32>
    %76 = arith.subf %72, %75 : vector<48x48xf32>
    %77 = math.exp %76 : vector<48x48xf32>
    %cst_41 = arith.constant dense<0.000000e+00> : vector<48xf32>
    %78 = vector.multi_reduction <add>, %77, %cst_41 [1] : vector<48x48xf32> to vector<48xf32>
    %79 = vector.shape_cast %78 : vector<48xf32> to vector<48x1xf32>
    %80 = tpu.reciprocal %79 {approx = true} : vector<48x1xf32> -> vector<48x1xf32>
    %81 = vector.broadcast %80 : vector<48x1xf32> to vector<48x48xf32>
    %82 = arith.mulf %77, %81 : vector<48x48xf32>
    %83 = arith.truncf %82 : vector<48x48xf32> to vector<48x48xbf16>
    %cst_42 = arith.constant dense<0.000000e+00> : vector<48x16xf32>
    %84 = tpu.matmul %83, %68, %cst_42 {dimension_numbers = #tpu.dot_dimension_numbers<[1], [0], [0], [1], [0, 0, 1, 1], [], []>} : vector<48x48xbf16>, vector<48x16xbf16>, vector<48x16xf32> -> vector<48x16xf32>
    %85 = arith.truncf %84 : vector<48x16xf32> to vector<48x16xbf16>
    %86 = vector.extract_strided_slice %6 {offsets = [16, 0], sizes = [16, 32], strides = [1, 1]} : vector<32x32xbf16> to vector<16x32xbf16>
    %cst_43 = arith.constant dense<0.000000e+00> : vector<48x32xf32>
    %87 = tpu.matmul %85, %86, %cst_43 {dimension_numbers = #tpu.dot_dimension_numbers<[1], [0], [0], [1], [0, 0, 1, 1], [], []>} : vector<48x16xbf16>, vector<16x32xbf16>, vector<48x32xf32> -> vector<48x32xf32>
    %88 = arith.addf %62, %87 : vector<48x32xf32>
    %89 = vector.broadcast %7 : vector<1x32xf32> to vector<48x32xf32>
    %90 = arith.addf %88, %89 : vector<48x32xf32>
    %91 = arith.addf %0, %90 : vector<48x32xf32>
    %cst_44 = arith.constant dense<0.000000e+00> : vector<48xf32>
    %92 = vector.multi_reduction <add>, %91, %cst_44 [1] : vector<48x32xf32> to vector<48xf32>
    %93 = vector.shape_cast %92 : vector<48xf32> to vector<48x1xf32>
    %cst_45 = arith.constant 3.200000e+01 : f32
    %94 = vector.broadcast %cst_45 : f32 to vector<48x1xf32>
    %95 = arith.divf %93, %94 : vector<48x1xf32>
    %96 = vector.broadcast %95 : vector<48x1xf32> to vector<48x32xf32>
    %97 = arith.subf %91, %96 : vector<48x32xf32>
    %98 = arith.mulf %97, %97 : vector<48x32xf32>
    %cst_46 = arith.constant dense<0.000000e+00> : vector<48xf32>
    %99 = vector.multi_reduction <add>, %98, %cst_46 [1] : vector<48x32xf32> to vector<48xf32>
    %100 = vector.shape_cast %99 : vector<48xf32> to vector<48x1xf32>
    %cst_47 = arith.constant 3.200000e+01 : f32
    %101 = vector.broadcast %cst_47 : f32 to vector<48x1xf32>
    %102 = arith.divf %100, %101 : vector<48x1xf32>
    %cst_48 = arith.constant 9.99999974E-6 : f32
    %103 = vector.broadcast %cst_48 : f32 to vector<48x1xf32>
    %104 = arith.addf %102, %103 : vector<48x1xf32>
    %105 = math.rsqrt %104 : vector<48x1xf32>
    %106 = vector.broadcast %105 : vector<48x1xf32> to vector<48x32xf32>
    %107 = arith.mulf %97, %106 : vector<48x32xf32>
    %108 = vector.broadcast %8 : vector<1x32xf32> to vector<48x32xf32>
    %109 = arith.mulf %107, %108 : vector<48x32xf32>
    %110 = vector.broadcast %9 : vector<1x32xf32> to vector<48x32xf32>
    %111 = arith.addf %109, %110 : vector<48x32xf32>
    %112 = arith.truncf %111 : vector<48x32xf32> to vector<48x32xbf16>
    %cst_49 = arith.constant dense<0.000000e+00> : vector<48x128xf32>
    %113 = tpu.matmul %112, %10, %cst_49 {dimension_numbers = #tpu.dot_dimension_numbers<[1], [0], [0], [1], [0, 0, 1, 1], [], []>} : vector<48x32xbf16>, vector<32x128xbf16>, vector<48x128xf32> -> vector<48x128xf32>
    %114 = vector.broadcast %11 : vector<1x128xf32> to vector<48x128xf32>
    %115 = arith.addf %113, %114 : vector<48x128xf32>
    %cst_50 = arith.constant -1.702000e+00 : f32
    %116 = vector.broadcast %cst_50 : f32 to vector<48x128xf32>
    %117 = arith.mulf %116, %115 : vector<48x128xf32>
    %118 = math.exp %117 : vector<48x128xf32>
    %cst_51 = arith.constant 1.000000e+00 : f32
    %119 = vector.broadcast %cst_51 : f32 to vector<48x128xf32>
    %120 = arith.addf %119, %118 : vector<48x128xf32>
    %121 = tpu.reciprocal %120 {approx = true} : vector<48x128xf32> -> vector<48x128xf32>
    %122 = arith.mulf %115, %121 : vector<48x128xf32>
    %123 = arith.truncf %122 : vector<48x128xf32> to vector<48x128xbf16>
    %cst_52 = arith.constant dense<0.000000e+00> : vector<48x32xf32>
    %124 = tpu.matmul %123, %12, %cst_52 {dimension_numbers = #tpu.dot_dimension_numbers<[1], [0], [0], [1], [0, 0, 1, 1], [], []>} : vector<48x128xbf16>, vector<128x32xbf16>, vector<48x32xf32> -> vector<48x32xf32>
    %125 = vector.broadcast %13 : vector<1x32xf32> to vector<48x32xf32>
    %126 = arith.addf %124, %125 : vector<48x32xf32>
    %127 = arith.addf %91, %126 : vector<48x32xf32>
    %c0_53 = arith.constant 0 : index
    %c0_54 = arith.constant 0 : index
    %128 = vector.load %arg15[%c0_53, %c0_54] : memref<1x32xf32, #tpu.memory_space<vmem>>, vector<1x32xf32>
    %c0_55 = arith.constant 0 : index
    %c0_56 = arith.constant 0 : index
    %129 = vector.load %arg16[%c0_55, %c0_56] : memref<1x32xf32, #tpu.memory_space<vmem>>, vector<1x32xf32>
    %cst_57 = arith.constant dense<0.000000e+00> : vector<48xf32>
    %130 = vector.multi_reduction <add>, %127, %cst_57 [1] : vector<48x32xf32> to vector<48xf32>
    %131 = vector.shape_cast %130 : vector<48xf32> to vector<48x1xf32>
    %cst_58 = arith.constant 3.200000e+01 : f32
    %132 = vector.broadcast %cst_58 : f32 to vector<48x1xf32>
    %133 = arith.divf %131, %132 : vector<48x1xf32>
    %134 = vector.broadcast %133 : vector<48x1xf32> to vector<48x32xf32>
    %135 = arith.subf %127, %134 : vector<48x32xf32>
    %136 = arith.mulf %135, %135 : vector<48x32xf32>
    %cst_59 = arith.constant dense<0.000000e+00> : vector<48xf32>
    %137 = vector.multi_reduction <add>, %136, %cst_59 [1] : vector<48x32xf32> to vector<48xf32>
    %138 = vector.shape_cast %137 : vector<48xf32> to vector<48x1xf32>
    %cst_60 = arith.constant 3.200000e+01 : f32
    %139 = vector.broadcast %cst_60 : f32 to vector<48x1xf32>
    %140 = arith.divf %138, %139 : vector<48x1xf32>
    %cst_61 = arith.constant 9.99999974E-6 : f32
    %141 = vector.broadcast %cst_61 : f32 to vector<48x1xf32>
    %142 = arith.addf %140, %141 : vector<48x1xf32>
    %143 = math.rsqrt %142 : vector<48x1xf32>
    %144 = vector.broadcast %143 : vector<48x1xf32> to vector<48x32xf32>
    %145 = arith.mulf %135, %144 : vector<48x32xf32>
    %146 = vector.broadcast %128 : vector<1x32xf32> to vector<48x32xf32>
    %147 = arith.mulf %145, %146 : vector<48x32xf32>
    %148 = vector.broadcast %129 : vector<1x32xf32> to vector<48x32xf32>
    %149 = arith.addf %147, %148 : vector<48x32xf32>
    %c0_62 = arith.constant 0 : index
    %c0_63 = arith.constant 0 : index
    %150 = vector.load %arg1[%c0_62, %c0_63] : memref<6x48xf32, #tpu.memory_space<vmem>>, vector<6x48xf32>
    %cst_64 = arith.constant dense<0.000000e+00> : vector<6x32xf32>
    %151 = tpu.matmul %150, %149, %cst_64 {dimension_numbers = #tpu.dot_dimension_numbers<[1], [0], [0], [1], [0, 0, 1, 1], [], []>} : vector<6x48xf32>, vector<48x32xf32>, vector<6x32xf32> -> vector<6x32xf32>
    %c0_65 = arith.constant 0 : index
    %c0_66 = arith.constant 0 : index
    %152 = vector.load %arg17[%c0_65, %c0_66] : memref<32x32xbf16, #tpu.memory_space<vmem>>, vector<32x32xbf16>
    %153 = arith.truncf %151 : vector<6x32xf32> to vector<6x32xbf16>
    %cst_67 = arith.constant dense<0.000000e+00> : vector<6x32xf32>
    %154 = tpu.matmul %153, %152, %cst_67 {dimension_numbers = #tpu.dot_dimension_numbers<[1], [0], [0], [1], [0, 0, 1, 1], [], []>} : vector<6x32xbf16>, vector<32x32xbf16>, vector<6x32xf32> -> vector<6x32xf32>
    %c0_68 = arith.constant 0 : index
    %c0_69 = arith.constant 0 : index
    %155 = vector.load %arg18[%c0_68, %c0_69] : memref<6x32xf32, #tpu.memory_space<vmem>>, vector<6x32xf32>
    tpu.vector_store %arg18[%c0_68, %c0_69], %154 {strides = array<i32>} : memref<6x32xf32, #tpu.memory_space<vmem>>, vector<6x32xf32>,
    return
  }
}

module attributes {stable_mosaic.version = 11 : i64} {
  func.func @clip_logits_kernel(%arg0: memref<6x32xf32, #tpu.memory_space<vmem>>, %arg1: memref<2x32xf32, #tpu.memory_space<vmem>>, %arg2: memref<1x1xf32, #tpu.memory_space<vmem>>, %arg3: memref<2x3xf32, #tpu.memory_space<vmem>>) attributes {dimension_semantics = [], scalar_prefetch = 0 : i64, scratch_operands = 0 : i64, tpu.core_type = #tpu.core_type<tc>} {
    %c0 = arith.constant 0 : index
    %c0_0 = arith.constant 0 : index
    %0 = vector.load %arg0[%c0, %c0_0] : memref<6x32xf32, #tpu.memory_space<vmem>>, vector<6x32xf32>
    %c0_1 = arith.constant 0 : index
    %c0_2 = arith.constant 0 : index
    %1 = vector.load %arg1[%c0_1, %c0_2] : memref<2x32xf32, #tpu.memory_space<vmem>>, vector<2x32xf32>
    %2 = arith.mulf %0, %0 : vector<6x32xf32>
    %cst = arith.constant dense<0.000000e+00> : vector<6xf32>
    %3 = vector.multi_reduction <add>, %2, %cst [1] : vector<6x32xf32> to vector<6xf32>
    %4 = vector.shape_cast %3 : vector<6xf32> to vector<6x1xf32>
    %5 = math.rsqrt %4 : vector<6x1xf32>
    %6 = vector.broadcast %5 : vector<6x1xf32> to vector<6x32xf32>
    %7 = arith.mulf %0, %6 : vector<6x32xf32>
    %8 = arith.mulf %1, %1 : vector<2x32xf32>
    %cst_3 = arith.constant dense<0.000000e+00> : vector<2xf32>
    %9 = vector.multi_reduction <add>, %8, %cst_3 [1] : vector<2x32xf32> to vector<2xf32>
    %10 = vector.shape_cast %9 : vector<2xf32> to vector<2x1xf32>
    %11 = math.rsqrt %10 : vector<2x1xf32>
    %12 = vector.broadcast %11 : vector<2x1xf32> to vector<2x32xf32>
    %13 = arith.mulf %1, %12 : vector<2x32xf32>
    %c0_4 = arith.constant 0 : index
    %c0_5 = arith.constant 0 : index
    %14 = vector.load %arg2[%c0_4, %c0_5] : memref<1x1xf32, #tpu.memory_space<vmem>>, vector<1x1xf32>
    %15 = math.exp %14 : vector<1x1xf32>
    %16 = vector.extract_strided_slice %13 {offsets = [0, 0], sizes = [1, 32], strides = [1, 1]} : vector<2x32xf32> to vector<1x32xf32>
    %17 = vector.extract_strided_slice %7 {offsets = [0, 0], sizes = [3, 32], strides = [1, 1]} : vector<6x32xf32> to vector<3x32xf32>
    %cst_6 = arith.constant dense<0.000000e+00> : vector<1x3xf32>
    %18 = tpu.matmul %16, %17, %cst_6 {dimension_numbers = #tpu.dot_dimension_numbers<[1], [1], [0], [0], [0, 0, 1, 0], [], []>} : vector<1x32xf32>, vector<3x32xf32>, vector<1x3xf32> -> vector<1x3xf32>
    %19 = vector.broadcast %15 : vector<1x1xf32> to vector<1x3xf32>
    %20 = arith.mulf %18, %19 : vector<1x3xf32>
    %c0_7 = arith.constant 0 : index
    %c0_8 = arith.constant 0 : index
    %21 = vector.load %arg3[%c0_7, %c0_8] : memref<2x3xf32, #tpu.memory_space<vmem>>, vector<1x3xf32>
    tpu.vector_store %arg3[%c0_7, %c0_8], %20 {strides = array<i32>} : memref<2x3xf32, #tpu.memory_space<vmem>>, vector<1x3xf32>,
    %22 = vector.extract_strided_slice %13 {offsets = [1, 0], sizes = [1, 32], strides = [1, 1]} : vector<2x32xf32> to vector<1x32xf32>
    %23 = vector.extract_strided_slice %7 {offsets = [3, 0], sizes = [3, 32], strides = [1, 1]} : vector<6x32xf32> to vector<3x32xf32>
    %cst_9 = arith.constant dense<0.000000e+00> : vector<1x3xf32>
    %24 = tpu.matmul %22, %23, %cst_9 {dimension_numbers = #tpu.dot_dimension_numbers<[1], [1], [0], [0], [0, 0, 1, 0], [], []>} : vector<1x32xf32>, vector<3x32xf32>, vector<1x3xf32> -> vector<1x3xf32>
    %25 = vector.broadcast %15 : vector<1x1xf32> to vector<1x3xf32>
    %26 = arith.mulf %24, %25 : vector<1x3xf32>
    %c1 = arith.constant 1 : index
    %c0_10 = arith.constant 0 : index
    %27 = vector.load %arg3[%c1, %c0_10] : memref<2x3xf32, #tpu.memory_space<vmem>>, vector<1x3xf32>
    tpu.vector_store %arg3[%c1, %c0_10], %26 {strides = array<i32>} : memref<2x3xf32, #tpu.memory_space<vmem>>, vector<1x3xf32>,
    return
  }
}

module attributes {stable_mosaic.version = 11 : i64} {
  func.func @image_encoder_kernel(%arg0: memref<8x192xf32, #tpu.memory_space<vmem>>, %arg1: memref<192x32xbf16, #tpu.memory_space<vmem>>, %arg2: memref<10x8xf32, #tpu.memory_space<vmem>>, %arg3: memref<10x32xf32, #tpu.memory_space<vmem>>, %arg4: memref<2x10xf32, #tpu.memory_space<vmem>>, %arg5: memref<10x10xf32, #tpu.memory_space<vmem>>, %arg6: memref<1x32xf32, #tpu.memory_space<vmem>>, %arg7: memref<1x32xf32, #tpu.memory_space<vmem>>, %arg8: memref<1x32xf32, #tpu.memory_space<vmem>>, %arg9: memref<1x32xf32, #tpu.memory_space<vmem>>, %arg10: memref<32x96xbf16, #tpu.memory_space<vmem>>, %arg11: memref<1x96xf32, #tpu.memory_space<vmem>>, %arg12: memref<32x32xbf16, #tpu.memory_space<vmem>>, %arg13: memref<1x32xf32, #tpu.memory_space<vmem>>, %arg14: memref<1x32xf32, #tpu.memory_space<vmem>>, %arg15: memref<1x32xf32, #tpu.memory_space<vmem>>, %arg16: memref<32x128xbf16, #tpu.memory_space<vmem>>, %arg17: memref<1x128xf32, #tpu.memory_space<vmem>>, %arg18: memref<128x32xbf16, #tpu.memory_space<vmem>>, %arg19: memref<1x32xf32, #tpu.memory_space<vmem>>, %arg20: memref<1x32xf32, #tpu.memory_space<vmem>>, %arg21: memref<1x32xf32, #tpu.memory_space<vmem>>, %arg22: memref<32x32xbf16, #tpu.memory_space<vmem>>, %arg23: memref<2x32xf32, #tpu.memory_space<vmem>>) attributes {dimension_semantics = [], scalar_prefetch = 0 : i64, scratch_operands = 0 : i64, tpu.core_type = #tpu.core_type<tc>} {
    %c0 = arith.constant 0 : index
    %c0_0 = arith.constant 0 : index
    %0 = vector.load %arg0[%c0, %c0_0] : memref<8x192xf32, #tpu.memory_space<vmem>>, vector<8x192xf32>
    %c0_1 = arith.constant 0 : index
    %c0_2 = arith.constant 0 : index
    %1 = vector.load %arg1[%c0_1, %c0_2] : memref<192x32xbf16, #tpu.memory_space<vmem>>, vector<192x32xbf16>
    %2 = arith.truncf %0 : vector<8x192xf32> to vector<8x192xbf16>
    %cst = arith.constant dense<0.000000e+00> : vector<8x32xf32>
    %3 = tpu.matmul %2, %1, %cst {dimension_numbers = #tpu.dot_dimension_numbers<[1], [0], [0], [1], [0, 0, 1, 1], [], []>} : vector<8x192xbf16>, vector<192x32xbf16>, vector<8x32xf32> -> vector<8x32xf32>
    %c0_3 = arith.constant 0 : index
    %c0_4 = arith.constant 0 : index
    %4 = vector.load %arg2[%c0_3, %c0_4] : memref<10x8xf32, #tpu.memory_space<vmem>>, vector<10x8xf32>
    %cst_5 = arith.constant dense<0.000000e+00> : vector<10x32xf32>
    %5 = tpu.matmul %4, %3, %cst_5 {dimension_numbers = #tpu.dot_dimension_numbers<[1], [0], [0], [1], [0, 0, 1, 1], [], []>} : vector<10x8xf32>, vector<8x32xf32>, vector<10x32xf32> -> vector<10x32xf32>
    %c0_6 = arith.constant 0 : index
    %c0_7 = arith.constant 0 : index
    %6 = vector.load %arg3[%c0_6, %c0_7] : memref<10x32xf32, #tpu.memory_space<vmem>>, vector<10x32xf32>
    %7 = arith.addf %5, %6 : vector<10x32xf32>
    %c0_8 = arith.constant 0 : index
    %c0_9 = arith.constant 0 : index
    %8 = vector.load %arg6[%c0_8, %c0_9] : memref<1x32xf32, #tpu.memory_space<vmem>>, vector<1x32xf32>
    %c0_10 = arith.constant 0 : index
    %c0_11 = arith.constant 0 : index
    %9 = vector.load %arg7[%c0_10, %c0_11] : memref<1x32xf32, #tpu.memory_space<vmem>>, vector<1x32xf32>
    %cst_12 = arith.constant dense<0.000000e+00> : vector<10xf32>
    %10 = vector.multi_reduction <add>, %7, %cst_12 [1] : vector<10x32xf32> to vector<10xf32>
    %11 = vector.shape_cast %10 : vector<10xf32> to vector<10x1xf32>
    %cst_13 = arith.constant 3.200000e+01 : f32
    %12 = vector.broadcast %cst_13 : f32 to vector<10x1xf32>
    %13 = arith.divf %11, %12 : vector<10x1xf32>
    %14 = vector.broadcast %13 : vector<10x1xf32> to vector<10x32xf32>
    %15 = arith.subf %7, %14 : vector<10x32xf32>
    %16 = arith.mulf %15, %15 : vector<10x32xf32>
    %cst_14 = arith.constant dense<0.000000e+00> : vector<10xf32>
    %17 = vector.multi_reduction <add>, %16, %cst_14 [1] : vector<10x32xf32> to vector<10xf32>
    %18 = vector.shape_cast %17 : vector<10xf32> to vector<10x1xf32>
    %cst_15 = arith.constant 3.200000e+01 : f32
    %19 = vector.broadcast %cst_15 : f32 to vector<10x1xf32>
    %20 = arith.divf %18, %19 : vector<10x1xf32>
    %cst_16 = arith.constant 9.99999974E-6 : f32
    %21 = vector.broadcast %cst_16 : f32 to vector<10x1xf32>
    %22 = arith.addf %20, %21 : vector<10x1xf32>
    %23 = math.rsqrt %22 : vector<10x1xf32>
    %24 = vector.broadcast %23 : vector<10x1xf32> to vector<10x32xf32>
    %25 = arith.mulf %15, %24 : vector<10x32xf32>
    %26 = vector.broadcast %8 : vector<1x32xf32> to vector<10x32xf32>
    %27 = arith.mulf %25, %26 : vector<10x32xf32>
    %28 = vector.broadcast %9 : vector<1x32xf32> to vector<10x32xf32>
    %29 = arith.addf %27, %28 : vector<10x32xf32>
    %c0_17 = arith.constant 0 : index
    %c0_18 = arith.constant 0 : index
    %30 = vector.load %arg5[%c0_17, %c0_18] : memref<10x10xf32, #tpu.memory_space<vmem>>, vector<10x10xf32>
    %c0_19 = arith.constant 0 : index
    %c0_20 = arith.constant 0 : index
    %31 = vector.load %arg8[%c0_19, %c0_20] : memref<1x32xf32, #tpu.memory_space<vmem>>, vector<1x32xf32>
    %c0_21 = arith.constant 0 : index
    %c0_22 = arith.constant 0 : index
    %32 = vector.load %arg9[%c0_21, %c0_22] : memref<1x32xf32, #tpu.memory_space<vmem>>, vector<1x32xf32>
    %c0_23 = arith.constant 0 : index
    %c0_24 = arith.constant 0 : index
    %33 = vector.load %arg10[%c0_23, %c0_24] : memref<32x96xbf16, #tpu.memory_space<vmem>>, vector<32x96xbf16>
    %c0_25 = arith.constant 0 : index
    %c0_26 = arith.constant 0 : index
    %34 = vector.load %arg11[%c0_25, %c0_26] : memref<1x96xf32, #tpu.memory_space<vmem>>, vector<1x96xf32>
    %c0_27 = arith.constant 0 : index
    %c0_28 = arith.constant 0 : index
    %35 = vector.load %arg12[%c0_27, %c0_28] : memref<32x32xbf16, #tpu.memory_space<vmem>>, vector<32x32xbf16>
    %c0_29 = arith.constant 0 : index
    %c0_30 = arith.constant 0 : index
    %36 = vector.load %arg13[%c0_29, %c0_30] : memref<1x32xf32, #tpu.memory_space<vmem>>, vector<1x32xf32>
    %c0_31 = arith.constant 0 : index
    %c0_32 = arith.constant 0 : index
    %37 = vector.load %arg14[%c0_31, %c0_32] : memref<1x32xf32, #tpu.memory_space<vmem>>, vector<1x32xf32>
    %c0_33 = arith.constant 0 : index
    %c0_34 = arith.constant 0 : index
    %38 = vector.load %arg15[%c0_33, %c0_34] : memref<1x32xf32, #tpu.memory_space<vmem>>, vector<1x32xf32>
    %c0_35 = arith.constant 0 : index
    %c0_36 = arith.constant 0 : index
    %39 = vector.load %arg16[%c0_35, %c0_36] : memref<32x128xbf16, #tpu.memory_space<vmem>>, vector<32x128xbf16>
    %c0_37 = arith.constant 0 : index
    %c0_38 = arith.constant 0 : index
    %40 = vector.load %arg17[%c0_37, %c0_38] : memref<1x128xf32, #tpu.memory_space<vmem>>, vector<1x128xf32>
    %c0_39 = arith.constant 0 : index
    %c0_40 = arith.constant 0 : index
    %41 = vector.load %arg18[%c0_39, %c0_40] : memref<128x32xbf16, #tpu.memory_space<vmem>>, vector<128x32xbf16>
    %c0_41 = arith.constant 0 : index
    %c0_42 = arith.constant 0 : index
    %42 = vector.load %arg19[%c0_41, %c0_42] : memref<1x32xf32, #tpu.memory_space<vmem>>, vector<1x32xf32>
    %cst_43 = arith.constant dense<0.000000e+00> : vector<10xf32>
    %43 = vector.multi_reduction <add>, %29, %cst_43 [1] : vector<10x32xf32> to vector<10xf32>
    %44 = vector.shape_cast %43 : vector<10xf32> to vector<10x1xf32>
    %cst_44 = arith.constant 3.200000e+01 : f32
    %45 = vector.broadcast %cst_44 : f32 to vector<10x1xf32>
    %46 = arith.divf %44, %45 : vector<10x1xf32>
    %47 = vector.broadcast %46 : vector<10x1xf32> to vector<10x32xf32>
    %48 = arith.subf %29, %47 : vector<10x32xf32>
    %49 = arith.mulf %48, %48 : vector<10x32xf32>
    %cst_45 = arith.constant dense<0.000000e+00> : vector<10xf32>
    %50 = vector.multi_reduction <add>, %49, %cst_45 [1] : vector<10x32xf32> to vector<10xf32>
    %51 = vector.shape_cast %50 : vector<10xf32> to vector<10x1xf32>
    %cst_46 = arith.constant 3.200000e+01 : f32
    %52 = vector.broadcast %cst_46 : f32 to vector<10x1xf32>
    %53 = arith.divf %51, %52 : vector<10x1xf32>
    %cst_47 = arith.constant 9.99999974E-6 : f32
    %54 = vector.broadcast %cst_47 : f32 to vector<10x1xf32>
    %55 = arith.addf %53, %54 : vector<10x1xf32>
    %56 = math.rsqrt %55 : vector<10x1xf32>
    %57 = vector.broadcast %56 : vector<10x1xf32> to vector<10x32xf32>
    %58 = arith.mulf %48, %57 : vector<10x32xf32>
    %59 = vector.broadcast %31 : vector<1x32xf32> to vector<10x32xf32>
    %60 = arith.mulf %58, %59 : vector<10x32xf32>
    %61 = vector.broadcast %32 : vector<1x32xf32> to vector<10x32xf32>
    %62 = arith.addf %60, %61 : vector<10x32xf32>
    %63 = arith.truncf %62 : vector<10x32xf32> to vector<10x32xbf16>
    %cst_48 = arith.constant dense<0.000000e+00> : vector<10x96xf32>
    %64 = tpu.matmul %63, %33, %cst_48 {dimension_numbers = #tpu.dot_dimension_numbers<[1], [0], [0], [1], [0, 0, 1, 1], [], []>} : vector<10x32xbf16>, vector<32x96xbf16>, vector<10x96xf32> -> vector<10x96xf32>
    %65 = vector.broadcast %34 : vector<1x96xf32> to vector<10x96xf32>
    %66 = arith.addf %64, %65 : vector<10x96xf32>
    %67 = vector.extract_strided_slice %66 {offsets = [0, 0], sizes = [10, 16], strides = [1, 1]} : vector<10x96xf32> to vector<10x16xf32>
    %68 = arith.truncf %67 : vector<10x16xf32> to vector<10x16xbf16>
    %69 = vector.extract_strided_slice %66 {offsets = [0, 32], sizes = [10, 16], strides = [1, 1]} : vector<10x96xf32> to vector<10x16xf32>
    %70 = arith.truncf %69 : vector<10x16xf32> to vector<10x16xbf16>
    %71 = vector.extract_strided_slice %66 {offsets = [0, 64], sizes = [10, 16], strides = [1, 1]} : vector<10x96xf32> to vector<10x16xf32>
    %72 = arith.truncf %71 : vector<10x16xf32> to vector<10x16xbf16>
    %cst_49 = arith.constant dense<0.000000e+00> : vector<10x10xf32>
    %73 = tpu.matmul %68, %70, %cst_49 {dimension_numbers = #tpu.dot_dimension_numbers<[1], [1], [0], [0], [0, 0, 1, 0], [], []>} : vector<10x16xbf16>, vector<10x16xbf16>, vector<10x10xf32> -> vector<10x10xf32>
    %cst_50 = arith.constant 2.500000e-01 : f32
    %74 = vector.broadcast %cst_50 : f32 to vector<10x10xf32>
    %75 = arith.mulf %73, %74 : vector<10x10xf32>
    %76 = arith.addf %75, %30 : vector<10x10xf32>
    %cst_51 = arith.constant dense<0xFF800000> : vector<10xf32>
    %77 = vector.multi_reduction <maximumf>, %76, %cst_51 [1] : vector<10x10xf32> to vector<10xf32>
    %78 = vector.shape_cast %77 : vector<10xf32> to vector<10x1xf32>
    %79 = vector.broadcast %78 : vector<10x1xf32> to vector<10x10xf32>
    %80 = arith.subf %76, %79 : vector<10x10xf32>
    %81 = math.exp %80 : vector<10x10xf32>
    %cst_52 = arith.constant dense<0.000000e+00> : vector<10xf32>
    %82 = vector.multi_reduction <add>, %81, %cst_52 [1] : vector<10x10xf32> to vector<10xf32>
    %83 = vector.shape_cast %82 : vector<10xf32> to vector<10x1xf32>
    %84 = tpu.reciprocal %83 {approx = true} : vector<10x1xf32> -> vector<10x1xf32>
    %85 = vector.broadcast %84 : vector<10x1xf32> to vector<10x10xf32>
    %86 = arith.mulf %81, %85 : vector<10x10xf32>
    %87 = arith.truncf %86 : vector<10x10xf32> to vector<10x10xbf16>
    %cst_53 = arith.constant dense<0.000000e+00> : vector<10x16xf32>
    %88 = tpu.matmul %87, %72, %cst_53 {dimension_numbers = #tpu.dot_dimension_numbers<[1], [0], [0], [1], [0, 0, 1, 1], [], []>} : vector<10x10xbf16>, vector<10x16xbf16>, vector<10x16xf32> -> vector<10x16xf32>
    %89 = arith.truncf %88 : vector<10x16xf32> to vector<10x16xbf16>
    %90 = vector.extract_strided_slice %35 {offsets = [0, 0], sizes = [16, 32], strides = [1, 1]} : vector<32x32xbf16> to vector<16x32xbf16>
    %cst_54 = arith.constant dense<0.000000e+00> : vector<10x32xf32>
    %91 = tpu.matmul %89, %90, %cst_54 {dimension_numbers = #tpu.dot_dimension_numbers<[1], [0], [0], [1], [0, 0, 1, 1], [], []>} : vector<10x16xbf16>, vector<16x32xbf16>, vector<10x32xf32> -> vector<10x32xf32>
    %92 = vector.extract_strided_slice %66 {offsets = [0, 16], sizes = [10, 16], strides = [1, 1]} : vector<10x96xf32> to vector<10x16xf32>
    %93 = arith.truncf %92 : vector<10x16xf32> to vector<10x16xbf16>
    %94 = vector.extract_strided_slice %66 {offsets = [0, 48], sizes = [10, 16], strides = [1, 1]} : vector<10x96xf32> to vector<10x16xf32>
    %95 = arith.truncf %94 : vector<10x16xf32> to vector<10x16xbf16>
    %96 = vector.extract_strided_slice %66 {offsets = [0, 80], sizes = [10, 16], strides = [1, 1]} : vector<10x96xf32> to vector<10x16xf32>
    %97 = arith.truncf %96 : vector<10x16xf32> to vector<10x16xbf16>
    %cst_55 = arith.constant dense<0.000000e+00> : vector<10x10xf32>
    %98 = tpu.matmul %93, %95, %cst_55 {dimension_numbers = #tpu.dot_dimension_numbers<[1], [1], [0], [0], [0, 0, 1, 0], [], []>} : vector<10x16xbf16>, vector<10x16xbf16>, vector<10x10xf32> -> vector<10x10xf32>
    %cst_56 = arith.constant 2.500000e-01 : f32
    %99 = vector.broadcast %cst_56 : f32 to vector<10x10xf32>
    %100 = arith.mulf %98, %99 : vector<10x10xf32>
    %101 = arith.addf %100, %30 : vector<10x10xf32>
    %cst_57 = arith.constant dense<0xFF800000> : vector<10xf32>
    %102 = vector.multi_reduction <maximumf>, %101, %cst_57 [1] : vector<10x10xf32> to vector<10xf32>
    %103 = vector.shape_cast %102 : vector<10xf32> to vector<10x1xf32>
    %104 = vector.broadcast %103 : vector<10x1xf32> to vector<10x10xf32>
    %105 = arith.subf %101, %104 : vector<10x10xf32>
    %106 = math.exp %105 : vector<10x10xf32>
    %cst_58 = arith.constant dense<0.000000e+00> : vector<10xf32>
    %107 = vector.multi_reduction <add>, %106, %cst_58 [1] : vector<10x10xf32> to vector<10xf32>
    %108 = vector.shape_cast %107 : vector<10xf32> to vector<10x1xf32>
    %109 = tpu.reciprocal %108 {approx = true} : vector<10x1xf32> -> vector<10x1xf32>
    %110 = vector.broadcast %109 : vector<10x1xf32> to vector<10x10xf32>
    %111 = arith.mulf %106, %110 : vector<10x10xf32>
    %112 = arith.truncf %111 : vector<10x10xf32> to vector<10x10xbf16>
    %cst_59 = arith.constant dense<0.000000e+00> : vector<10x16xf32>
    %113 = tpu.matmul %112, %97, %cst_59 {dimension_numbers = #tpu.dot_dimension_numbers<[1], [0], [0], [1], [0, 0, 1, 1], [], []>} : vector<10x10xbf16>, vector<10x16xbf16>, vector<10x16xf32> -> vector<10x16xf32>
    %114 = arith.truncf %113 : vector<10x16xf32> to vector<10x16xbf16>
    %115 = vector.extract_strided_slice %35 {offsets = [16, 0], sizes = [16, 32], strides = [1, 1]} : vector<32x32xbf16> to vector<16x32xbf16>
    %cst_60 = arith.constant dense<0.000000e+00> : vector<10x32xf32>
    %116 = tpu.matmul %114, %115, %cst_60 {dimension_numbers = #tpu.dot_dimension_numbers<[1], [0], [0], [1], [0, 0, 1, 1], [], []>} : vector<10x16xbf16>, vector<16x32xbf16>, vector<10x32xf32> -> vector<10x32xf32>
    %117 = arith.addf %91, %116 : vector<10x32xf32>
    %118 = vector.broadcast %36 : vector<1x32xf32> to vector<10x32xf32>
    %119 = arith.addf %117, %118 : vector<10x32xf32>
    %120 = arith.addf %29, %119 : vector<10x32xf32>
    %cst_61 = arith.constant dense<0.000000e+00> : vector<10xf32>
    %121 = vector.multi_reduction <add>, %120, %cst_61 [1] : vector<10x32xf32> to vector<10xf32>
    %122 = vector.shape_cast %121 : vector<10xf32> to vector<10x1xf32>
    %cst_62 = arith.constant 3.200000e+01 : f32
    %123 = vector.broadcast %cst_62 : f32 to vector<10x1xf32>
    %124 = arith.divf %122, %123 : vector<10x1xf32>
    %125 = vector.broadcast %124 : vector<10x1xf32> to vector<10x32xf32>
    %126 = arith.subf %120, %125 : vector<10x32xf32>
    %127 = arith.mulf %126, %126 : vector<10x32xf32>
    %cst_63 = arith.constant dense<0.000000e+00> : vector<10xf32>
    %128 = vector.multi_reduction <add>, %127, %cst_63 [1] : vector<10x32xf32> to vector<10xf32>
    %129 = vector.shape_cast %128 : vector<10xf32> to vector<10x1xf32>
    %cst_64 = arith.constant 3.200000e+01 : f32
    %130 = vector.broadcast %cst_64 : f32 to vector<10x1xf32>
    %131 = arith.divf %129, %130 : vector<10x1xf32>
    %cst_65 = arith.constant 9.99999974E-6 : f32
    %132 = vector.broadcast %cst_65 : f32 to vector<10x1xf32>
    %133 = arith.addf %131, %132 : vector<10x1xf32>
    %134 = math.rsqrt %133 : vector<10x1xf32>
    %135 = vector.broadcast %134 : vector<10x1xf32> to vector<10x32xf32>
    %136 = arith.mulf %126, %135 : vector<10x32xf32>
    %137 = vector.broadcast %37 : vector<1x32xf32> to vector<10x32xf32>
    %138 = arith.mulf %136, %137 : vector<10x32xf32>
    %139 = vector.broadcast %38 : vector<1x32xf32> to vector<10x32xf32>
    %140 = arith.addf %138, %139 : vector<10x32xf32>
    %141 = arith.truncf %140 : vector<10x32xf32> to vector<10x32xbf16>
    %cst_66 = arith.constant dense<0.000000e+00> : vector<10x128xf32>
    %142 = tpu.matmul %141, %39, %cst_66 {dimension_numbers = #tpu.dot_dimension_numbers<[1], [0], [0], [1], [0, 0, 1, 1], [], []>} : vector<10x32xbf16>, vector<32x128xbf16>, vector<10x128xf32> -> vector<10x128xf32>
    %143 = vector.broadcast %40 : vector<1x128xf32> to vector<10x128xf32>
    %144 = arith.addf %142, %143 : vector<10x128xf32>
    %cst_67 = arith.constant -1.702000e+00 : f32
    %145 = vector.broadcast %cst_67 : f32 to vector<10x128xf32>
    %146 = arith.mulf %145, %144 : vector<10x128xf32>
    %147 = math.exp %146 : vector<10x128xf32>
    %cst_68 = arith.constant 1.000000e+00 : f32
    %148 = vector.broadcast %cst_68 : f32 to vector<10x128xf32>
    %149 = arith.addf %148, %147 : vector<10x128xf32>
    %150 = tpu.reciprocal %149 {approx = true} : vector<10x128xf32> -> vector<10x128xf32>
    %151 = arith.mulf %144, %150 : vector<10x128xf32>
    %152 = arith.truncf %151 : vector<10x128xf32> to vector<10x128xbf16>
    %cst_69 = arith.constant dense<0.000000e+00> : vector<10x32xf32>
    %153 = tpu.matmul %152, %41, %cst_69 {dimension_numbers = #tpu.dot_dimension_numbers<[1], [0], [0], [1], [0, 0, 1, 1], [], []>} : vector<10x128xbf16>, vector<128x32xbf16>, vector<10x32xf32> -> vector<10x32xf32>
    %154 = vector.broadcast %42 : vector<1x32xf32> to vector<10x32xf32>
    %155 = arith.addf %153, %154 : vector<10x32xf32>
    %156 = arith.addf %120, %155 : vector<10x32xf32>
    %c0_70 = arith.constant 0 : index
    %c0_71 = arith.constant 0 : index
    %157 = vector.load %arg4[%c0_70, %c0_71] : memref<2x10xf32, #tpu.memory_space<vmem>>, vector<2x10xf32>
    %cst_72 = arith.constant dense<0.000000e+00> : vector<2x32xf32>
    %158 = tpu.matmul %157, %156, %cst_72 {dimension_numbers = #tpu.dot_dimension_numbers<[1], [0], [0], [1], [0, 0, 1, 1], [], []>} : vector<2x10xf32>, vector<10x32xf32>, vector<2x32xf32> -> vector<2x32xf32>
    %c0_73 = arith.constant 0 : index
    %c0_74 = arith.constant 0 : index
    %159 = vector.load %arg20[%c0_73, %c0_74] : memref<1x32xf32, #tpu.memory_space<vmem>>, vector<1x32xf32>
    %c0_75 = arith.constant 0 : index
    %c0_76 = arith.constant 0 : index
    %160 = vector.load %arg21[%c0_75, %c0_76] : memref<1x32xf32, #tpu.memory_space<vmem>>, vector<1x32xf32>
    %cst_77 = arith.constant dense<0.000000e+00> : vector<2xf32>
    %161 = vector.multi_reduction <add>, %158, %cst_77 [1] : vector<2x32xf32> to vector<2xf32>
    %162 = vector.shape_cast %161 : vector<2xf32> to vector<2x1xf32>
    %cst_78 = arith.constant 3.200000e+01 : f32
    %163 = vector.broadcast %cst_78 : f32 to vector<2x1xf32>
    %164 = arith.divf %162, %163 : vector<2x1xf32>
    %165 = vector.broadcast %164 : vector<2x1xf32> to vector<2x32xf32>
    %166 = arith.subf %158, %165 : vector<2x32xf32>
    %167 = arith.mulf %166, %166 : vector<2x32xf32>
    %cst_79 = arith.constant dense<0.000000e+00> : vector<2xf32>
    %168 = vector.multi_reduction <add>, %167, %cst_79 [1] : vector<2x32xf32> to vector<2xf32>
    %169 = vector.shape_cast %168 : vector<2xf32> to vector<2x1xf32>
    %cst_80 = arith.constant 3.200000e+01 : f32
    %170 = vector.broadcast %cst_80 : f32 to vector<2x1xf32>
    %171 = arith.divf %169, %170 : vector<2x1xf32>
    %cst_81 = arith.constant 9.99999974E-6 : f32
    %172 = vector.broadcast %cst_81 : f32 to vector<2x1xf32>
    %173 = arith.addf %171, %172 : vector<2x1xf32>
    %174 = math.rsqrt %173 : vector<2x1xf32>
    %175 = vector.broadcast %174 : vector<2x1xf32> to vector<2x32xf32>
    %176 = arith.mulf %166, %175 : vector<2x32xf32>
    %177 = vector.broadcast %159 : vector<1x32xf32> to vector<2x32xf32>
    %178 = arith.mulf %176, %177 : vector<2x32xf32>
    %179 = vector.broadcast %160 : vector<1x32xf32> to vector<2x32xf32>
    %180 = arith.addf %178, %179 : vector<2x32xf32>
    %c0_82 = arith.constant 0 : index
    %c0_83 = arith.constant 0 : index
    %181 = vector.load %arg22[%c0_82, %c0_83] : memref<32x32xbf16, #tpu.memory_space<vmem>>, vector<32x32xbf16>
    %182 = arith.truncf %180 : vector<2x32xf32> to vector<2x32xbf16>
    %cst_84 = arith.constant dense<0.000000e+00> : vector<2x32xf32>
    %183 = tpu.matmul %182, %181, %cst_84 {dimension_numbers = #tpu.dot_dimension_numbers<[1], [0], [0], [1], [0, 0, 1, 1], [], []>} : vector<2x32xbf16>, vector<32x32xbf16>, vector<2x32xf32> -> vector<2x32xf32>
    %c0_85 = arith.constant 0 : index
    %c0_86 = arith.constant 0 : index
    %184 = vector.load %arg23[%c0_85, %c0_86] : memref<2x32xf32, #tpu.memory_space<vmem>>, vector<2x32xf32>
    tpu.vector_store %arg23[%c0_85, %c0_86], %183 {strides = array<i32>} : memref<2x32xf32, #tpu.memory_space<vmem>>, vector<2x32xf32>,
    return
  }
}

</mosaic_0001>

<llo_original>
// kernel: clip_forward.5
$region0: #{clip_forward.5}
  #allocation0 [shape = 'u32[]', space=smem, size = 0x4, offset = 0x4, fixed_abs, tag = 'smem constant byte address 0x4 - core index']
  #allocation1 [shape = 'u32[144,128]{1,0:T(1,128)}', space=vmem, size = 0x12000, scoped, tag = 'internal scratch']
  #allocation2 [shape = 'f32[1,1]{1,0:T(1,128)S(1)}', space=vmem, size = 0x200, scoped, tag = 'scoped memory for clip_forward.5']
  %s0 = inlined_call_operand.vmem [shape: f32[6,32], index: 0, kind: input, shape index: {}]
  %s1 = inlined_call_operand.vmem [shape: f32[2,32], index: 1, kind: input, shape index: {}]
  %s2 = inlined_call_operand.<no memory space> [shape: f32[1,1], index: 2, kind: input, shape index: {}]
  %s3 = inlined_call_operand.hbm [shape: f32[2,3], index: 3, kind: output, shape index: {}]
  %s4 = sld [smem:[#allocation0]]
  $region22: #{clip_forward.5} parent=0
    _
  %s6 = ssub.s32 1, %s4
  %s7 = scalar_select 0, %s6, %s4
  %v8 = vstv %s2
  %9 = vst [vmem:[#allocation2] sm:$0x1] %v8
  $region1: #{clip_forward.5} parent=0
    #allocation3 [shape = 'u8[1024]{0}', space=vmem, size = 0x400, scoped, tag = 'output window, operand 0, single buffered']
    #allocation4 [shape = 's32[1]{0}', space=sflag, size = 0x4, scoped, tag = 'scoped memory for clip_forward.5']
    %10 = vsyncpa [#allocation4], 0
    // Predicated region
    $region2: #{clip_forward.5} parent=1 // pred_check
      _
    $region3: #{clip_forward.5} parent=1 // pred_check_branch
      %12 = sbr.rel (0) target = $region5
    $region4: #{clip_forward.5} parent=1 // pred_region
      _
    $region5: #{clip_forward.5} parent=1 // pred_fallthru
      _
    // Predicated region
    $region6: #{clip_forward.5} parent=1 // pred_check
      _
    $region7: #{clip_forward.5} parent=1 // pred_check_branch
      %14 = sbr.rel (0) target = $region9
    $region8: #{clip_forward.5} parent=1 // pred_region
      _
    $region9: #{clip_forward.5} parent=1 // pred_fallthru
      _
    // Predicated region
    $region10: #{clip_forward.5} parent=1 // pred_check
      _
    $region11: #{clip_forward.5} parent=1 // pred_check_branch
      %16 = sbr.rel (0) target = $region13
    $region12: #{clip_forward.5} parent=1 // pred_region
      _
    $region13: #{clip_forward.5} parent=1 // pred_fallthru
      _
    %v17 = vld [vmem:[%s0] sm:$0x3f]
    %v18 = vld [vmem:[%s1] sm:$0x3]
    %v19 = vmul.f32 %v17, %v17
    %vm20 = vcmask 259072
    %v21 = vsel %vm20, %v19, 0.0
    %22 = vadd.xlane.f32.xlu0 %v21
    %v23 = vpop.xlane.xlu0 %22
    %v24 = vrsqrt.pop %v23
    %v25 = vmul.f32 %v17, %v24
    %v26 = vmul.f32 %v18, %v18
    %vm27 = vcmask 254976
    %v28 = vsel %vm27, %v26, 0.0
    %29 = vadd.xlane.f32.xlu0 %v28
    %v30 = vpop.xlane.xlu0 %29
    %v31 = vrsqrt.pop %v30
    %v32 = vmul.f32 %v18, %v31
    %v33 = vld [vmem:[#allocation2] sm:$0x1]
    %v34 = vmul.f32 %v33, 1.442695
    %v35 = vpow.pop %v34
    %vm36 = vcmask 261120
    %v38 = vsel %vm36, %v32, 0
    %v41 = vsel %vm36, %v25, 0
    %43 = vmatprep.subr.mxu0 0.0
    %44 = vmatpush1.xpose.msra.mxu0 %v41
    %45 = vmatprep.subr.mxu0 0.0
    %46 = vmatpush1.xpose.msra.mxu0 0.0
    %47 = vmatprep.subr.mxu0 0.0
    %48 = vmatpush1.xpose.msra.mxu0 0.0
    %49 = vmatprep.subr.mxu0 0.0
    %50 = vmatpush1.xpose.msra.mxu0 0.0
    %51 = vmatprep.subr.mxu0 0.0
    %52 = vmatpush1.xpose.msra.mxu0 0.0
    %53 = vmatprep.subr.mxu0 0.0
    %54 = vmatpush1.xpose.msra.mxu0 0.0
    %55 = vmatprep.subr.mxu0 0.0
    %56 = vmatpush1.xpose.msra.mxu0 0.0
    %57 = vmatprep.subr.mxu0 0.0
    %58 = vmatpush1.xpose.msra.mxu0 0.0
    %59 = vmatprep.subr.mxu0 0.0
    %60 = vmatpush1.xpose.msra.mxu0 0.0
    %61 = vmatprep.subr.mxu0 0.0
    %62 = vmatpush1.xpose.msra.mxu0 0.0
    %63 = vmatprep.subr.mxu0 0.0
    %64 = vmatpush1.xpose.msra.mxu0 0.0
    %65 = vmatprep.subr.mxu0 0.0
    %66 = vmatpush1.xpose.msra.mxu0 0.0
    %67 = vmatprep.subr.mxu0 0.0
    %68 = vmatpush1.xpose.msra.mxu0 0.0
    %69 = vmatprep.subr.mxu0 0.0
    %70 = vmatpush1.xpose.msra.mxu0 0.0
    %71 = vmatprep.subr.mxu0 0.0
    %72 = vmatpush1.xpose.msra.mxu0 0.0
    %73 = vmatprep.subr.mxu0 0.0
    %74 = vmatpush1.xpose.msra.mxu0 0.0
    %75 = vmatprep.subr.mxu0 0.0
    %76 = vmatpush1.xpose.msra.mxu0 0.0
    %77 = vmatprep.subr.mxu0 0.0
    %78 = vmatpush1.xpose.msra.mxu0 0.0
    %79 = vmatprep.subr.mxu0 0.0
    %80 = vmatpush1.xpose.msra.mxu0 0.0
    %81 = vmatprep.subr.mxu0 0.0
    %82 = vmatpush1.xpose.msra.mxu0 0.0
    %83 = vmatprep.subr.mxu0 0.0
    %84 = vmatpush1.xpose.msra.mxu0 0.0
    %85 = vmatprep.subr.mxu0 0.0
    %86 = vmatpush1.xpose.msra.mxu0 0.0
    %87 = vmatprep.subr.mxu0 0.0
    %88 = vmatpush1.xpose.msra.mxu0 0.0
    %89 = vmatprep.subr.mxu0 0.0
    %90 = vmatpush1.xpose.msra.mxu0 0.0
    %91 = vmatprep.subr.mxu0 0.0
    %92 = vmatpush1.xpose.msra.mxu0 0.0
    %93 = vmatprep.subr.mxu0 0.0
    %94 = vmatpush1.xpose.msra.mxu0 0.0
    %95 = vmatprep.subr.mxu0 0.0
    %96 = vmatpush1.xpose.msra.mxu0 0.0
    %97 = vmatprep.subr.mxu0 0.0
    %98 = vmatpush1.xpose.msra.mxu0 0.0
    %99 = vmatprep.subr.mxu0 0.0
    %100 = vmatpush1.xpose.msra.mxu0 0.0
    %101 = vmatprep.subr.mxu0 0.0
    %102 = vmatpush1.xpose.msra.mxu0 0.0
    %103 = vmatprep.subr.mxu0 0.0
    %104 = vmatpush1.xpose.msra.mxu0 0.0
    %105 = vmatprep.subr.mxu0 0.0
    %106 = vmatpush1.xpose.msra.mxu0 0.0
    %107 = vmatprep.mubr.f32.mxu0 0.0
    %108 = vmatmul.mubr.f32.gmra.mrb[0].mxu0 %v38
    %v109 = vpop.f32.mrb[0].mxu0
    %v110 = vadd.f32 0.0, %v109
    %v111 = vpop.f32.mrb[0].mxu0
    %112 = vdwg.mxu0
    %114 = vset.pattern.permute.xlu0 0
    %115 = vperm.xlu0 %114, %v35
    %v116 = vpop.permute.xlu0 %115
    %v118 = vlaneseq
    %v119 = vshrl.u32 %v118, 7
    %v120 = vsub.s32 0, %v119
    %v121 = vrot.slane %v116, %v120
    %v122 = vmul.f32 %v110, %v121
    %vm123 = vcmask 16384
    %124 = vst.msk [vmem:[#allocation3] sm:$0x1] %vm123, %v122
    %v125 = vrot.slane %v32, 1
    %v126 = vrot.slane %v25, 3
    %v127 = vsel %vm36, %v125, 0
    %v129 = vsel %vm36, %v126, 0
    %131 = vmatprep.subr.mxu0 0.0
    %132 = vmatpush1.xpose.msra.mxu0 %v129
    %133 = vmatprep.subr.mxu0 0.0
    %134 = vmatpush1.xpose.msra.mxu0 0.0
    %135 = vmatprep.subr.mxu0 0.0
    %136 = vmatpush1.xpose.msra.mxu0 0.0
    %137 = vmatprep.subr.mxu0 0.0
    %138 = vmatpush1.xpose.msra.mxu0 0.0
    %139 = vmatprep.subr.mxu0 0.0
    %140 = vmatpush1.xpose.msra.mxu0 0.0
    %141 = vmatprep.subr.mxu0 0.0
    %142 = vmatpush1.xpose.msra.mxu0 0.0
    %143 = vmatprep.subr.mxu0 0.0
    %144 = vmatpush1.xpose.msra.mxu0 0.0
    %145 = vmatprep.subr.mxu0 0.0
    %146 = vmatpush1.xpose.msra.mxu0 0.0
    %147 = vmatprep.subr.mxu0 0.0
    %148 = vmatpush1.xpose.msra.mxu0 0.0
    %149 = vmatprep.subr.mxu0 0.0
    %150 = vmatpush1.xpose.msra.mxu0 0.0
    %151 = vmatprep.subr.mxu0 0.0
    %152 = vmatpush1.xpose.msra.mxu0 0.0
    %153 = vmatprep.subr.mxu0 0.0
    %154 = vmatpush1.xpose.msra.mxu0 0.0
    %155 = vmatprep.subr.mxu0 0.0
    %156 = vmatpush1.xpose.msra.mxu0 0.0
    %157 = vmatprep.subr.mxu0 0.0
    %158 = vmatpush1.xpose.msra.mxu0 0.0
    %159 = vmatprep.subr.mxu0 0.0
    %160 = vmatpush1.xpose.msra.mxu0 0.0
    %161 = vmatprep.subr.mxu0 0.0
    %162 = vmatpush1.xpose.msra.mxu0 0.0
    %163 = vmatprep.subr.mxu0 0.0
    %164 = vmatpush1.xpose.msra.mxu0 0.0
    %165 = vmatprep.subr.mxu0 0.0
    %166 = vmatpush1.xpose.msra.mxu0 0.0
    %167 = vmatprep.subr.mxu0 0.0
    %168 = vmatpush1.xpose.msra.mxu0 0.0
    %169 = vmatprep.subr.mxu0 0.0
    %170 = vmatpush1.xpose.msra.mxu0 0.0
    %171 = vmatprep.subr.mxu0 0.0
    %172 = vmatpush1.xpose.msra.mxu0 0.0
    %173 = vmatprep.subr.mxu0 0.0
    %174 = vmatpush1.xpose.msra.mxu0 0.0
    %175 = vmatprep.subr.mxu0 0.0
    %176 = vmatpush1.xpose.msra.mxu0 0.0
    %177 = vmatprep.subr.mxu0 0.0
    %178 = vmatpush1.xpose.msra.mxu0 0.0
    %179 = vmatprep.subr.mxu0 0.0
    %180 = vmatpush1.xpose.msra.mxu0 0.0
    %181 = vmatprep.subr.mxu0 0.0
    %182 = vmatpush1.xpose.msra.mxu0 0.0
    %183 = vmatprep.subr.mxu0 0.0
    %184 = vmatpush1.xpose.msra.mxu0 0.0
    %185 = vmatprep.subr.mxu0 0.0
    %186 = vmatpush1.xpose.msra.mxu0 0.0
    %187 = vmatprep.subr.mxu0 0.0
    %188 = vmatpush1.xpose.msra.mxu0 0.0
    %189 = vmatprep.subr.mxu0 0.0
    %190 = vmatpush1.xpose.msra.mxu0 0.0
    %191 = vmatprep.subr.mxu0 0.0
    %192 = vmatpush1.xpose.msra.mxu0 0.0
    %193 = vmatprep.subr.mxu0 0.0
    %194 = vmatpush1.xpose.msra.mxu0 0.0
    %195 = vmatprep.mubr.f32.mxu0 0.0
    %196 = vmatmul.mubr.f32.gmra.mrb[0].mxu0 %v127
    %v197 = vpop.f32.mrb[0].mxu0
    %v198 = vadd.f32 0.0, %v197
    %v199 = vpop.f32.mrb[0].mxu0
    %200 = vdwg.mxu0
    %v201 = vmul.f32 %v198, %v121
    %202 = vst.msk [vmem:[#allocation3 + $0x1] sm:$0x1] %vm123, %v201
    // Predicated region
    $region14: #{clip_forward.5} parent=1 // pred_check
      _
    $region15: #{clip_forward.5} parent=1 // pred_check_branch
      %204 = sbr.rel (0) target = $region17
    $region16: #{clip_forward.5} parent=1 // pred_region
      %s206 = ssub.s32 32, 32
      %207 = vsyncadd [#allocation4], %s206
      %s209 = sshll.u32 [#allocation3], 4
      %s210 = int_to_ptr.vmem [resolvable:$true] %s209
      %212 = dma.vmem_to_hbm [thread:$0]  %s210, 32, %s3, [#allocation4]
    $region17: #{clip_forward.5} parent=1 // pred_fallthru
      _
    // Predicated region
    $region18: #{clip_forward.5} parent=1 // pred_check
      _
    $region19: #{clip_forward.5} parent=1 // pred_check_branch
      %214 = sbr.rel (0) target = $region21
    $region20: #{clip_forward.5} parent=1 // pred_region
      %215 = dma.done [#allocation4], 32
    $region21: #{clip_forward.5} parent=1 // pred_fallthru
      _
    %216 = vsyncpa [#allocation4], 1

// kernel: clip_forward.3
$region0: #{clip_forward.3}
  #allocation0 [shape = 'u32[]', space=smem, size = 0x4, offset = 0x4, fixed_abs, tag = 'smem constant byte address 0x4 - core index']
  #allocation1 [shape = 'u32[144,128]{1,0:T(1,128)}', space=vmem, size = 0x12000, scoped, tag = 'internal scratch']
  %s0 = inlined_call_operand.vmem [shape: f32[48,32], index: 0, kind: input, shape index: {}]
  %s1 = inlined_call_operand.vmem [shape: f32[6,48], index: 1, kind: input, shape index: {}]
  %s2 = inlined_call_operand.vmem [shape: f32[48,48], index: 2, kind: input, shape index: {}]
  %s3 = inlined_call_operand.vmem [shape: f32[1,32], index: 3, kind: input, shape index: {}]
  %s4 = inlined_call_operand.vmem [shape: f32[1,32], index: 4, kind: input, shape index: {}]
  %s5 = inlined_call_operand.vmem [shape: bf16[32,96], index: 5, kind: input, shape index: {}]
  %s6 = inlined_call_operand.vmem [shape: f32[1,96], index: 6, kind: input, shape index: {}]
  %s7 = inlined_call_operand.vmem [shape: bf16[32,32], index: 7, kind: input, shape index: {}]
  %s8 = inlined_call_operand.vmem [shape: f32[1,32], index: 8, kind: input, shape index: {}]
  %s9 = inlined_call_operand.vmem [shape: f32[1,32], index: 9, kind: input, shape index: {}]
  %s10 = inlined_call_operand.vmem [shape: f32[1,32], index: 10, kind: input, shape index: {}]
  %s11 = inlined_call_operand.vmem [shape: bf16[32,128], index: 11, kind: input, shape index: {}]
  %s12 = inlined_call_operand.vmem [shape: f32[1,128], index: 12, kind: input, shape index: {}]
  %s13 = inlined_call_operand.vmem [shape: bf16[128,32], index: 13, kind: input, shape index: {}]
  %s14 = inlined_call_operand.vmem [shape: f32[1,32], index: 14, kind: input, shape index: {}]
  %s15 = inlined_call_operand.vmem [shape: f32[1,32], index: 15, kind: input, shape index: {}]
  %s16 = inlined_call_operand.vmem [shape: f32[1,32], index: 16, kind: input, shape index: {}]
  %s17 = inlined_call_operand.vmem [shape: bf16[32,32], index: 17, kind: input, shape index: {}]
  %s18 = inlined_call_operand.vmem [shape: f32[6,32], index: 18, kind: output, shape index: {}]
  %s19 = sld [smem:[#allocation0]]
  $region82: #{clip_forward.3} parent=0
    _
  %s21 = ssub.s32 1, %s19
  %s22 = scalar_select 0, %s21, %s19
  // Predicated region
  $region2: #{clip_forward.3} parent=0 // pred_check
    _
  $region3: #{clip_forward.3} parent=0 // pred_check_branch
    %24 = sbr.rel (0) target = $region5
  $region4: #{clip_forward.3} parent=0 // pred_region
    _
  $region5: #{clip_forward.3} parent=0 // pred_fallthru
    _
  // Predicated region
  $region6: #{clip_forward.3} parent=0 // pred_check
    _
  $region7: #{clip_forward.3} parent=0 // pred_check_branch
    %26 = sbr.rel (0) target = $region9
  $region8: #{clip_forward.3} parent=0 // pred_region
    _
  $region9: #{clip_forward.3} parent=0 // pred_fallthru
    _
  // Predicated region
  $region10: #{clip_forward.3} parent=0 // pred_check
    _
  $region11: #{clip_forward.3} parent=0 // pred_check_branch
    %28 = sbr.rel (0) target = $region13
  $region12: #{clip_forward.3} parent=0 // pred_region
    _
  $region13: #{clip_forward.3} parent=0 // pred_fallthru
    _
  // Predicated region
  $region14: #{clip_forward.3} parent=0 // pred_check
    _
  $region15: #{clip_forward.3} parent=0 // pred_check_branch
    %30 = sbr.rel (0) target = $region17
  $region16: #{clip_forward.3} parent=0 // pred_region
    _
  $region17: #{clip_forward.3} parent=0 // pred_fallthru
    _
  // Predicated region
  $region18: #{clip_forward.3} parent=0 // pred_check
    _
  $region19: #{clip_forward.3} parent=0 // pred_check_branch
    %32 = sbr.rel (0) target = $region21
  $region20: #{clip_forward.3} parent=0 // pred_region
    _
  $region21: #{clip_forward.3} parent=0 // pred_fallthru
    _
  // Predicated region
  $region22: #{clip_forward.3} parent=0 // pred_check
    _
  $region23: #{clip_forward.3} parent=0 // pred_check_branch
    %34 = sbr.rel (0) target = $region25
  $region24: #{clip_forward.3} parent=0 // pred_region
    _
  $region25: #{clip_forward.3} parent=0 // pred_fallthru
    _
  // Predicated region
  $region26: #{clip_forward.3} parent=0 // pred_check
    _
  $region27: #{clip_forward.3} parent=0 // pred_check_branch
    %36 = sbr.rel (0) target = $region29
  $region28: #{clip_forward.3} parent=0 // pred_region
    _
  $region29: #{clip_forward.3} parent=0 // pred_fallthru
    _
  // Predicated region
  $region30: #{clip_forward.3} parent=0 // pred_check
    _
  $region31: #{clip_forward.3} parent=0 // pred_check_branch
    %38 = sbr.rel (0) target = $region33
  $region32: #{clip_forward.3} parent=0 // pred_region
    _
  $region33: #{clip_forward.3} parent=0 // pred_fallthru
    _
  // Predicated region
  $region34: #{clip_forward.3} parent=0 // pred_check
    _
  $region35: #{clip_forward.3} parent=0 // pred_check_branch
    %40 = sbr.rel (0) target = $region37
  $region36: #{clip_forward.3} parent=0 // pred_region
    _
  $region37: #{clip_forward.3} parent=0 // pred_fallthru
    _
  // Predicated region
  $region38: #{clip_forward.3} parent=0 // pred_check
    _
  $region39: #{clip_forward.3} parent=0 // pred_check_branch
    %42 = sbr.rel (0) target = $region41
  $region40: #{clip_forward.3} parent=0 // pred_region
    _
  $region41: #{clip_forward.3} parent=0 // pred_fallthru
    _
  // Predicated region
  $region42: #{clip_forward.3} parent=0 // pred_check
    _
  $region43: #{clip_forward.3} parent=0 // pred_check_branch
    %44 = sbr.rel (0) target = $region45
  $region44: #{clip_forward.3} parent=0 // pred_region
    _
  $region45: #{clip_forward.3} parent=0 // pred_fallthru
    _
  // Predicated region
  $region46: #{clip_forward.3} parent=0 // pred_check
    _
  $region47: #{clip_forward.3} parent=0 // pred_check_branch
    %46 = sbr.rel (0) target = $region49
  $region48: #{clip_forward.3} parent=0 // pred_region
    _
  $region49: #{clip_forward.3} parent=0 // pred_fallthru
    _
  // Predicated region
  $region50: #{clip_forward.3} parent=0 // pred_check
    _
  $region51: #{clip_forward.3} parent=0 // pred_check_branch
    %48 = sbr.rel (0) target = $region53
  $region52: #{clip_forward.3} parent=0 // pred_region
    _
  $region53: #{clip_forward.3} parent=0 // pred_fallthru
    _
  // Predicated region
  $region54: #{clip_forward.3} parent=0 // pred_check
    _
  $region55: #{clip_forward.3} parent=0 // pred_check_branch
    %50 = sbr.rel (0) target = $region57
  $region56: #{clip_forward.3} parent=0 // pred_region
    _
  $region57: #{clip_forward.3} parent=0 // pred_fallthru
    _
  // Predicated region
  $region58: #{clip_forward.3} parent=0 // pred_check
    _
  $region59: #{clip_forward.3} parent=0 // pred_check_branch
    %52 = sbr.rel (0) target = $region61
  $region60: #{clip_forward.3} parent=0 // pred_region
    _
  $region61: #{clip_forward.3} parent=0 // pred_fallthru
    _
  // Predicated region
  $region62: #{clip_forward.3} parent=0 // pred_check
    _
  $region63: #{clip_forward.3} parent=0 // pred_check_branch
    %54 = sbr.rel (0) target = $region65
  $region64: #{clip_forward.3} parent=0 // pred_region
    _
  $region65: #{clip_forward.3} parent=0 // pred_fallthru
    _
  // Predicated region
  $region66: #{clip_forward.3} parent=0 // pred_check
    _
  $region67: #{clip_forward.3} parent=0 // pred_check_branch
    %56 = sbr.rel (0) target = $region69
  $region68: #{clip_forward.3} parent=0 // pred_region
    _
  $region69: #{clip_forward.3} parent=0 // pred_fallthru
    _
  // Predicated region
  $region70: #{clip_forward.3} parent=0 // pred_check
    _
  $region71: #{clip_forward.3} parent=0 // pred_check_branch
    %58 = sbr.rel (0) target = $region73
  $region72: #{clip_forward.3} parent=0 // pred_region
    _
  $region73: #{clip_forward.3} parent=0 // pred_fallthru
    _
  %v60 = vld [vmem:[%s0] sm:$0xff]
  %v61 = vld [vmem:[%s0 + $0x8] sm:$0xff]
  %v62 = vld [vmem:[%s0 + $0x10] sm:$0xff]
  %v63 = vld [vmem:[%s0 + $0x18] sm:$0xff]
  %v64 = vld [vmem:[%s0 + $0x20] sm:$0xff]
  %v65 = vld [vmem:[%s0 + $0x28] sm:$0xff]
  %v66 = vld [vmem:[%s2] sm:$0xff]
  %v67 = vld [vmem:[%s2 + $0x8] sm:$0xff]
  %v68 = vld [vmem:[%s2 + $0x10] sm:$0xff]
  %v69 = vld [vmem:[%s2 + $0x18] sm:$0xff]
  %v70 = vld [vmem:[%s2 + $0x20] sm:$0xff]
  %v71 = vld [vmem:[%s2 + $0x28] sm:$0xff]
  %v72 = vld [vmem:[%s3] sm:$0x1]
  %v73 = vld [vmem:[%s4] sm:$0x1]
  %v74 = vld [vmem:[%s5] sm:$0xf]
  %v75 = vld [vmem:[%s5 + $0x4] sm:$0xf]
  %v76 = vld [vmem:[%s5 + $0x8] sm:$0xf]
  %v77 = vld [vmem:[%s5 + $0xc] sm:$0xf]
  %v78 = vld [vmem:[%s6] sm:$0x1]
  %v79 = vld [vmem:[%s7] sm:$0xf]
  %v80 = vld [vmem:[%s7 + $0x4] sm:$0xf]
  %v81 = vld [vmem:[%s7 + $0x8] sm:$0xf]
  %v82 = vld [vmem:[%s7 + $0xc] sm:$0xf]
  %v83 = vld [vmem:[%s8] sm:$0x1]
  %v84 = vld [vmem:[%s9] sm:$0x1]
  %v85 = vld [vmem:[%s10] sm:$0x1]
  %v86 = vld [vmem:[%s11] sm:$0xf]
  %v87 = vld [vmem:[%s11 + $0x4] sm:$0xf]
  %v88 = vld [vmem:[%s11 + $0x8] sm:$0xf]
  %v89 = vld [vmem:[%s11 + $0xc] sm:$0xf]
  %v90 = vld [vmem:[%s12] sm:$0x1]
  %v91 = vld [vmem:[%s13] sm:$0xf]
  %v92 = vld [vmem:[%s13 + $0x4] sm:$0xf]
  %v93 = vld [vmem:[%s13 + $0x8] sm:$0xf]
  %v94 = vld [vmem:[%s13 + $0xc] sm:$0xf]
  %v95 = vld [vmem:[%s13 + $0x10] sm:$0xf]
  %v96 = vld [vmem:[%s13 + $0x14] sm:$0xf]
  %v97 = vld [vmem:[%s13 + $0x18] sm:$0xf]
  %v98 = vld [vmem:[%s13 + $0x1c] sm:$0xf]
  %v99 = vld [vmem:[%s13 + $0x20] sm:$0xf]
  %v100 = vld [vmem:[%s13 + $0x24] sm:$0xf]
  %v101 = vld [vmem:[%s13 + $0x28] sm:$0xf]
  %v102 = vld [vmem:[%s13 + $0x2c] sm:$0xf]
  %v103 = vld [vmem:[%s13 + $0x30] sm:$0xf]
  %v104 = vld [vmem:[%s13 + $0x34] sm:$0xf]
  %v105 = vld [vmem:[%s13 + $0x38] sm:$0xf]
  %v106 = vld [vmem:[%s13 + $0x3c] sm:$0xf]
  %v107 = vld [vmem:[%s14] sm:$0x1]
  %vm108 = vcmask 261120
  %v109 = vsel %vm108, %v60, 0.0
  %110 = vadd.xlane.f32.xlu0 %v109
  %v111 = vpop.xlane.xlu0 %110
  %v112 = vsel %vm108, %v61, 0.0
  %113 = vadd.xlane.f32.xlu0 %v112
  %v114 = vpop.xlane.xlu0 %113
  %v115 = vsel %vm108, %v62, 0.0
  %116 = vadd.xlane.f32.xlu0 %v115
  %v117 = vpop.xlane.xlu0 %116
  %v118 = vsel %vm108, %v63, 0.0
  %119 = vadd.xlane.f32.xlu0 %v118
  %v120 = vpop.xlane.xlu0 %119
  %v121 = vsel %vm108, %v64, 0.0
  %122 = vadd.xlane.f32.xlu0 %v121
  %v123 = vpop.xlane.xlu0 %122
  %v124 = vsel %vm108, %v65, 0.0
  %125 = vadd.xlane.f32.xlu0 %v124
  %v126 = vpop.xlane.xlu0 %125
  %v127 = vrcp.pop 32.0
  %v128 = vmul.f32 %v111, %v127
  %v129 = vmul.f32 %v114, %v127
  %v130 = vmul.f32 %v117, %v127
  %v131 = vmul.f32 %v120, %v127
  %v132 = vmul.f32 %v123, %v127
  %v133 = vmul.f32 %v126, %v127
  %v134 = vsub.f32 %v60, %v128
  %v135 = vsub.f32 %v61, %v129
  %v136 = vsub.f32 %v62, %v130
  %v137 = vsub.f32 %v63, %v131
  %v138 = vsub.f32 %v64, %v132
  %v139 = vsub.f32 %v65, %v133
  %v140 = vmul.f32 %v134, %v134
  %v141 = vmul.f32 %v135, %v135
  %v142 = vmul.f32 %v136, %v136
  %v143 = vmul.f32 %v137, %v137
  %v144 = vmul.f32 %v138, %v138
  %v145 = vmul.f32 %v139, %v139
  %v146 = vsel %vm108, %v140, 0.0
  %147 = vadd.xlane.f32.xlu0 %v146
  %v148 = vpop.xlane.xlu0 %147
  %v149 = vsel %vm108, %v141, 0.0
  %150 = vadd.xlane.f32.xlu0 %v149
  %v151 = vpop.xlane.xlu0 %150
  %v152 = vsel %vm108, %v142, 0.0
  %153 = vadd.xlane.f32.xlu0 %v152
  %v154 = vpop.xlane.xlu0 %153
  %v155 = vsel %vm108, %v143, 0.0
  %156 = vadd.xlane.f32.xlu0 %v155
  %v157 = vpop.xlane.xlu0 %156
  %v158 = vsel %vm108, %v144, 0.0
  %159 = vadd.xlane.f32.xlu0 %v158
  %v160 = vpop.xlane.xlu0 %159
  %v161 = vsel %vm108, %v145, 0.0
  %162 = vadd.xlane.f32.xlu0 %v161
  %v163 = vpop.xlane.xlu0 %162
  %v164 = vmul.f32 %v148, %v127
  %v165 = vmul.f32 %v151, %v127
  %v166 = vmul.f32 %v154, %v127
  %v167 = vmul.f32 %v157, %v127
  %v168 = vmul.f32 %v160, %v127
  %v169 = vmul.f32 %v163, %v127
  %v170 = vadd.f32 %v164, 1e-05
  %v171 = vadd.f32 %v165, 1e-05
  %v172 = vadd.f32 %v166, 1e-05
  %v173 = vadd.f32 %v167, 1e-05
  %v174 = vadd.f32 %v168, 1e-05
  %v175 = vadd.f32 %v169, 1e-05
  %v176 = vrsqrt.pop %v170
  %v177 = vrsqrt.pop %v171
  %v178 = vrsqrt.pop %v172
  %v179 = vrsqrt.pop %v173
  %v180 = vrsqrt.pop %v174
  %v181 = vrsqrt.pop %v175
  %v182 = vmul.f32 %v134, %v176
  %v183 = vmul.f32 %v135, %v177
  %v184 = vmul.f32 %v136, %v178
  %v185 = vmul.f32 %v137, %v179
  %v186 = vmul.f32 %v138, %v180
  %v187 = vmul.f32 %v139, %v181
  %v189 = vlaneseq
  %v190 = vshrl.u32 %v189, 7
  %v191 = vsub.s32 0, %v190
  %v192 = vrot.slane %v72, %v191
  %v194 = vmul.f32 %v182, %v192
  %v195 = vmul.f32 %v183, %v192
  %v196 = vmul.f32 %v184, %v192
  %v197 = vmul.f32 %v185, %v192
  %v198 = vmul.f32 %v186, %v192
  %v199 = vmul.f32 %v187, %v192
  %v201 = vlaneseq
  %v202 = vshrl.u32 %v201, 7
  %v203 = vsub.s32 0, %v202
  %v204 = vrot.slane %v73, %v203
  %v206 = vadd.f32 %v194, %v204
  %v207 = vadd.f32 %v195, %v204
  %v208 = vadd.f32 %v196, %v204
  %v209 = vadd.f32 %v197, %v204
  %v210 = vadd.f32 %v198, %v204
  %v211 = vadd.f32 %v199, %v204
  %v212 = vpack.c.bf16 %v207, %v206
  %v213 = vpack.c.bf16 %v209, %v208
  %v214 = vpack.c.bf16 %v211, %v210
  %v216 = vlaneseq
  %v217 = vshrl.u32 %v216, 7
  %v218 = vsub.s32 0, %v217
  %v219 = vrot.slane %v78, %v218
  %v225 = vunpack.c.l.b16 %v74
  %v226 = vunpack.c.l.b16 %v75
  %v227 = vunpack.c.l.b16 %v76
  %v228 = vunpack.c.l.b16 %v77
  %v229 = vpack.c.b16 %v226, %v225
  %v230 = vpack.c.b16 %v228, %v227
  %v234 = vsel %vm108, %v212, 0
  %v237 = vsel %vm108, %v213, 0
  %v240 = vsel %vm108, %v214, 0
  %242 = vmatprep.subr.bf16.mxu0 0
  %243 = vmatpush1.bf16.msra.mxu0 %v229
  %244 = vmatprep.subr.bf16.mxu0 0
  %245 = vmatpush1.bf16.msra.mxu0 %v230
  %246 = vmatprep.subr.bf16.mxu0 0
  %247 = vmatpush1.bf16.msra.mxu0 0
  %248 = vmatprep.subr.bf16.mxu0 0
  %249 = vmatpush1.bf16.msra.mxu0 0
  %250 = vmatprep.subr.bf16.mxu0 0
  %251 = vmatpush1.bf16.msra.mxu0 0
  %252 = vmatprep.subr.bf16.mxu0 0
  %253 = vmatpush1.bf16.msra.mxu0 0
  %254 = vmatprep.subr.bf16.mxu0 0
  %255 = vmatpush1.bf16.msra.mxu0 0
  %256 = vmatprep.subr.bf16.mxu0 0
  %257 = vmatpush1.bf16.msra.mxu0 0
  %258 = vmatprep.subr.bf16.mxu0 0
  %259 = vmatpush1.bf16.msra.mxu0 0
  %260 = vmatprep.subr.bf16.mxu0 0
  %261 = vmatpush1.bf16.msra.mxu0 0
  %262 = vmatprep.subr.bf16.mxu0 0
  %263 = vmatpush1.bf16.msra.mxu0 0
  %264 = vmatprep.subr.bf16.mxu0 0
  %265 = vmatpush1.bf16.msra.mxu0 0
  %266 = vmatprep.subr.bf16.mxu0 0
  %267 = vmatpush1.bf16.msra.mxu0 0
  %268 = vmatprep.subr.bf16.mxu0 0
  %269 = vmatpush1.bf16.msra.mxu0 0
  %270 = vmatprep.subr.bf16.mxu0 0
  %271 = vmatpush1.bf16.msra.mxu0 0
  %272 = vmatprep.subr.bf16.mxu0 0
  %273 = vmatpush1.bf16.msra.mxu0 0
  %274 = vmatprep.mubr.bf16.mxu0 0
  %275 = vmatmul.mubr.bf16.gmra.mrb[0].mxu0 %v234
  %v276 = vpop.f32.mrb[0].mxu0
  %v277 = vadd.f32 %v219, %v276
  %v278 = vpop.f32.mrb[0].mxu0
  %v279 = vpop.f32.mrb[0].mxu0
  %v280 = vadd.f32 %v219, %v279
  %v281 = vpop.f32.mrb[0].mxu0
  %282 = vmatprep.mubr.bf16.mxu0 0
  %283 = vmatmul.mubr.bf16.gmra.mrb[0].mxu0 %v237
  %v284 = vpop.f32.mrb[0].mxu0
  %v285 = vadd.f32 %v219, %v284
  %v286 = vpop.f32.mrb[0].mxu0
  %v287 = vpop.f32.mrb[0].mxu0
  %v288 = vadd.f32 %v219, %v287
  %v289 = vpop.f32.mrb[0].mxu0
  %290 = vmatprep.mubr.bf16.mxu0 0
  %291 = vmatmul.mubr.bf16.gmra.mrb[0].mxu0 %v240
  %v292 = vpop.f32.mrb[0].mxu0
  %v293 = vadd.f32 %v219, %v292
  %v294 = vpop.f32.mrb[0].mxu0
  %v295 = vpop.f32.mrb[0].mxu0
  %v296 = vadd.f32 %v219, %v295
  %v297 = vpop.f32.mrb[0].mxu0
  %298 = vdwg.mxu0
  %v299 = vpack.c.bf16 %v280, %v277
  %v300 = vpack.c.bf16 %v288, %v285
  %v301 = vpack.c.bf16 %v296, %v293
  %305 = vrot.lane.b32.xlu0 %v299, 96
  %v306 = vpop.permute.xlu0 %305
  %307 = vrot.lane.b32.xlu0 %v300, 96
  %v308 = vpop.permute.xlu0 %307
  %309 = vrot.lane.b32.xlu0 %v301, 96
  %v310 = vpop.permute.xlu0 %309
  %vm311 = vcmask 130048
  %v313 = vsel %vm311, %v299, 0
  %v316 = vsel %vm311, %v300, 0
  %v319 = vsel %vm311, %v301, 0
  %v322 = vsel %vm311, %v306, 0
  %v325 = vsel %vm311, %v308, 0
  %v328 = vsel %vm311, %v310, 0
  %330 = vmatprep.subr.bf16.mxu0 0
  %331 = vmatpush1.bf16.xpose.msra.mxu0 %v322
  %332 = vmatprep.subr.bf16.mxu0 0
  %333 = vmatpush1.bf16.xpose.msra.mxu0 %v325
  %334 = vmatprep.subr.bf16.mxu0 0
  %335 = vmatpush1.bf16.xpose.msra.mxu0 %v328
  %336 = vmatprep.subr.bf16.mxu0 0
  %337 = vmatpush1.bf16.xpose.msra.mxu0 0
  %338 = vmatprep.subr.bf16.mxu0 0
  %339 = vmatpush1.bf16.xpose.msra.mxu0 0
  %340 = vmatprep.subr.bf16.mxu0 0
  %341 = vmatpush1.bf16.xpose.msra.mxu0 0
  %342 = vmatprep.subr.bf16.mxu0 0
  %343 = vmatpush1.bf16.xpose.msra.mxu0 0
  %344 = vmatprep.subr.bf16.mxu0 0
  %345 = vmatpush1.bf16.xpose.msra.mxu0 0
  %346 = vmatprep.subr.bf16.mxu0 0
  %347 = vmatpush1.bf16.xpose.msra.mxu0 0
  %348 = vmatprep.subr.bf16.mxu0 0
  %349 = vmatpush1.bf16.xpose.msra.mxu0 0
  %350 = vmatprep.subr.bf16.mxu0 0
  %351 = vmatpush1.bf16.xpose.msra.mxu0 0
  %352 = vmatprep.subr.bf16.mxu0 0
  %353 = vmatpush1.bf16.xpose.msra.mxu0 0
  %354 = vmatprep.subr.bf16.mxu0 0
  %355 = vmatpush1.bf16.xpose.msra.mxu0 0
  %356 = vmatprep.subr.bf16.mxu0 0
  %357 = vmatpush1.bf16.xpose.msra.mxu0 0
  %358 = vmatprep.subr.bf16.mxu0 0
  %359 = vmatpush1.bf16.xpose.msra.mxu0 0
  %360 = vmatprep.subr.bf16.mxu0 0
  %361 = vmatpush1.bf16.xpose.msra.mxu0 0
  %362 = vmatprep.mubr.bf16.mxu0 0
  %363 = vmatmul.mubr.bf16.gmra.mrb[0].mxu0 %v313
  %v364 = vpop.f32.mrb[0].mxu0
  %v365 = vadd.f32 0.0, %v364
  %v366 = vpop.f32.mrb[0].mxu0
  %v367 = vpop.f32.mrb[0].mxu0
  %v368 = vadd.f32 0.0, %v367
  %v369 = vpop.f32.mrb[0].mxu0
  %370 = vmatprep.mubr.bf16.mxu0 0
  %371 = vmatmul.mubr.bf16.gmra.mrb[0].mxu0 %v316
  %v372 = vpop.f32.mrb[0].mxu0
  %v373 = vadd.f32 0.0, %v372
  %v374 = vpop.f32.mrb[0].mxu0
  %v375 = vpop.f32.mrb[0].mxu0
  %v376 = vadd.f32 0.0, %v375
  %v377 = vpop.f32.mrb[0].mxu0
  %378 = vmatprep.mubr.bf16.mxu0 0
  %379 = vmatmul.mubr.bf16.gmra.mrb[0].mxu0 %v319
  %v380 = vpop.f32.mrb[0].mxu0
  %v381 = vadd.f32 0.0, %v380
  %v382 = vpop.f32.mrb[0].mxu0
  %v383 = vpop.f32.mrb[0].mxu0
  %v384 = vadd.f32 0.0, %v383
  %v385 = vpop.f32.mrb[0].mxu0
  %386 = vdwg.mxu0
  %v387 = vmul.f32 %v365, 0.25
  %v388 = vmul.f32 %v368, 0.25
  %v389 = vmul.f32 %v373, 0.25
  %v390 = vmul.f32 %v376, 0.25
  %v391 = vmul.f32 %v381, 0.25
  %v392 = vmul.f32 %v384, 0.25
  %v393 = vadd.f32 %v387, %v66
  %v394 = vadd.f32 %v388, %v67
  %v395 = vadd.f32 %v389, %v68
  %v396 = vadd.f32 %v390, %v69
  %v397 = vadd.f32 %v391, %v70
  %v398 = vadd.f32 %v392, %v71
  %vm399 = vcmask 392192
  %v400 = vsel %vm399, %v393, -inf
  %401 = vmax.xlane.f32.xlu0 %v400
  %v402 = vpop.xlane.xlu0 %401
  %v403 = vsel %vm399, %v394, -inf
  %404 = vmax.xlane.f32.xlu0 %v403
  %v405 = vpop.xlane.xlu0 %404
  %v406 = vsel %vm399, %v395, -inf
  %407 = vmax.xlane.f32.xlu0 %v406
  %v408 = vpop.xlane.xlu0 %407
  %v409 = vsel %vm399, %v396, -inf
  %410 = vmax.xlane.f32.xlu0 %v409
  %v411 = vpop.xlane.xlu0 %410
  %v412 = vsel %vm399, %v397, -inf
  %413 = vmax.xlane.f32.xlu0 %v412
  %v414 = vpop.xlane.xlu0 %413
  %v415 = vsel %vm399, %v398, -inf
  %416 = vmax.xlane.f32.xlu0 %v415
  %v417 = vpop.xlane.xlu0 %416
  %v418 = vsub.f32 %v393, %v402
  %v419 = vsub.f32 %v394, %v405
  %v420 = vsub.f32 %v395, %v408
  %v421 = vsub.f32 %v396, %v411
  %v422 = vsub.f32 %v397, %v414
  %v423 = vsub.f32 %v398, %v417
  %v424 = vmul.f32 %v418, 1.442695
  %v425 = vpow.pop %v424
  %v426 = vmul.f32 %v419, 1.442695
  %v427 = vpow.pop %v426
  %v428 = vmul.f32 %v420, 1.442695
  %v429 = vpow.pop %v428
  %v430 = vmul.f32 %v421, 1.442695
  %v431 = vpow.pop %v430
  %v432 = vmul.f32 %v422, 1.442695
  %v433 = vpow.pop %v432
  %v434 = vmul.f32 %v423, 1.442695
  %v435 = vpow.pop %v434
  %v436 = vsel %vm399, %v425, 0.0
  %437 = vadd.xlane.f32.xlu0 %v436
  %v438 = vpop.xlane.xlu0 %437
  %v439 = vsel %vm399, %v427, 0.0
  %440 = vadd.xlane.f32.xlu0 %v439
  %v441 = vpop.xlane.xlu0 %440
  %v442 = vsel %vm399, %v429, 0.0
  %443 = vadd.xlane.f32.xlu0 %v442
  %v444 = vpop.xlane.xlu0 %443
  %v445 = vsel %vm399, %v431, 0.0
  %446 = vadd.xlane.f32.xlu0 %v445
  %v447 = vpop.xlane.xlu0 %446
  %v448 = vsel %vm399, %v433, 0.0
  %449 = vadd.xlane.f32.xlu0 %v448
  %v450 = vpop.xlane.xlu0 %449
  %v451 = vsel %vm399, %v435, 0.0
  %452 = vadd.xlane.f32.xlu0 %v451
  %v453 = vpop.xlane.xlu0 %452
  %v454 = vrcp.pop %v438
  %v455 = vrcp.pop %v441
  %v456 = vrcp.pop %v444
  %v457 = vrcp.pop %v447
  %v458 = vrcp.pop %v450
  %v459 = vrcp.pop %v453
  %v460 = vmul.f32 %v425, %v454
  %v461 = vmul.f32 %v427, %v455
  %v462 = vmul.f32 %v429, %v456
  %v463 = vmul.f32 %v431, %v457
  %v464 = vmul.f32 %v433, %v458
  %v465 = vmul.f32 %v435, %v459
  %v466 = vpack.c.bf16 %v461, %v460
  %v467 = vpack.c.bf16 %v463, %v462
  %v468 = vpack.c.bf16 %v465, %v464
  %469 = vrot.lane.b32.xlu0 %v299, 64
  %v470 = vpop.permute.xlu0 %469
  %471 = vrot.lane.b32.xlu0 %v300, 64
  %v472 = vpop.permute.xlu0 %471
  %473 = vrot.lane.b32.xlu0 %v301, 64
  %v474 = vpop.permute.xlu0 %473
  %v479 = vsel %vm399, %v466, 0
  %v482 = vsel %vm399, %v467, 0
  %v485 = vsel %vm399, %v468, 0
  %487 = vmatprep.subr.bf16.mxu0 0
  %488 = vmatpush1.bf16.msra.mxu0 %v470
  %489 = vmatprep.subr.bf16.mxu0 0
  %490 = vmatpush1.bf16.msra.mxu0 %v472
  %491 = vmatprep.subr.bf16.mxu0 0
  %492 = vmatpush1.bf16.msra.mxu0 %v474
  %493 = vmatprep.subr.bf16.mxu0 0
  %494 = vmatpush1.bf16.msra.mxu0 0
  %495 = vmatprep.subr.bf16.mxu0 0
  %496 = vmatpush1.bf16.msra.mxu0 0
  %497 = vmatprep.subr.bf16.mxu0 0
  %498 = vmatpush1.bf16.msra.mxu0 0
  %499 = vmatprep.subr.bf16.mxu0 0
  %500 = vmatpush1.bf16.msra.mxu0 0
  %501 = vmatprep.subr.bf16.mxu0 0
  %502 = vmatpush1.bf16.msra.mxu0 0
  %503 = vmatprep.subr.bf16.mxu0 0
  %504 = vmatpush1.bf16.msra.mxu0 0
  %505 = vmatprep.subr.bf16.mxu0 0
  %506 = vmatpush1.bf16.msra.mxu0 0
  %507 = vmatprep.subr.bf16.mxu0 0
  %508 = vmatpush1.bf16.msra.mxu0 0
  %509 = vmatprep.subr.bf16.mxu0 0
  %510 = vmatpush1.bf16.msra.mxu0 0
  %511 = vmatprep.subr.bf16.mxu0 0
  %512 = vmatpush1.bf16.msra.mxu0 0
  %513 = vmatprep.subr.bf16.mxu0 0
  %514 = vmatpush1.bf16.msra.mxu0 0
  %515 = vmatprep.subr.bf16.mxu0 0
  %516 = vmatpush1.bf16.msra.mxu0 0
  %517 = vmatprep.subr.bf16.mxu0 0
  %518 = vmatpush1.bf16.msra.mxu0 0
  %519 = vmatprep.mubr.bf16.mxu0 0
  %520 = vmatmul.mubr.bf16.gmra.mrb[0].mxu0 %v479
  %v521 = vpop.f32.mrb[0].mxu0
  %v522 = vadd.f32 0.0, %v521
  %v523 = vpop.f32.mrb[0].mxu0
  %v524 = vpop.f32.mrb[0].mxu0
  %v525 = vadd.f32 0.0, %v524
  %v526 = vpop.f32.mrb[0].mxu0
  %527 = vmatprep.mubr.bf16.mxu0 0
  %528 = vmatmul.mubr.bf16.gmra.mrb[0].mxu0 %v482
  %v529 = vpop.f32.mrb[0].mxu0
  %v530 = vadd.f32 0.0, %v529
  %v531 = vpop.f32.mrb[0].mxu0
  %v532 = vpop.f32.mrb[0].mxu0
  %v533 = vadd.f32 0.0, %v532
  %v534 = vpop.f32.mrb[0].mxu0
  %535 = vmatprep.mubr.bf16.mxu0 0
  %536 = vmatmul.mubr.bf16.gmra.mrb[0].mxu0 %v485
  %v537 = vpop.f32.mrb[0].mxu0
  %v538 = vadd.f32 0.0, %v537
  %v539 = vpop.f32.mrb[0].mxu0
  %v540 = vpop.f32.mrb[0].mxu0
  %v541 = vadd.f32 0.0, %v540
  %v542 = vpop.f32.mrb[0].mxu0
  %543 = vdwg.mxu0
  %v544 = vpack.c.bf16 %v525, %v522
  %v545 = vpack.c.bf16 %v533, %v530
  %v546 = vpack.c.bf16 %v541, %v538
  %547 = vrot.lane.b32.xlu0 %v299, 112
  %v548 = vpop.permute.xlu0 %547
  %549 = vrot.lane.b32.xlu0 %v300, 112
  %v550 = vpop.permute.xlu0 %549
  %551 = vrot.lane.b32.xlu0 %v301, 112
  %v552 = vpop.permute.xlu0 %551
  %553 = vrot.lane.b32.xlu0 %v299, 80
  %v554 = vpop.permute.xlu0 %553
  %555 = vrot.lane.b32.xlu0 %v300, 80
  %v556 = vpop.permute.xlu0 %555
  %557 = vrot.lane.b32.xlu0 %v301, 80
  %v558 = vpop.permute.xlu0 %557
  %v560 = vsel %vm311, %v548, 0
  %v563 = vsel %vm311, %v550, 0
  %v566 = vsel %vm311, %v552, 0
  %v569 = vsel %vm311, %v554, 0
  %v572 = vsel %vm311, %v556, 0
  %v575 = vsel %vm311, %v558, 0
  %577 = vmatprep.subr.bf16.mxu0 0
  %578 = vmatpush1.bf16.xpose.msra.mxu0 %v569
  %579 = vmatprep.subr.bf16.mxu0 0
  %580 = vmatpush1.bf16.xpose.msra.mxu0 %v572
  %581 = vmatprep.subr.bf16.mxu0 0
  %582 = vmatpush1.bf16.xpose.msra.mxu0 %v575
  %583 = vmatprep.subr.bf16.mxu0 0
  %584 = vmatpush1.bf16.xpose.msra.mxu0 0
  %585 = vmatprep.subr.bf16.mxu0 0
  %586 = vmatpush1.bf16.xpose.msra.mxu0 0
  %587 = vmatprep.subr.bf16.mxu0 0
  %588 = vmatpush1.bf16.xpose.msra.mxu0 0
  %589 = vmatprep.subr.bf16.mxu0 0
  %590 = vmatpush1.bf16.xpose.msra.mxu0 0
  %591 = vmatprep.subr.bf16.mxu0 0
  %592 = vmatpush1.bf16.xpose.msra.mxu0 0
  %593 = vmatprep.subr.bf16.mxu0 0
  %594 = vmatpush1.bf16.xpose.msra.mxu0 0
  %595 = vmatprep.subr.bf16.mxu0 0
  %596 = vmatpush1.bf16.xpose.msra.mxu0 0
  %597 = vmatprep.subr.bf16.mxu0 0
  %598 = vmatpush1.bf16.xpose.msra.mxu0 0
  %599 = vmatprep.subr.bf16.mxu0 0
  %600 = vmatpush1.bf16.xpose.msra.mxu0 0
  %601 = vmatprep.subr.bf16.mxu0 0
  %602 = vmatpush1.bf16.xpose.msra.mxu0 0
  %603 = vmatprep.subr.bf16.mxu0 0
  %604 = vmatpush1.bf16.xpose.msra.mxu0 0
  %605 = vmatprep.subr.bf16.mxu0 0
  %606 = vmatpush1.bf16.xpose.msra.mxu0 0
  %607 = vmatprep.subr.bf16.mxu0 0
  %608 = vmatpush1.bf16.xpose.msra.mxu0 0
  %609 = vmatprep.mubr.bf16.mxu0 0
  %610 = vmatmul.mubr.bf16.gmra.mrb[0].mxu0 %v560
  %v611 = vpop.f32.mrb[0].mxu0
  %v612 = vadd.f32 0.0, %v611
  %v613 = vpop.f32.mrb[0].mxu0
  %v614 = vpop.f32.mrb[0].mxu0
  %v615 = vadd.f32 0.0, %v614
  %v616 = vpop.f32.mrb[0].mxu0
  %617 = vmatprep.mubr.bf16.mxu0 0
  %618 = vmatmul.mubr.bf16.gmra.mrb[0].mxu0 %v563
  %v619 = vpop.f32.mrb[0].mxu0
  %v620 = vadd.f32 0.0, %v619
  %v621 = vpop.f32.mrb[0].mxu0
  %v622 = vpop.f32.mrb[0].mxu0
  %v623 = vadd.f32 0.0, %v622
  %v624 = vpop.f32.mrb[0].mxu0
  %625 = vmatprep.mubr.bf16.mxu0 0
  %626 = vmatmul.mubr.bf16.gmra.mrb[0].mxu0 %v566
  %v627 = vpop.f32.mrb[0].mxu0
  %v628 = vadd.f32 0.0, %v627
  %v629 = vpop.f32.mrb[0].mxu0
  %v630 = vpop.f32.mrb[0].mxu0
  %v631 = vadd.f32 0.0, %v630
  %v632 = vpop.f32.mrb[0].mxu0
  %633 = vdwg.mxu0
  %v634 = vmul.f32 %v612, 0.25
  %v635 = vmul.f32 %v615, 0.25
  %v636 = vmul.f32 %v620, 0.25
  %v637 = vmul.f32 %v623, 0.25
  %v638 = vmul.f32 %v628, 0.25
  %v639 = vmul.f32 %v631, 0.25
  %v640 = vadd.f32 %v634, %v66
  %v641 = vadd.f32 %v635, %v67
  %v642 = vadd.f32 %v636, %v68
  %v643 = vadd.f32 %v637, %v69
  %v644 = vadd.f32 %v638, %v70
  %v645 = vadd.f32 %v639, %v71
  %v646 = vsel %vm399, %v640, -inf
  %647 = vmax.xlane.f32.xlu0 %v646
  %v648 = vpop.xlane.xlu0 %647
  %v649 = vsel %vm399, %v641, -inf
  %650 = vmax.xlane.f32.xlu0 %v649
  %v651 = vpop.xlane.xlu0 %650
  %v652 = vsel %vm399, %v642, -inf
  %653 = vmax.xlane.f32.xlu0 %v652
  %v654 = vpop.xlane.xlu0 %653
  %v655 = vsel %vm399, %v643, -inf
  %656 = vmax.xlane.f32.xlu0 %v655
  %v657 = vpop.xlane.xlu0 %656
  %v658 = vsel %vm399, %v644, -inf
  %659 = vmax.xlane.f32.xlu0 %v658
  %v660 = vpop.xlane.xlu0 %659
  %v661 = vsel %vm399, %v645, -inf
  %662 = vmax.xlane.f32.xlu0 %v661
  %v663 = vpop.xlane.xlu0 %662
  %v664 = vsub.f32 %v640, %v648
  %v665 = vsub.f32 %v641, %v651
  %v666 = vsub.f32 %v642, %v654
  %v667 = vsub.f32 %v643, %v657
  %v668 = vsub.f32 %v644, %v660
  %v669 = vsub.f32 %v645, %v663
  %v670 = vmul.f32 %v664, 1.442695
  %v671 = vpow.pop %v670
  %v672 = vmul.f32 %v665, 1.442695
  %v673 = vpow.pop %v672
  %v674 = vmul.f32 %v666, 1.442695
  %v675 = vpow.pop %v674
  %v676 = vmul.f32 %v667, 1.442695
  %v677 = vpow.pop %v676
  %v678 = vmul.f32 %v668, 1.442695
  %v679 = vpow.pop %v678
  %v680 = vmul.f32 %v669, 1.442695
  %v681 = vpow.pop %v680
  %v682 = vsel %vm399, %v671, 0.0
  %683 = vadd.xlane.f32.xlu0 %v682
  %v684 = vpop.xlane.xlu0 %683
  %v685 = vsel %vm399, %v673, 0.0
  %686 = vadd.xlane.f32.xlu0 %v685
  %v687 = vpop.xlane.xlu0 %686
  %v688 = vsel %vm399, %v675, 0.0
  %689 = vadd.xlane.f32.xlu0 %v688
  %v690 = vpop.xlane.xlu0 %689
  %v691 = vsel %vm399, %v677, 0.0
  %692 = vadd.xlane.f32.xlu0 %v691
  %v693 = vpop.xlane.xlu0 %692
  %v694 = vsel %vm399, %v679, 0.0
  %695 = vadd.xlane.f32.xlu0 %v694
  %v696 = vpop.xlane.xlu0 %695
  %v697 = vsel %vm399, %v681, 0.0
  %698 = vadd.xlane.f32.xlu0 %v697
  %v699 = vpop.xlane.xlu0 %698
  %v700 = vrcp.pop %v684
  %v701 = vrcp.pop %v687
  %v702 = vrcp.pop %v690
  %v703 = vrcp.pop %v693
  %v704 = vrcp.pop %v696
  %v705 = vrcp.pop %v699
  %v706 = vmul.f32 %v671, %v700
  %v707 = vmul.f32 %v673, %v701
  %v708 = vmul.f32 %v675, %v702
  %v709 = vmul.f32 %v677, %v703
  %v710 = vmul.f32 %v679, %v704
  %v711 = vmul.f32 %v681, %v705
  %v712 = vpack.c.bf16 %v707, %v706
  %v713 = vpack.c.bf16 %v709, %v708
  %v714 = vpack.c.bf16 %v711, %v710
  %715 = vrot.lane.b32.xlu0 %v299, 48
  %v716 = vpop.permute.xlu0 %715
  %717 = vrot.lane.b32.xlu0 %v300, 48
  %v718 = vpop.permute.xlu0 %717
  %719 = vrot.lane.b32.xlu0 %v301, 48
  %v720 = vpop.permute.xlu0 %719
  %v725 = vsel %vm399, %v712, 0
  %v728 = vsel %vm399, %v713, 0
  %v731 = vsel %vm399, %v714, 0
  %733 = vmatprep.subr.bf16.mxu0 0
  %734 = vmatpush1.bf16.msra.mxu0 %v716
  %735 = vmatprep.subr.bf16.mxu0 0
  %736 = vmatpush1.bf16.msra.mxu0 %v718
  %737 = vmatprep.subr.bf16.mxu0 0
  %738 = vmatpush1.bf16.msra.mxu0 %v720
  %739 = vmatprep.subr.bf16.mxu0 0
  %740 = vmatpush1.bf16.msra.mxu0 0
  %741 = vmatprep.subr.bf16.mxu0 0
  %742 = vmatpush1.bf16.msra.mxu0 0
  %743 = vmatprep.subr.bf16.mxu0 0
  %744 = vmatpush1.bf16.msra.mxu0 0
  %745 = vmatprep.subr.bf16.mxu0 0
  %746 = vmatpush1.bf16.msra.mxu0 0
  %747 = vmatprep.subr.bf16.mxu0 0
  %748 = vmatpush1.bf16.msra.mxu0 0
  %749 = vmatprep.subr.bf16.mxu0 0
  %750 = vmatpush1.bf16.msra.mxu0 0
  %751 = vmatprep.subr.bf16.mxu0 0
  %752 = vmatpush1.bf16.msra.mxu0 0
  %753 = vmatprep.subr.bf16.mxu0 0
  %754 = vmatpush1.bf16.msra.mxu0 0
  %755 = vmatprep.subr.bf16.mxu0 0
  %756 = vmatpush1.bf16.msra.mxu0 0
  %757 = vmatprep.subr.bf16.mxu0 0
  %758 = vmatpush1.bf16.msra.mxu0 0
  %759 = vmatprep.subr.bf16.mxu0 0
  %760 = vmatpush1.bf16.msra.mxu0 0
  %761 = vmatprep.subr.bf16.mxu0 0
  %762 = vmatpush1.bf16.msra.mxu0 0
  %763 = vmatprep.subr.bf16.mxu0 0
  %764 = vmatpush1.bf16.msra.mxu0 0
  %765 = vmatprep.mubr.bf16.mxu0 0
  %766 = vmatmul.mubr.bf16.gmra.mrb[0].mxu0 %v725
  %v767 = vpop.f32.mrb[0].mxu0
  %v768 = vadd.f32 0.0, %v767
  %v769 = vpop.f32.mrb[0].mxu0
  %v770 = vpop.f32.mrb[0].mxu0
  %v771 = vadd.f32 0.0, %v770
  %v772 = vpop.f32.mrb[0].mxu0
  %773 = vmatprep.mubr.bf16.mxu0 0
  %774 = vmatmul.mubr.bf16.gmra.mrb[0].mxu0 %v728
  %v775 = vpop.f32.mrb[0].mxu0
  %v776 = vadd.f32 0.0, %v775
  %v777 = vpop.f32.mrb[0].mxu0
  %v778 = vpop.f32.mrb[0].mxu0
  %v779 = vadd.f32 0.0, %v778
  %v780 = vpop.f32.mrb[0].mxu0
  %781 = vmatprep.mubr.bf16.mxu0 0
  %782 = vmatmul.mubr.bf16.gmra.mrb[0].mxu0 %v731
  %v783 = vpop.f32.mrb[0].mxu0
  %v784 = vadd.f32 0.0, %v783
  %v785 = vpop.f32.mrb[0].mxu0
  %v786 = vpop.f32.mrb[0].mxu0
  %v787 = vadd.f32 0.0, %v786
  %v788 = vpop.f32.mrb[0].mxu0
  %789 = vdwg.mxu0
  %v790 = vpack.c.bf16 %v771, %v768
  %v791 = vpack.c.bf16 %v779, %v776
  %v792 = vpack.c.bf16 %v787, %v784
  %v795 = vunpack.c.l.b16 %v81
  %v796 = vunpack.c.l.b16 %v82
  %v797 = vpack.c.b16 %v796, %v795
  %v800 = vsel %vm311, %v790, 0
  %v803 = vsel %vm311, %v791, 0
  %v806 = vsel %vm311, %v792, 0
  %808 = vmatprep.subr.bf16.mxu0 0
  %809 = vmatpush1.bf16.msra.mxu0 %v797
  %810 = vmatprep.subr.bf16.mxu0 0
  %811 = vmatpush1.bf16.msra.mxu0 0
  %812 = vmatprep.subr.bf16.mxu0 0
  %813 = vmatpush1.bf16.msra.mxu0 0
  %814 = vmatprep.subr.bf16.mxu0 0
  %815 = vmatpush1.bf16.msra.mxu0 0
  %816 = vmatprep.subr.bf16.mxu0 0
  %817 = vmatpush1.bf16.msra.mxu0 0
  %818 = vmatprep.subr.bf16.mxu0 0
  %819 = vmatpush1.bf16.msra.mxu0 0
  %820 = vmatprep.subr.bf16.mxu0 0
  %821 = vmatpush1.bf16.msra.mxu0 0
  %822 = vmatprep.subr.bf16.mxu0 0
  %823 = vmatpush1.bf16.msra.mxu0 0
  %824 = vmatprep.subr.bf16.mxu0 0
  %825 = vmatpush1.bf16.msra.mxu0 0
  %826 = vmatprep.subr.bf16.mxu0 0
  %827 = vmatpush1.bf16.msra.mxu0 0
  %828 = vmatprep.subr.bf16.mxu0 0
  %829 = vmatpush1.bf16.msra.mxu0 0
  %830 = vmatprep.subr.bf16.mxu0 0
  %831 = vmatpush1.bf16.msra.mxu0 0
  %832 = vmatprep.subr.bf16.mxu0 0
  %833 = vmatpush1.bf16.msra.mxu0 0
  %834 = vmatprep.subr.bf16.mxu0 0
  %835 = vmatpush1.bf16.msra.mxu0 0
  %836 = vmatprep.subr.bf16.mxu0 0
  %837 = vmatpush1.bf16.msra.mxu0 0
  %838 = vmatprep.subr.bf16.mxu0 0
  %839 = vmatpush1.bf16.msra.mxu0 0
  %840 = vmatprep.mubr.bf16.mxu0 0
  %841 = vmatmul.mubr.bf16.gmra.mrb[0].mxu0 %v800
  %v842 = vpop.f32.mrb[0].mxu0
  %v843 = vadd.f32 0.0, %v842
  %v844 = vpop.f32.mrb[0].mxu0
  %v845 = vpop.f32.mrb[0].mxu0
  %v846 = vadd.f32 0.0, %v845
  %v847 = vpop.f32.mrb[0].mxu0
  %848 = vmatprep.mubr.bf16.mxu0 0
  %849 = vmatmul.mubr.bf16.gmra.mrb[0].mxu0 %v803
  %v850 = vpop.f32.mrb[0].mxu0
  %v851 = vadd.f32 0.0, %v850
  %v852 = vpop.f32.mrb[0].mxu0
  %v853 = vpop.f32.mrb[0].mxu0
  %v854 = vadd.f32 0.0, %v853
  %v855 = vpop.f32.mrb[0].mxu0
  %856 = vmatprep.mubr.bf16.mxu0 0
  %857 = vmatmul.mubr.bf16.gmra.mrb[0].mxu0 %v806
  %v858 = vpop.f32.mrb[0].mxu0
  %v859 = vadd.f32 0.0, %v858
  %v860 = vpop.f32.mrb[0].mxu0
  %v861 = vpop.f32.mrb[0].mxu0
  %v862 = vadd.f32 0.0, %v861
  %v863 = vpop.f32.mrb[0].mxu0
  %864 = vdwg.mxu0
  %v867 = vunpack.c.l.b16 %v79
  %v868 = vunpack.c.l.b16 %v80
  %v869 = vpack.c.b16 %v868, %v867
  %v872 = vsel %vm311, %v544, 0
  %v875 = vsel %vm311, %v545, 0
  %v878 = vsel %vm311, %v546, 0
  %880 = vmatprep.subr.bf16.mxu0 0
  %881 = vmatpush1.bf16.msra.mxu0 %v869
  %882 = vmatprep.subr.bf16.mxu0 0
  %883 = vmatpush1.bf16.msra.mxu0 0
  %884 = vmatprep.subr.bf16.mxu0 0
  %885 = vmatpush1.bf16.msra.mxu0 0
  %886 = vmatprep.subr.bf16.mxu0 0
  %887 = vmatpush1.bf16.msra.mxu0 0
  %888 = vmatprep.subr.bf16.mxu0 0
  %889 = vmatpush1.bf16.msra.mxu0 0
  %890 = vmatprep.subr.bf16.mxu0 0
  %891 = vmatpush1.bf16.msra.mxu0 0
  %892 = vmatprep.subr.bf16.mxu0 0
  %893 = vmatpush1.bf16.msra.mxu0 0
  %894 = vmatprep.subr.bf16.mxu0 0
  %895 = vmatpush1.bf16.msra.mxu0 0
  %896 = vmatprep.subr.bf16.mxu0 0
  %897 = vmatpush1.bf16.msra.mxu0 0
  %898 = vmatprep.subr.bf16.mxu0 0
  %899 = vmatpush1.bf16.msra.mxu0 0
  %900 = vmatprep.subr.bf16.mxu0 0
  %901 = vmatpush1.bf16.msra.mxu0 0
  %902 = vmatprep.subr.bf16.mxu0 0
  %903 = vmatpush1.bf16.msra.mxu0 0
  %904 = vmatprep.subr.bf16.mxu0 0
  %905 = vmatpush1.bf16.msra.mxu0 0
  %906 = vmatprep.subr.bf16.mxu0 0
  %907 = vmatpush1.bf16.msra.mxu0 0
  %908 = vmatprep.subr.bf16.mxu0 0
  %909 = vmatpush1.bf16.msra.mxu0 0
  %910 = vmatprep.subr.bf16.mxu0 0
  %911 = vmatpush1.bf16.msra.mxu0 0
  %912 = vmatprep.mubr.bf16.mxu0 0
  %913 = vmatmul.mubr.bf16.gmra.mrb[0].mxu0 %v872
  %v914 = vpop.f32.mrb[0].mxu0
  %v915 = vadd.f32 %v843, %v914
  %v916 = vpop.f32.mrb[0].mxu0
  %v917 = vpop.f32.mrb[0].mxu0
  %v918 = vadd.f32 %v846, %v917
  %v919 = vpop.f32.mrb[0].mxu0
  %920 = vmatprep.mubr.bf16.mxu0 0
  %921 = vmatmul.mubr.bf16.gmra.mrb[0].mxu0 %v875
  %v922 = vpop.f32.mrb[0].mxu0
  %v923 = vadd.f32 %v851, %v922
  %v924 = vpop.f32.mrb[0].mxu0
  %v925 = vpop.f32.mrb[0].mxu0
  %v926 = vadd.f32 %v854, %v925
  %v927 = vpop.f32.mrb[0].mxu0
  %928 = vmatprep.mubr.bf16.mxu0 0
  %929 = vmatmul.mubr.bf16.gmra.mrb[0].mxu0 %v878
  %v930 = vpop.f32.mrb[0].mxu0
  %v931 = vadd.f32 %v859, %v930
  %v932 = vpop.f32.mrb[0].mxu0
  %v933 = vpop.f32.mrb[0].mxu0
  %v934 = vadd.f32 %v862, %v933
  %v935 = vpop.f32.mrb[0].mxu0
  %936 = vdwg.mxu0
  %v938 = vlaneseq
  %v939 = vshrl.u32 %v938, 7
  %v940 = vsub.s32 0, %v939
  %v941 = vrot.slane %v83, %v940
  %v943 = vadd.f32 %v915, %v941
  %v944 = vadd.f32 %v918, %v941
  %v945 = vadd.f32 %v923, %v941
  %v946 = vadd.f32 %v926, %v941
  %v947 = vadd.f32 %v931, %v941
  %v948 = vadd.f32 %v934, %v941
  %v949 = vadd.f32 %v60, %v943
  %v950 = vadd.f32 %v61, %v944
  %v951 = vadd.f32 %v62, %v945
  %v952 = vadd.f32 %v63, %v946
  %v953 = vadd.f32 %v64, %v947
  %v954 = vadd.f32 %v65, %v948
  %v955 = vsel %vm108, %v949, 0.0
  %956 = vadd.xlane.f32.xlu0 %v955
  %v957 = vpop.xlane.xlu0 %956
  %v958 = vsel %vm108, %v950, 0.0
  %959 = vadd.xlane.f32.xlu0 %v958
  %v960 = vpop.xlane.xlu0 %959
  %v961 = vsel %vm108, %v951, 0.0
  %962 = vadd.xlane.f32.xlu0 %v961
  %v963 = vpop.xlane.xlu0 %962
  %v964 = vsel %vm108, %v952, 0.0
  %965 = vadd.xlane.f32.xlu0 %v964
  %v966 = vpop.xlane.xlu0 %965
  %v967 = vsel %vm108, %v953, 0.0
  %968 = vadd.xlane.f32.xlu0 %v967
  %v969 = vpop.xlane.xlu0 %968
  %v970 = vsel %vm108, %v954, 0.0
  %971 = vadd.xlane.f32.xlu0 %v970
  %v972 = vpop.xlane.xlu0 %971
  %v973 = vmul.f32 %v957, %v127
  %v974 = vmul.f32 %v960, %v127
  %v975 = vmul.f32 %v963, %v127
  %v976 = vmul.f32 %v966, %v127
  %v977 = vmul.f32 %v969, %v127
  %v978 = vmul.f32 %v972, %v127
  %v979 = vsub.f32 %v949, %v973
  %v980 = vsub.f32 %v950, %v974
  %v981 = vsub.f32 %v951, %v975
  %v982 = vsub.f32 %v952, %v976
  %v983 = vsub.f32 %v953, %v977
  %v984 = vsub.f32 %v954, %v978
  %v985 = vmul.f32 %v979, %v979
  %v986 = vmul.f32 %v980, %v980
  %v987 = vmul.f32 %v981, %v981
  %v988 = vmul.f32 %v982, %v982
  %v989 = vmul.f32 %v983, %v983
  %v990 = vmul.f32 %v984, %v984
  %v991 = vsel %vm108, %v985, 0.0
  %992 = vadd.xlane.f32.xlu0 %v991
  %v993 = vpop.xlane.xlu0 %992
  %v994 = vsel %vm108, %v986, 0.0
  %995 = vadd.xlane.f32.xlu0 %v994
  %v996 = vpop.xlane.xlu0 %995
  %v997 = vsel %vm108, %v987, 0.0
  %998 = vadd.xlane.f32.xlu0 %v997
  %v999 = vpop.xlane.xlu0 %998
  %v1000 = vsel %vm108, %v988, 0.0
  %1001 = vadd.xlane.f32.xlu0 %v1000
  %v1002 = vpop.xlane.xlu0 %1001
  %v1003 = vsel %vm108, %v989, 0.0
  %1004 = vadd.xlane.f32.xlu0 %v1003
  %v1005 = vpop.xlane.xlu0 %1004
  %v1006 = vsel %vm108, %v990, 0.0
  %1007 = vadd.xlane.f32.xlu0 %v1006
  %v1008 = vpop.xlane.xlu0 %1007
  %v1009 = vmul.f32 %v993, %v127
  %v1010 = vmul.f32 %v996, %v127
  %v1011 = vmul.f32 %v999, %v127
  %v1012 = vmul.f32 %v1002, %v127
  %v1013 = vmul.f32 %v1005, %v127
  %v1014 = vmul.f32 %v1008, %v127
  %v1015 = vadd.f32 %v1009, 1e-05
  %v1016 = vadd.f32 %v1010, 1e-05
  %v1017 = vadd.f32 %v1011, 1e-05
  %v1018 = vadd.f32 %v1012, 1e-05
  %v1019 = vadd.f32 %v1013, 1e-05
  %v1020 = vadd.f32 %v1014, 1e-05
  %v1021 = vrsqrt.pop %v1015
  %v1022 = vrsqrt.pop %v1016
  %v1023 = vrsqrt.pop %v1017
  %v1024 = vrsqrt.pop %v1018
  %v1025 = vrsqrt.pop %v1019
  %v1026 = vrsqrt.pop %v1020
  %v1027 = vmul.f32 %v979, %v1021
  %v1028 = vmul.f32 %v980, %v1022
  %v1029 = vmul.f32 %v981, %v1023
  %v1030 = vmul.f32 %v982, %v1024
  %v1031 = vmul.f32 %v983, %v1025
  %v1032 = vmul.f32 %v984, %v1026
  %v1034 = vlaneseq
  %v1035 = vshrl.u32 %v1034, 7
  %v1036 = vsub.s32 0, %v1035
  %v1037 = vrot.slane %v84, %v1036
  %v1039 = vmul.f32 %v1027, %v1037
  %v1040 = vmul.f32 %v1028, %v1037
  %v1041 = vmul.f32 %v1029, %v1037
  %v1042 = vmul.f32 %v1030, %v1037
  %v1043 = vmul.f32 %v1031, %v1037
  %v1044 = vmul.f32 %v1032, %v1037
  %v1046 = vlaneseq
  %v1047 = vshrl.u32 %v1046, 7
  %v1048 = vsub.s32 0, %v1047
  %v1049 = vrot.slane %v85, %v1048
  %v1051 = vadd.f32 %v1039, %v1049
  %v1052 = vadd.f32 %v1040, %v1049
  %v1053 = vadd.f32 %v1041, %v1049
  %v1054 = vadd.f32 %v1042, %v1049
  %v1055 = vadd.f32 %v1043, %v1049
  %v1056 = vadd.f32 %v1044, %v1049
  %v1057 = vpack.c.bf16 %v1052, %v1051
  %v1058 = vpack.c.bf16 %v1054, %v1053
  %v1059 = vpack.c.bf16 %v1056, %v1055
  %v1061 = vlaneseq
  %v1062 = vshrl.u32 %v1061, 7
  %v1063 = vsub.s32 0, %v1062
  %v1064 = vrot.slane %v90, %v1063
  %v1070 = vunpack.c.l.b16 %v86
  %v1071 = vunpack.c.l.b16 %v87
  %v1072 = vunpack.c.l.b16 %v88
  %v1073 = vunpack.c.l.b16 %v89
  %v1074 = vpack.c.b16 %v1071, %v1070
  %v1075 = vpack.c.b16 %v1073, %v1072
  %v1079 = vsel %vm108, %v1057, 0
  %v1082 = vsel %vm108, %v1058, 0
  %v1085 = vsel %vm108, %v1059, 0
  %1087 = vmatprep.subr.bf16.mxu0 0
  %1088 = vmatpush1.bf16.msra.mxu0 %v1074
  %1089 = vmatprep.subr.bf16.mxu0 0
  %1090 = vmatpush1.bf16.msra.mxu0 %v1075
  %1091 = vmatprep.subr.bf16.mxu0 0
  %1092 = vmatpush1.bf16.msra.mxu0 0
  %1093 = vmatprep.subr.bf16.mxu0 0
  %1094 = vmatpush1.bf16.msra.mxu0 0
  %1095 = vmatprep.subr.bf16.mxu0 0
  %1096 = vmatpush1.bf16.msra.mxu0 0
  %1097 = vmatprep.subr.bf16.mxu0 0
  %1098 = vmatpush1.bf16.msra.mxu0 0
  %1099 = vmatprep.subr.bf16.mxu0 0
  %1100 = vmatpush1.bf16.msra.mxu0 0
  %1101 = vmatprep.subr.bf16.mxu0 0
  %1102 = vmatpush1.bf16.msra.mxu0 0
  %1103 = vmatprep.subr.bf16.mxu0 0
  %1104 = vmatpush1.bf16.msra.mxu0 0
  %1105 = vmatprep.subr.bf16.mxu0 0
  %1106 = vmatpush1.bf16.msra.mxu0 0
  %1107 = vmatprep.subr.bf16.mxu0 0
  %1108 = vmatpush1.bf16.msra.mxu0 0
  %1109 = vmatprep.subr.bf16.mxu0 0
  %1110 = vmatpush1.bf16.msra.mxu0 0
  %1111 = vmatprep.subr.bf16.mxu0 0
  %1112 = vmatpush1.bf16.msra.mxu0 0
  %1113 = vmatprep.subr.bf16.mxu0 0
  %1114 = vmatpush1.bf16.msra.mxu0 0
  %1115 = vmatprep.subr.bf16.mxu0 0
  %1116 = vmatpush1.bf16.msra.mxu0 0
  %1117 = vmatprep.subr.bf16.mxu0 0
  %1118 = vmatpush1.bf16.msra.mxu0 0
  %1119 = vmatprep.mubr.bf16.mxu0 0
  %1120 = vmatmul.mubr.bf16.gmra.mrb[0].mxu0 %v1079
  %v1121 = vpop.f32.mrb[0].mxu0
  %v1122 = vadd.f32 %v1064, %v1121
  %v1123 = vpop.f32.mrb[0].mxu0
  %v1124 = vpop.f32.mrb[0].mxu0
  %v1125 = vadd.f32 %v1064, %v1124
  %v1126 = vpop.f32.mrb[0].mxu0
  %1127 = vmatprep.mubr.bf16.mxu0 0
  %1128 = vmatmul.mubr.bf16.gmra.mrb[0].mxu0 %v1082
  %v1129 = vpop.f32.mrb[0].mxu0
  %v1130 = vadd.f32 %v1064, %v1129
  %v1131 = vpop.f32.mrb[0].mxu0
  %v1132 = vpop.f32.mrb[0].mxu0
  %v1133 = vadd.f32 %v1064, %v1132
  %v1134 = vpop.f32.mrb[0].mxu0
  %1135 = vmatprep.mubr.bf16.mxu0 0
  %1136 = vmatmul.mubr.bf16.gmra.mrb[0].mxu0 %v1085
  %v1137 = vpop.f32.mrb[0].mxu0
  %v1138 = vadd.f32 %v1064, %v1137
  %v1139 = vpop.f32.mrb[0].mxu0
  %v1140 = vpop.f32.mrb[0].mxu0
  %v1141 = vadd.f32 %v1064, %v1140
  %v1142 = vpop.f32.mrb[0].mxu0
  %1143 = vdwg.mxu0
  %v1144 = vmul.f32 %v1122, -1.702
  %v1145 = vmul.f32 %v1125, -1.702
  %v1146 = vmul.f32 %v1130, -1.702
  %v1147 = vmul.f32 %v1133, -1.702
  %v1148 = vmul.f32 %v1138, -1.702
  %v1149 = vmul.f32 %v1141, -1.702
  %v1150 = vmul.f32 %v1144, 1.442695
  %v1151 = vpow.pop %v1150
  %v1152 = vmul.f32 %v1145, 1.442695
  %v1153 = vpow.pop %v1152
  %v1154 = vmul.f32 %v1146, 1.442695
  %v1155 = vpow.pop %v1154
  %v1156 = vmul.f32 %v1147, 1.442695
  %v1157 = vpow.pop %v1156
  %v1158 = vmul.f32 %v1148, 1.442695
  %v1159 = vpow.pop %v1158
  %v1160 = vmul.f32 %v1149, 1.442695
  %v1161 = vpow.pop %v1160
  %v1162 = vadd.f32 %v1151, 1.0
  %v1163 = vadd.f32 %v1153, 1.0
  %v1164 = vadd.f32 %v1155, 1.0
  %v1165 = vadd.f32 %v1157, 1.0
  %v1166 = vadd.f32 %v1159, 1.0
  %v1167 = vadd.f32 %v1161, 1.0
  %v1168 = vrcp.pop %v1162
  %v1169 = vrcp.pop %v1163
  %v1170 = vrcp.pop %v1164
  %v1171 = vrcp.pop %v1165
  %v1172 = vrcp.pop %v1166
  %v1173 = vrcp.pop %v1167
  %v1174 = vmul.f32 %v1122, %v1168
  %v1175 = vmul.f32 %v1125, %v1169
  %v1176 = vmul.f32 %v1130, %v1170
  %v1177 = vmul.f32 %v1133, %v1171
  %v1178 = vmul.f32 %v1138, %v1172
  %v1179 = vmul.f32 %v1141, %v1173
  %v1180 = vpack.c.bf16 %v1175, %v1174
  %v1181 = vpack.c.bf16 %v1177, %v1176
  %v1182 = vpack.c.bf16 %v1179, %v1178
  %v1184 = vlaneseq
  %v1185 = vshrl.u32 %v1184, 7
  %v1186 = vsub.s32 0, %v1185
  %v1187 = vrot.slane %v107, %v1186
  %v1205 = vunpack.c.l.b16 %v91
  %v1206 = vunpack.c.l.b16 %v92
  %v1207 = vunpack.c.l.b16 %v93
  %v1208 = vunpack.c.l.b16 %v94
  %v1209 = vunpack.c.l.b16 %v95
  %v1210 = vunpack.c.l.b16 %v96
  %v1211 = vunpack.c.l.b16 %v97
  %v1212 = vunpack.c.l.b16 %v98
  %v1213 = vunpack.c.l.b16 %v99
  %v1214 = vunpack.c.l.b16 %v100
  %v1215 = vunpack.c.l.b16 %v101
  %v1216 = vunpack.c.l.b16 %v102
  %v1217 = vunpack.c.l.b16 %v103
  %v1218 = vunpack.c.l.b16 %v104
  %v1219 = vunpack.c.l.b16 %v105
  %v1220 = vunpack.c.l.b16 %v106
  %v1221 = vpack.c.b16 %v1206, %v1205
  %v1222 = vpack.c.b16 %v1208, %v1207
  %v1223 = vpack.c.b16 %v1210, %v1209
  %v1224 = vpack.c.b16 %v1212, %v1211
  %v1225 = vpack.c.b16 %v1214, %v1213
  %v1226 = vpack.c.b16 %v1216, %v1215
  %v1227 = vpack.c.b16 %v1218, %v1217
  %v1228 = vpack.c.b16 %v1220, %v1219
  %1237 = vmatprep.subr.bf16.mxu0 0
  %1238 = vmatpush1.bf16.msra.mxu0 %v1221
  %1239 = vmatprep.subr.bf16.mxu0 0
  %1240 = vmatpush1.bf16.msra.mxu0 %v1222
  %1241 = vmatprep.subr.bf16.mxu0 0
  %1242 = vmatpush1.bf16.msra.mxu0 %v1223
  %1243 = vmatprep.subr.bf16.mxu0 0
  %1244 = vmatpush1.bf16.msra.mxu0 %v1224
  %1245 = vmatprep.subr.bf16.mxu0 0
  %1246 = vmatpush1.bf16.msra.mxu0 %v1225
  %1247 = vmatprep.subr.bf16.mxu0 0
  %1248 = vmatpush1.bf16.msra.mxu0 %v1226
  %1249 = vmatprep.subr.bf16.mxu0 0
  %1250 = vmatpush1.bf16.msra.mxu0 %v1227
  %1251 = vmatprep.subr.bf16.mxu0 0
  %1252 = vmatpush1.bf16.msra.mxu0 %v1228
  %1253 = vmatprep.subr.bf16.mxu0 0
  %1254 = vmatpush1.bf16.msra.mxu0 0
  %1255 = vmatprep.subr.bf16.mxu0 0
  %1256 = vmatpush1.bf16.msra.mxu0 0
  %1257 = vmatprep.subr.bf16.mxu0 0
  %1258 = vmatpush1.bf16.msra.mxu0 0
  %1259 = vmatprep.subr.bf16.mxu0 0
  %1260 = vmatpush1.bf16.msra.mxu0 0
  %1261 = vmatprep.subr.bf16.mxu0 0
  %1262 = vmatpush1.bf16.msra.mxu0 0
  %1263 = vmatprep.subr.bf16.mxu0 0
  %1264 = vmatpush1.bf16.msra.mxu0 0
  %1265 = vmatprep.subr.bf16.mxu0 0
  %1266 = vmatpush1.bf16.msra.mxu0 0
  %1267 = vmatprep.subr.bf16.mxu0 0
  %1268 = vmatpush1.bf16.msra.mxu0 0
  %1269 = vmatprep.mubr.bf16.mxu0 0
  %1270 = vmatmul.mubr.bf16.gmra.mrb[0].mxu0 %v1180
  %v1271 = vpop.f32.mrb[0].mxu0
  %v1272 = vadd.f32 %v1187, %v1271
  %v1273 = vpop.f32.mrb[0].mxu0
  %v1274 = vpop.f32.mrb[0].mxu0
  %v1275 = vadd.f32 %v1187, %v1274
  %v1276 = vpop.f32.mrb[0].mxu0
  %1277 = vmatprep.mubr.bf16.mxu0 0
  %1278 = vmatmul.mubr.bf16.gmra.mrb[0].mxu0 %v1181
  %v1279 = vpop.f32.mrb[0].mxu0
  %v1280 = vadd.f32 %v1187, %v1279
  %v1281 = vpop.f32.mrb[0].mxu0
  %v1282 = vpop.f32.mrb[0].mxu0
  %v1283 = vadd.f32 %v1187, %v1282
  %v1284 = vpop.f32.mrb[0].mxu0
  %1285 = vmatprep.mubr.bf16.mxu0 0
  %1286 = vmatmul.mubr.bf16.gmra.mrb[0].mxu0 %v1182
  %v1287 = vpop.f32.mrb[0].mxu0
  %v1288 = vadd.f32 %v1187, %v1287
  %v1289 = vpop.f32.mrb[0].mxu0
  %v1290 = vpop.f32.mrb[0].mxu0
  %v1291 = vadd.f32 %v1187, %v1290
  %v1292 = vpop.f32.mrb[0].mxu0
  %1293 = vdwg.mxu0
  %v1294 = vadd.f32 %v949, %v1272
  %v1295 = vadd.f32 %v950, %v1275
  %v1296 = vadd.f32 %v951, %v1280
  %v1297 = vadd.f32 %v952, %v1283
  %v1298 = vadd.f32 %v953, %v1288
  %v1299 = vadd.f32 %v954, %v1291
  %v1300 = vld [vmem:[%s15] sm:$0x1]
  %v1301 = vld [vmem:[%s16] sm:$0x1]
  %v1302 = vsel %vm108, %v1294, 0.0
  %1303 = vadd.xlane.f32.xlu0 %v1302
  %v1304 = vpop.xlane.xlu0 %1303
  %v1305 = vsel %vm108, %v1295, 0.0
  %1306 = vadd.xlane.f32.xlu0 %v1305
  %v1307 = vpop.xlane.xlu0 %1306
  %v1308 = vsel %vm108, %v1296, 0.0
  %1309 = vadd.xlane.f32.xlu0 %v1308
  %v1310 = vpop.xlane.xlu0 %1309
  %v1311 = vsel %vm108, %v1297, 0.0
  %1312 = vadd.xlane.f32.xlu0 %v1311
  %v1313 = vpop.xlane.xlu0 %1312
  %v1314 = vsel %vm108, %v1298, 0.0
  %1315 = vadd.xlane.f32.xlu0 %v1314
  %v1316 = vpop.xlane.xlu0 %1315
  %v1317 = vsel %vm108, %v1299, 0.0
  %1318 = vadd.xlane.f32.xlu0 %v1317
  %v1319 = vpop.xlane.xlu0 %1318
  %v1320 = vmul.f32 %v1304, %v127
  %v1321 = vmul.f32 %v1307, %v127
  %v1322 = vmul.f32 %v1310, %v127
  %v1323 = vmul.f32 %v1313, %v127
  %v1324 = vmul.f32 %v1316, %v127
  %v1325 = vmul.f32 %v1319, %v127
  %v1326 = vsub.f32 %v1294, %v1320
  %v1327 = vsub.f32 %v1295, %v1321
  %v1328 = vsub.f32 %v1296, %v1322
  %v1329 = vsub.f32 %v1297, %v1323
  %v1330 = vsub.f32 %v1298, %v1324
  %v1331 = vsub.f32 %v1299, %v1325
  %v1332 = vmul.f32 %v1326, %v1326
  %v1333 = vmul.f32 %v1327, %v1327
  %v1334 = vmul.f32 %v1328, %v1328
  %v1335 = vmul.f32 %v1329, %v1329
  %v1336 = vmul.f32 %v1330, %v1330
  %v1337 = vmul.f32 %v1331, %v1331
  %v1338 = vsel %vm108, %v1332, 0.0
  %1339 = vadd.xlane.f32.xlu0 %v1338
  %v1340 = vpop.xlane.xlu0 %1339
  %v1341 = vsel %vm108, %v1333, 0.0
  %1342 = vadd.xlane.f32.xlu0 %v1341
  %v1343 = vpop.xlane.xlu0 %1342
  %v1344 = vsel %vm108, %v1334, 0.0
  %1345 = vadd.xlane.f32.xlu0 %v1344
  %v1346 = vpop.xlane.xlu0 %1345
  %v1347 = vsel %vm108, %v1335, 0.0
  %1348 = vadd.xlane.f32.xlu0 %v1347
  %v1349 = vpop.xlane.xlu0 %1348
  %v1350 = vsel %vm108, %v1336, 0.0
  %1351 = vadd.xlane.f32.xlu0 %v1350
  %v1352 = vpop.xlane.xlu0 %1351
  %v1353 = vsel %vm108, %v1337, 0.0
  %1354 = vadd.xlane.f32.xlu0 %v1353
  %v1355 = vpop.xlane.xlu0 %1354
  %v1356 = vmul.f32 %v1340, %v127
  %v1357 = vmul.f32 %v1343, %v127
  %v1358 = vmul.f32 %v1346, %v127
  %v1359 = vmul.f32 %v1349, %v127
  %v1360 = vmul.f32 %v1352, %v127
  %v1361 = vmul.f32 %v1355, %v127
  %v1362 = vadd.f32 %v1356, 1e-05
  %v1363 = vadd.f32 %v1357, 1e-05
  %v1364 = vadd.f32 %v1358, 1e-05
  %v1365 = vadd.f32 %v1359, 1e-05
  %v1366 = vadd.f32 %v1360, 1e-05
  %v1367 = vadd.f32 %v1361, 1e-05
  %v1368 = vrsqrt.pop %v1362
  %v1369 = vrsqrt.pop %v1363
  %v1370 = vrsqrt.pop %v1364
  %v1371 = vrsqrt.pop %v1365
  %v1372 = vrsqrt.pop %v1366
  %v1373 = vrsqrt.pop %v1367
  %v1374 = vmul.f32 %v1326, %v1368
  %v1375 = vmul.f32 %v1327, %v1369
  %v1376 = vmul.f32 %v1328, %v1370
  %v1377 = vmul.f32 %v1329, %v1371
  %v1378 = vmul.f32 %v1330, %v1372
  %v1379 = vmul.f32 %v1331, %v1373
  %v1381 = vlaneseq
  %v1382 = vshrl.u32 %v1381, 7
  %v1383 = vsub.s32 0, %v1382
  %v1384 = vrot.slane %v1300, %v1383
  %v1386 = vmul.f32 %v1374, %v1384
  %v1387 = vmul.f32 %v1375, %v1384
  %v1388 = vmul.f32 %v1376, %v1384
  %v1389 = vmul.f32 %v1377, %v1384
  %v1390 = vmul.f32 %v1378, %v1384
  %v1391 = vmul.f32 %v1379, %v1384
  %v1393 = vlaneseq
  %v1394 = vshrl.u32 %v1393, 7
  %v1395 = vsub.s32 0, %v1394
  %v1396 = vrot.slane %v1301, %v1395
  %v1398 = vadd.f32 %v1386, %v1396
  %v1399 = vadd.f32 %v1387, %v1396
  %v1400 = vadd.f32 %v1388, %v1396
  %v1401 = vadd.f32 %v1389, %v1396
  %v1402 = vadd.f32 %v1390, %v1396
  %v1403 = vadd.f32 %v1391, %v1396
  %v1404 = vld [vmem:[%s1] sm:$0x3f]
  %v1406 = vsel %vm399, %v1404, 0
  %1408 = vmatprep.subr.mxu0 0.0
  %1409 = vmatpush1.msra.mxu0 %v1398
  %1410 = vmatprep.subr.mxu0 0.0
  %1411 = vmatpush1.msra.mxu0 %v1399
  %1412 = vmatprep.subr.mxu0 0.0
  %1413 = vmatpush1.msra.mxu0 %v1400
  %1414 = vmatprep.subr.mxu0 0.0
  %1415 = vmatpush1.msra.mxu0 %v1401
  %1416 = vmatprep.subr.mxu0 0.0
  %1417 = vmatpush1.msra.mxu0 %v1402
  %1418 = vmatprep.subr.mxu0 0.0
  %1419 = vmatpush1.msra.mxu0 %v1403
  %1420 = vmatprep.subr.mxu0 0.0
  %1421 = vmatpush1.msra.mxu0 0.0
  %1422 = vmatprep.subr.mxu0 0.0
  %1423 = vmatpush1.msra.mxu0 0.0
  %1424 = vmatprep.subr.mxu0 0.0
  %1425 = vmatpush1.msra.mxu0 0.0
  %1426 = vmatprep.subr.mxu0 0.0
  %1427 = vmatpush1.msra.mxu0 0.0
  %1428 = vmatprep.subr.mxu0 0.0
  %1429 = vmatpush1.msra.mxu0 0.0
  %1430 = vmatprep.subr.mxu0 0.0
  %1431 = vmatpush1.msra.mxu0 0.0
  %1432 = vmatprep.subr.mxu0 0.0
  %1433 = vmatpush1.msra.mxu0 0.0
  %1434 = vmatprep.subr.mxu0 0.0
  %1435 = vmatpush1.msra.mxu0 0.0
  %1436 = vmatprep.subr.mxu0 0.0
  %1437 = vmatpush1.msra.mxu0 0.0
  %1438 = vmatprep.subr.mxu0 0.0
  %1439 = vmatpush1.msra.mxu0 0.0
  %1440 = vmatprep.subr.mxu0 0.0
  %1441 = vmatpush1.msra.mxu0 0.0
  %1442 = vmatprep.subr.mxu0 0.0
  %1443 = vmatpush1.msra.mxu0 0.0
  %1444 = vmatprep.subr.mxu0 0.0
  %1445 = vmatpush1.msra.mxu0 0.0
  %1446 = vmatprep.subr.mxu0 0.0
  %1447 = vmatpush1.msra.mxu0 0.0
  %1448 = vmatprep.subr.mxu0 0.0
  %1449 = vmatpush1.msra.mxu0 0.0
  %1450 = vmatprep.subr.mxu0 0.0
  %1451 = vmatpush1.msra.mxu0 0.0
  %1452 = vmatprep.subr.mxu0 0.0
  %1453 = vmatpush1.msra.mxu0 0.0
  %1454 = vmatprep.subr.mxu0 0.0
  %1455 = vmatpush1.msra.mxu0 0.0
  %1456 = vmatprep.subr.mxu0 0.0
  %1457 = vmatpush1.msra.mxu0 0.0
  %1458 = vmatprep.subr.mxu0 0.0
  %1459 = vmatpush1.msra.mxu0 0.0
  %1460 = vmatprep.subr.mxu0 0.0
  %1461 = vmatpush1.msra.mxu0 0.0
  %1462 = vmatprep.subr.mxu0 0.0
  %1463 = vmatpush1.msra.mxu0 0.0
  %1464 = vmatprep.subr.mxu0 0.0
  %1465 = vmatpush1.msra.mxu0 0.0
  %1466 = vmatprep.subr.mxu0 0.0
  %1467 = vmatpush1.msra.mxu0 0.0
  %1468 = vmatprep.subr.mxu0 0.0
  %1469 = vmatpush1.msra.mxu0 0.0
  %1470 = vmatprep.subr.mxu0 0.0
  %1471 = vmatpush1.msra.mxu0 0.0
  %1472 = vmatprep.mubr.f32.mxu0 0.0
  %1473 = vmatmul.mubr.f32.gmra.mrb[0].mxu0 %v1406
  %v1474 = vpop.f32.mrb[0].mxu0
  %v1475 = vadd.f32 0.0, %v1474
  %v1476 = vpop.f32.mrb[0].mxu0
  %1477 = vdwg.mxu0
  %v1478 = vld [vmem:[%s17] sm:$0xf]
  %v1479 = vld [vmem:[%s17 + $0x4] sm:$0xf]
  %v1480 = vld [vmem:[%s17 + $0x8] sm:$0xf]
  %v1481 = vld [vmem:[%s17 + $0xc] sm:$0xf]
  %v1482 = vpack.c.bf16 %v1475, %v1475
  %v1487 = vunpack.c.l.b16 %v1478
  %v1488 = vunpack.c.l.b16 %v1479
  %v1489 = vunpack.c.l.b16 %v1480
  %v1490 = vunpack.c.l.b16 %v1481
  %v1491 = vpack.c.b16 %v1488, %v1487
  %v1492 = vpack.c.b16 %v1490, %v1489
  %v1496 = vsel %vm108, %v1482, 0
  %1498 = vmatprep.subr.bf16.mxu0 0
  %1499 = vmatpush1.bf16.msra.mxu0 %v1491
  %1500 = vmatprep.subr.bf16.mxu0 0
  %1501 = vmatpush1.bf16.msra.mxu0 %v1492
  %1502 = vmatprep.subr.bf16.mxu0 0
  %1503 = vmatpush1.bf16.msra.mxu0 0
  %1504 = vmatprep.subr.bf16.mxu0 0
  %1505 = vmatpush1.bf16.msra.mxu0 0
  %1506 = vmatprep.subr.bf16.mxu0 0
  %1507 = vmatpush1.bf16.msra.mxu0 0
  %1508 = vmatprep.subr.bf16.mxu0 0
  %1509 = vmatpush1.bf16.msra.mxu0 0
  %1510 = vmatprep.subr.bf16.mxu0 0
  %1511 = vmatpush1.bf16.msra.mxu0 0
  %1512 = vmatprep.subr.bf16.mxu0 0
  %1513 = vmatpush1.bf16.msra.mxu0 0
  %1514 = vmatprep.subr.bf16.mxu0 0
  %1515 = vmatpush1.bf16.msra.mxu0 0
  %1516 = vmatprep.subr.bf16.mxu0 0
  %1517 = vmatpush1.bf16.msra.mxu0 0
  %1518 = vmatprep.subr.bf16.mxu0 0
  %1519 = vmatpush1.bf16.msra.mxu0 0
  %1520 = vmatprep.subr.bf16.mxu0 0
  %1521 = vmatpush1.bf16.msra.mxu0 0
  %1522 = vmatprep.subr.bf16.mxu0 0
  %1523 = vmatpush1.bf16.msra.mxu0 0
  %1524 = vmatprep.subr.bf16.mxu0 0
  %1525 = vmatpush1.bf16.msra.mxu0 0
  %1526 = vmatprep.subr.bf16.mxu0 0
  %1527 = vmatpush1.bf16.msra.mxu0 0
  %1528 = vmatprep.subr.bf16.mxu0 0
  %1529 = vmatpush1.bf16.msra.mxu0 0
  %1530 = vmatprep.mubr.bf16.mxu0 0
  %1531 = vmatmul.mubr.bf16.gmra.mrb[0].mxu0 %v1496
  %v1532 = vpop.f32.mrb[0].mxu0
  %v1533 = vadd.f32 0.0, %v1532
  %v1534 = vpop.f32.mrb[0].mxu0
  %v1535 = vpop.f32.mrb[0].mxu0
  %v1536 = vpop.f32.mrb[0].mxu0
  %1537 = vdwg.mxu0
  %vm1538 = vcmask 259072
  %1539 = vst.msk [vmem:[%s18] sm:$0x3f] %vm1538, %v1533
  // Predicated region
  $region74: #{clip_forward.3} parent=0 // pred_check
    _
  $region75: #{clip_forward.3} parent=0 // pred_check_branch
    %1541 = sbr.rel (0) target = $region77
  $region76: #{clip_forward.3} parent=0 // pred_region
    _
  $region77: #{clip_forward.3} parent=0 // pred_fallthru
    _
  // Predicated region
  $region78: #{clip_forward.3} parent=0 // pred_check
    _
  $region79: #{clip_forward.3} parent=0 // pred_check_branch
    %1543 = sbr.rel (0) target = $region81
  $region80: #{clip_forward.3} parent=0 // pred_region
    _
  $region81: #{clip_forward.3} parent=0 // pred_fallthru
    _

// kernel: clip_forward.4
$region0: #{clip_forward.4}
  #allocation0 [shape = 'u32[]', space=smem, size = 0x4, offset = 0x4, fixed_abs, tag = 'smem constant byte address 0x4 - core index']
  #allocation1 [shape = 'u32[144,128]{1,0:T(1,128)}', space=vmem, size = 0x12000, scoped, tag = 'internal scratch']
  %s0 = inlined_call_operand.vmem [shape: f32[8,192], index: 0, kind: input, shape index: {}]
  %s1 = inlined_call_operand.vmem [shape: bf16[192,32], index: 1, kind: input, shape index: {}]
  %s2 = inlined_call_operand.vmem [shape: f32[10,8], index: 2, kind: input, shape index: {}]
  %s3 = inlined_call_operand.vmem [shape: f32[10,32], index: 3, kind: input, shape index: {}]
  %s4 = inlined_call_operand.vmem [shape: f32[2,10], index: 4, kind: input, shape index: {}]
  %s5 = inlined_call_operand.vmem [shape: f32[10,10], index: 5, kind: input, shape index: {}]
  %s6 = inlined_call_operand.vmem [shape: f32[1,32], index: 6, kind: input, shape index: {}]
  %s7 = inlined_call_operand.vmem [shape: f32[1,32], index: 7, kind: input, shape index: {}]
  %s8 = inlined_call_operand.vmem [shape: f32[1,32], index: 8, kind: input, shape index: {}]
  %s9 = inlined_call_operand.vmem [shape: f32[1,32], index: 9, kind: input, shape index: {}]
  %s10 = inlined_call_operand.vmem [shape: bf16[32,96], index: 10, kind: input, shape index: {}]
  %s11 = inlined_call_operand.vmem [shape: f32[1,96], index: 11, kind: input, shape index: {}]
  %s12 = inlined_call_operand.vmem [shape: bf16[32,32], index: 12, kind: input, shape index: {}]
  %s13 = inlined_call_operand.vmem [shape: f32[1,32], index: 13, kind: input, shape index: {}]
  %s14 = inlined_call_operand.vmem [shape: f32[1,32], index: 14, kind: input, shape index: {}]
  %s15 = inlined_call_operand.vmem [shape: f32[1,32], index: 15, kind: input, shape index: {}]
  %s16 = inlined_call_operand.vmem [shape: bf16[32,128], index: 16, kind: input, shape index: {}]
  %s17 = inlined_call_operand.vmem [shape: f32[1,128], index: 17, kind: input, shape index: {}]
  %s18 = inlined_call_operand.vmem [shape: bf16[128,32], index: 18, kind: input, shape index: {}]
  %s19 = inlined_call_operand.vmem [shape: f32[1,32], index: 19, kind: input, shape index: {}]
  %s20 = inlined_call_operand.vmem [shape: f32[1,32], index: 20, kind: input, shape index: {}]
  %s21 = inlined_call_operand.vmem [shape: f32[1,32], index: 21, kind: input, shape index: {}]
  %s22 = inlined_call_operand.vmem [shape: bf16[32,32], index: 22, kind: input, shape index: {}]
  %s23 = inlined_call_operand.vmem [shape: f32[2,32], index: 23, kind: output, shape index: {}]
  %s24 = sld [smem:[#allocation0]]
  $region102: #{clip_forward.4} parent=0
    _
  %s26 = ssub.s32 1, %s24
  %s27 = scalar_select 0, %s26, %s24
  // Predicated region
  $region2: #{clip_forward.4} parent=0 // pred_check
    _
  $region3: #{clip_forward.4} parent=0 // pred_check_branch
    %29 = sbr.rel (0) target = $region5
  $region4: #{clip_forward.4} parent=0 // pred_region
    _
  $region5: #{clip_forward.4} parent=0 // pred_fallthru
    _
  // Predicated region
  $region6: #{clip_forward.4} parent=0 // pred_check
    _
  $region7: #{clip_forward.4} parent=0 // pred_check_branch
    %31 = sbr.rel (0) target = $region9
  $region8: #{clip_forward.4} parent=0 // pred_region
    _
  $region9: #{clip_forward.4} parent=0 // pred_fallthru
    _
  // Predicated region
  $region10: #{clip_forward.4} parent=0 // pred_check
    _
  $region11: #{clip_forward.4} parent=0 // pred_check_branch
    %33 = sbr.rel (0) target = $region13
  $region12: #{clip_forward.4} parent=0 // pred_region
    _
  $region13: #{clip_forward.4} parent=0 // pred_fallthru
    _
  // Predicated region
  $region14: #{clip_forward.4} parent=0 // pred_check
    _
  $region15: #{clip_forward.4} parent=0 // pred_check_branch
    %35 = sbr.rel (0) target = $region17
  $region16: #{clip_forward.4} parent=0 // pred_region
    _
  $region17: #{clip_forward.4} parent=0 // pred_fallthru
    _
  // Predicated region
  $region18: #{clip_forward.4} parent=0 // pred_check
    _
  $region19: #{clip_forward.4} parent=0 // pred_check_branch
    %37 = sbr.rel (0) target = $region21
  $region20: #{clip_forward.4} parent=0 // pred_region
    _
  $region21: #{clip_forward.4} parent=0 // pred_fallthru
    _
  // Predicated region
  $region22: #{clip_forward.4} parent=0 // pred_check
    _
  $region23: #{clip_forward.4} parent=0 // pred_check_branch
    %39 = sbr.rel (0) target = $region25
  $region24: #{clip_forward.4} parent=0 // pred_region
    _
  $region25: #{clip_forward.4} parent=0 // pred_fallthru
    _
  // Predicated region
  $region26: #{clip_forward.4} parent=0 // pred_check
    _
  $region27: #{clip_forward.4} parent=0 // pred_check_branch
    %41 = sbr.rel (0) target = $region29
  $region28: #{clip_forward.4} parent=0 // pred_region
    _
  $region29: #{clip_forward.4} parent=0 // pred_fallthru
    _
  // Predicated region
  $region30: #{clip_forward.4} parent=0 // pred_check
    _
  $region31: #{clip_forward.4} parent=0 // pred_check_branch
    %43 = sbr.rel (0) target = $region33
  $region32: #{clip_forward.4} parent=0 // pred_region
    _
  $region33: #{clip_forward.4} parent=0 // pred_fallthru
    _
  // Predicated region
  $region34: #{clip_forward.4} parent=0 // pred_check
    _
  $region35: #{clip_forward.4} parent=0 // pred_check_branch
    %45 = sbr.rel (0) target = $region37
  $region36: #{clip_forward.4} parent=0 // pred_region
    _
  $region37: #{clip_forward.4} parent=0 // pred_fallthru
    _
  // Predicated region
  $region38: #{clip_forward.4} parent=0 // pred_check
    _
  $region39: #{clip_forward.4} parent=0 // pred_check_branch
    %47 = sbr.rel (0) target = $region41
  $region40: #{clip_forward.4} parent=0 // pred_region
    _
  $region41: #{clip_forward.4} parent=0 // pred_fallthru
    _
  // Predicated region
  $region42: #{clip_forward.4} parent=0 // pred_check
    _
  $region43: #{clip_forward.4} parent=0 // pred_check_branch
    %49 = sbr.rel (0) target = $region45
  $region44: #{clip_forward.4} parent=0 // pred_region
    _
  $region45: #{clip_forward.4} parent=0 // pred_fallthru
    _
  // Predicated region
  $region46: #{clip_forward.4} parent=0 // pred_check
    _
  $region47: #{clip_forward.4} parent=0 // pred_check_branch
    %51 = sbr.rel (0) target = $region49
  $region48: #{clip_forward.4} parent=0 // pred_region
    _
  $region49: #{clip_forward.4} parent=0 // pred_fallthru
    _
  // Predicated region
  $region50: #{clip_forward.4} parent=0 // pred_check
    _
  $region51: #{clip_forward.4} parent=0 // pred_check_branch
    %53 = sbr.rel (0) target = $region53
  $region52: #{clip_forward.4} parent=0 // pred_region
    _
  $region53: #{clip_forward.4} parent=0 // pred_fallthru
    _
  // Predicated region
  $region54: #{clip_forward.4} parent=0 // pred_check
    _
  $region55: #{clip_forward.4} parent=0 // pred_check_branch
    %55 = sbr.rel (0) target = $region57
  $region56: #{clip_forward.4} parent=0 // pred_region
    _
  $region57: #{clip_forward.4} parent=0 // pred_fallthru
    _
  // Predicated region
  $region58: #{clip_forward.4} parent=0 // pred_check
    _
  $region59: #{clip_forward.4} parent=0 // pred_check_branch
    %57 = sbr.rel (0) target = $region61
  $region60: #{clip_forward.4} parent=0 // pred_region
    _
  $region61: #{clip_forward.4} parent=0 // pred_fallthru
    _
  // Predicated region
  $region62: #{clip_forward.4} parent=0 // pred_check
    _
  $region63: #{clip_forward.4} parent=0 // pred_check_branch
    %59 = sbr.rel (0) target = $region65
  $region64: #{clip_forward.4} parent=0 // pred_region
    _
  $region65: #{clip_forward.4} parent=0 // pred_fallthru
    _
  // Predicated region
  $region66: #{clip_forward.4} parent=0 // pred_check
    _
  $region67: #{clip_forward.4} parent=0 // pred_check_branch
    %61 = sbr.rel (0) target = $region69
  $region68: #{clip_forward.4} parent=0 // pred_region
    _
  $region69: #{clip_forward.4} parent=0 // pred_fallthru
    _
  // Predicated region
  $region70: #{clip_forward.4} parent=0 // pred_check
    _
  $region71: #{clip_forward.4} parent=0 // pred_check_branch
    %63 = sbr.rel (0) target = $region73
  $region72: #{clip_forward.4} parent=0 // pred_region
    _
  $region73: #{clip_forward.4} parent=0 // pred_fallthru
    _
  // Predicated region
  $region74: #{clip_forward.4} parent=0 // pred_check
    _
  $region75: #{clip_forward.4} parent=0 // pred_check_branch
    %65 = sbr.rel (0) target = $region77
  $region76: #{clip_forward.4} parent=0 // pred_region
    _
  $region77: #{clip_forward.4} parent=0 // pred_fallthru
    _
  // Predicated region
  $region78: #{clip_forward.4} parent=0 // pred_check
    _
  $region79: #{clip_forward.4} parent=0 // pred_check_branch
    %67 = sbr.rel (0) target = $region81
  $region80: #{clip_forward.4} parent=0 // pred_region
    _
  $region81: #{clip_forward.4} parent=0 // pred_fallthru
    _
  // Predicated region
  $region82: #{clip_forward.4} parent=0 // pred_check
    _
  $region83: #{clip_forward.4} parent=0 // pred_check_branch
    %69 = sbr.rel (0) target = $region85
  $region84: #{clip_forward.4} parent=0 // pred_region
    _
  $region85: #{clip_forward.4} parent=0 // pred_fallthru
    _
  // Predicated region
  $region86: #{clip_forward.4} parent=0 // pred_check
    _
  $region87: #{clip_forward.4} parent=0 // pred_check_branch
    %71 = sbr.rel (0) target = $region89
  $region88: #{clip_forward.4} parent=0 // pred_region
    _
  $region89: #{clip_forward.4} parent=0 // pred_fallthru
    _
  // Predicated region
  $region90: #{clip_forward.4} parent=0 // pred_check
    _
  $region91: #{clip_forward.4} parent=0 // pred_check_branch
    %73 = sbr.rel (0) target = $region93
  $region92: #{clip_forward.4} parent=0 // pred_region
    _
  $region93: #{clip_forward.4} parent=0 // pred_fallthru
    _
  %v75 = vld [vmem:[%s0] sm:$0xff]
  %v76 = vld [vmem:[%s0 + $0x8] sm:$0xff]
  %v77 = vld [vmem:[%s1] sm:$0xf]
  %v78 = vld [vmem:[%s1 + $0x4] sm:$0xf]
  %v79 = vld [vmem:[%s1 + $0x8] sm:$0xf]
  %v80 = vld [vmem:[%s1 + $0xc] sm:$0xf]
  %v81 = vld [vmem:[%s1 + $0x10] sm:$0xf]
  %v82 = vld [vmem:[%s1 + $0x14] sm:$0xf]
  %v83 = vld [vmem:[%s1 + $0x18] sm:$0xf]
  %v84 = vld [vmem:[%s1 + $0x1c] sm:$0xf]
  %v85 = vld [vmem:[%s1 + $0x20] sm:$0xf]
  %v86 = vld [vmem:[%s1 + $0x24] sm:$0xf]
  %v87 = vld [vmem:[%s1 + $0x28] sm:$0xf]
  %v88 = vld [vmem:[%s1 + $0x2c] sm:$0xf]
  %v89 = vld [vmem:[%s1 + $0x30] sm:$0xf]
  %v90 = vld [vmem:[%s1 + $0x34] sm:$0xf]
  %v91 = vld [vmem:[%s1 + $0x38] sm:$0xf]
  %v92 = vld [vmem:[%s1 + $0x3c] sm:$0xf]
  %v93 = vld [vmem:[%s1 + $0x40] sm:$0xf]
  %v94 = vld [vmem:[%s1 + $0x44] sm:$0xf]
  %v95 = vld [vmem:[%s1 + $0x48] sm:$0xf]
  %v96 = vld [vmem:[%s1 + $0x4c] sm:$0xf]
  %v97 = vld [vmem:[%s1 + $0x50] sm:$0xf]
  %v98 = vld [vmem:[%s1 + $0x54] sm:$0xf]
  %v99 = vld [vmem:[%s1 + $0x58] sm:$0xf]
  %v100 = vld [vmem:[%s1 + $0x5c] sm:$0xf]
  %v101 = vpack.c.bf16 %v75, %v75
  %v102 = vpack.c.bf16 %v76, %v76
  %v127 = vunpack.c.l.b16 %v77
  %v128 = vunpack.c.l.b16 %v78
  %v129 = vunpack.c.l.b16 %v79
  %v130 = vunpack.c.l.b16 %v80
  %v131 = vunpack.c.l.b16 %v81
  %v132 = vunpack.c.l.b16 %v82
  %v133 = vunpack.c.l.b16 %v83
  %v134 = vunpack.c.l.b16 %v84
  %v135 = vunpack.c.l.b16 %v85
  %v136 = vunpack.c.l.b16 %v86
  %v137 = vunpack.c.l.b16 %v87
  %v138 = vunpack.c.l.b16 %v88
  %v139 = vunpack.c.l.b16 %v89
  %v140 = vunpack.c.l.b16 %v90
  %v141 = vunpack.c.l.b16 %v91
  %v142 = vunpack.c.l.b16 %v92
  %v143 = vunpack.c.l.b16 %v93
  %v144 = vunpack.c.l.b16 %v94
  %v145 = vunpack.c.l.b16 %v95
  %v146 = vunpack.c.l.b16 %v96
  %v147 = vunpack.c.l.b16 %v97
  %v148 = vunpack.c.l.b16 %v98
  %v149 = vunpack.c.l.b16 %v99
  %v150 = vunpack.c.l.b16 %v100
  %v151 = vpack.c.b16 %v128, %v127
  %v152 = vpack.c.b16 %v130, %v129
  %v153 = vpack.c.b16 %v132, %v131
  %v154 = vpack.c.b16 %v134, %v133
  %v155 = vpack.c.b16 %v136, %v135
  %v156 = vpack.c.b16 %v138, %v137
  %v157 = vpack.c.b16 %v140, %v139
  %v158 = vpack.c.b16 %v142, %v141
  %v159 = vpack.c.b16 %v144, %v143
  %v160 = vpack.c.b16 %v146, %v145
  %v161 = vpack.c.b16 %v148, %v147
  %v162 = vpack.c.b16 %v150, %v149
  %vm175 = vcmask 523264
  %v177 = vsel %vm175, %v102, 0
  %179 = vmatprep.subr.bf16.mxu0 0
  %180 = vmatpush1.bf16.msra.mxu0 %v151
  %181 = vmatprep.subr.bf16.mxu0 0
  %182 = vmatpush1.bf16.msra.mxu0 %v152
  %183 = vmatprep.subr.bf16.mxu0 0
  %184 = vmatpush1.bf16.msra.mxu0 %v153
  %185 = vmatprep.subr.bf16.mxu0 0
  %186 = vmatpush1.bf16.msra.mxu0 %v154
  %187 = vmatprep.subr.bf16.mxu0 0
  %188 = vmatpush1.bf16.msra.mxu0 %v155
  %189 = vmatprep.subr.bf16.mxu0 0
  %190 = vmatpush1.bf16.msra.mxu0 %v156
  %191 = vmatprep.subr.bf16.mxu0 0
  %192 = vmatpush1.bf16.msra.mxu0 %v157
  %193 = vmatprep.subr.bf16.mxu0 0
  %194 = vmatpush1.bf16.msra.mxu0 %v158
  %195 = vmatprep.subr.bf16.mxu0 0
  %196 = vmatpush1.bf16.msra.mxu0 %v159
  %197 = vmatprep.subr.bf16.mxu0 0
  %198 = vmatpush1.bf16.msra.mxu0 %v160
  %199 = vmatprep.subr.bf16.mxu0 0
  %200 = vmatpush1.bf16.msra.mxu0 %v161
  %201 = vmatprep.subr.bf16.mxu0 0
  %202 = vmatpush1.bf16.msra.mxu0 %v162
  %203 = vmatprep.subr.bf16.mxu0 0
  %204 = vmatpush1.bf16.msra.mxu0 0
  %205 = vmatprep.subr.bf16.mxu0 0
  %206 = vmatpush1.bf16.msra.mxu0 0
  %207 = vmatprep.subr.bf16.mxu0 0
  %208 = vmatpush1.bf16.msra.mxu0 0
  %209 = vmatprep.subr.bf16.mxu0 0
  %210 = vmatpush1.bf16.msra.mxu0 0
  %211 = vmatprep.mubr.bf16.mxu0 %v177
  %212 = vmatmul.mubr.bf16.gmra.mrb[0].mxu0 %v101
  %v213 = vpop.f32.mrb[0].mxu0
  %v214 = vadd.f32 0.0, %v213
  %v215 = vpop.f32.mrb[0].mxu0
  %v216 = vpop.f32.mrb[0].mxu0
  %v217 = vpop.f32.mrb[0].mxu0
  %218 = vdwg.mxu0
  %v219 = vld [vmem:[%s2] sm:$0xff]
  %v220 = vld [vmem:[%s2 + $0x8] sm:$0x3]
  %v221 = vld [vmem:[%s3] sm:$0xff]
  %v222 = vld [vmem:[%s3 + $0x8] sm:$0x3]
  %vm223 = vcmask 64512
  %v225 = vsel %vm223, %v219, 0
  %v228 = vsel %vm223, %v220, 0
  %230 = vmatprep.subr.mxu0 0.0
  %231 = vmatpush1.msra.mxu0 %v214
  %232 = vmatprep.subr.mxu0 0.0
  %233 = vmatpush1.msra.mxu0 0.0
  %234 = vmatprep.subr.mxu0 0.0
  %235 = vmatpush1.msra.mxu0 0.0
  %236 = vmatprep.subr.mxu0 0.0
  %237 = vmatpush1.msra.mxu0 0.0
  %238 = vmatprep.subr.mxu0 0.0
  %239 = vmatpush1.msra.mxu0 0.0
  %240 = vmatprep.subr.mxu0 0.0
  %241 = vmatpush1.msra.mxu0 0.0
  %242 = vmatprep.subr.mxu0 0.0
  %243 = vmatpush1.msra.mxu0 0.0
  %244 = vmatprep.subr.mxu0 0.0
  %245 = vmatpush1.msra.mxu0 0.0
  %246 = vmatprep.subr.mxu0 0.0
  %247 = vmatpush1.msra.mxu0 0.0
  %248 = vmatprep.subr.mxu0 0.0
  %249 = vmatpush1.msra.mxu0 0.0
  %250 = vmatprep.subr.mxu0 0.0
  %251 = vmatpush1.msra.mxu0 0.0
  %252 = vmatprep.subr.mxu0 0.0
  %253 = vmatpush1.msra.mxu0 0.0
  %254 = vmatprep.subr.mxu0 0.0
  %255 = vmatpush1.msra.mxu0 0.0
  %256 = vmatprep.subr.mxu0 0.0
  %257 = vmatpush1.msra.mxu0 0.0
  %258 = vmatprep.subr.mxu0 0.0
  %259 = vmatpush1.msra.mxu0 0.0
  %260 = vmatprep.subr.mxu0 0.0
  %261 = vmatpush1.msra.mxu0 0.0
  %262 = vmatprep.subr.mxu0 0.0
  %263 = vmatpush1.msra.mxu0 0.0
  %264 = vmatprep.subr.mxu0 0.0
  %265 = vmatpush1.msra.mxu0 0.0
  %266 = vmatprep.subr.mxu0 0.0
  %267 = vmatpush1.msra.mxu0 0.0
  %268 = vmatprep.subr.mxu0 0.0
  %269 = vmatpush1.msra.mxu0 0.0
  %270 = vmatprep.subr.mxu0 0.0
  %271 = vmatpush1.msra.mxu0 0.0
  %272 = vmatprep.subr.mxu0 0.0
  %273 = vmatpush1.msra.mxu0 0.0
  %274 = vmatprep.subr.mxu0 0.0
  %275 = vmatpush1.msra.mxu0 0.0
  %276 = vmatprep.subr.mxu0 0.0
  %277 = vmatpush1.msra.mxu0 0.0
  %278 = vmatprep.subr.mxu0 0.0
  %279 = vmatpush1.msra.mxu0 0.0
  %280 = vmatprep.subr.mxu0 0.0
  %281 = vmatpush1.msra.mxu0 0.0
  %282 = vmatprep.subr.mxu0 0.0
  %283 = vmatpush1.msra.mxu0 0.0
  %284 = vmatprep.subr.mxu0 0.0
  %285 = vmatpush1.msra.mxu0 0.0
  %286 = vmatprep.subr.mxu0 0.0
  %287 = vmatpush1.msra.mxu0 0.0
  %288 = vmatprep.subr.mxu0 0.0
  %289 = vmatpush1.msra.mxu0 0.0
  %290 = vmatprep.subr.mxu0 0.0
  %291 = vmatpush1.msra.mxu0 0.0
  %292 = vmatprep.subr.mxu0 0.0
  %293 = vmatpush1.msra.mxu0 0.0
  %294 = vmatprep.mubr.f32.mxu0 0.0
  %295 = vmatmul.mubr.f32.gmra.mrb[0].mxu0 %v225
  %v296 = vpop.f32.mrb[0].mxu0
  %v297 = vadd.f32 %v221, %v296
  %v298 = vpop.f32.mrb[0].mxu0
  %299 = vmatprep.mubr.f32.mxu0 0.0
  %300 = vmatmul.mubr.f32.gmra.mrb[0].mxu0 %v228
  %v301 = vpop.f32.mrb[0].mxu0
  %v302 = vadd.f32 %v222, %v301
  %v303 = vpop.f32.mrb[0].mxu0
  %304 = vdwg.mxu0
  %v305 = vld [vmem:[%s6] sm:$0x1]
  %v306 = vld [vmem:[%s7] sm:$0x1]
  %vm307 = vcmask 261120
  %v308 = vsel %vm307, %v297, 0.0
  %309 = vadd.xlane.f32.xlu0 %v308
  %v310 = vpop.xlane.xlu0 %309
  %vm311 = vcmask 254976
  %v312 = vsel %vm311, %v302, 0.0
  %313 = vadd.xlane.f32.xlu0 %v312
  %v314 = vpop.xlane.xlu0 %313
  %v315 = vrcp.pop 32.0
  %v316 = vmul.f32 %v310, %v315
  %v317 = vmul.f32 %v314, %v315
  %v318 = vsub.f32 %v297, %v316
  %v319 = vsub.f32 %v302, %v317
  %v320 = vmul.f32 %v318, %v318
  %v321 = vmul.f32 %v319, %v319
  %v322 = vsel %vm307, %v320, 0.0
  %323 = vadd.xlane.f32.xlu0 %v322
  %v324 = vpop.xlane.xlu0 %323
  %v325 = vsel %vm311, %v321, 0.0
  %326 = vadd.xlane.f32.xlu0 %v325
  %v327 = vpop.xlane.xlu0 %326
  %v328 = vmul.f32 %v324, %v315
  %v329 = vmul.f32 %v327, %v315
  %v330 = vadd.f32 %v328, 1e-05
  %v331 = vadd.f32 %v329, 1e-05
  %v332 = vrsqrt.pop %v330
  %v333 = vrsqrt.pop %v331
  %v334 = vmul.f32 %v318, %v332
  %v335 = vmul.f32 %v319, %v333
  %v337 = vlaneseq
  %v338 = vshrl.u32 %v337, 7
  %v339 = vsub.s32 0, %v338
  %v340 = vrot.slane %v305, %v339
  %v342 = vmul.f32 %v334, %v340
  %v343 = vmul.f32 %v335, %v340
  %v345 = vlaneseq
  %v346 = vshrl.u32 %v345, 7
  %v347 = vsub.s32 0, %v346
  %v348 = vrot.slane %v306, %v347
  %v350 = vadd.f32 %v342, %v348
  %v351 = vadd.f32 %v343, %v348
  %v352 = vld [vmem:[%s5] sm:$0xff]
  %v353 = vld [vmem:[%s5 + $0x8] sm:$0x3]
  %v354 = vld [vmem:[%s8] sm:$0x1]
  %v355 = vld [vmem:[%s9] sm:$0x1]
  %v356 = vld [vmem:[%s10] sm:$0xf]
  %v357 = vld [vmem:[%s10 + $0x4] sm:$0xf]
  %v358 = vld [vmem:[%s10 + $0x8] sm:$0xf]
  %v359 = vld [vmem:[%s10 + $0xc] sm:$0xf]
  %v360 = vld [vmem:[%s11] sm:$0x1]
  %v361 = vld [vmem:[%s12] sm:$0xf]
  %v362 = vld [vmem:[%s12 + $0x4] sm:$0xf]
  %v363 = vld [vmem:[%s12 + $0x8] sm:$0xf]
  %v364 = vld [vmem:[%s12 + $0xc] sm:$0xf]
  %v365 = vld [vmem:[%s13] sm:$0x1]
  %v366 = vld [vmem:[%s14] sm:$0x1]
  %v367 = vld [vmem:[%s15] sm:$0x1]
  %v368 = vld [vmem:[%s16] sm:$0xf]
  %v369 = vld [vmem:[%s16 + $0x4] sm:$0xf]
  %v370 = vld [vmem:[%s16 + $0x8] sm:$0xf]
  %v371 = vld [vmem:[%s16 + $0xc] sm:$0xf]
  %v372 = vld [vmem:[%s17] sm:$0x1]
  %v373 = vld [vmem:[%s18] sm:$0xf]
  %v374 = vld [vmem:[%s18 + $0x4] sm:$0xf]
  %v375 = vld [vmem:[%s18 + $0x8] sm:$0xf]
  %v376 = vld [vmem:[%s18 + $0xc] sm:$0xf]
  %v377 = vld [vmem:[%s18 + $0x10] sm:$0xf]
  %v378 = vld [vmem:[%s18 + $0x14] sm:$0xf]
  %v379 = vld [vmem:[%s18 + $0x18] sm:$0xf]
  %v380 = vld [vmem:[%s18 + $0x1c] sm:$0xf]
  %v381 = vld [vmem:[%s18 + $0x20] sm:$0xf]
  %v382 = vld [vmem:[%s18 + $0x24] sm:$0xf]
  %v383 = vld [vmem:[%s18 + $0x28] sm:$0xf]
  %v384 = vld [vmem:[%s18 + $0x2c] sm:$0xf]
  %v385 = vld [vmem:[%s18 + $0x30] sm:$0xf]
  %v386 = vld [vmem:[%s18 + $0x34] sm:$0xf]
  %v387 = vld [vmem:[%s18 + $0x38] sm:$0xf]
  %v388 = vld [vmem:[%s18 + $0x3c] sm:$0xf]
  %v389 = vld [vmem:[%s19] sm:$0x1]
  %v390 = vsel %vm307, %v350, 0.0
  %391 = vadd.xlane.f32.xlu0 %v390
  %v392 = vpop.xlane.xlu0 %391
  %v393 = vsel %vm311, %v351, 0.0
  %394 = vadd.xlane.f32.xlu0 %v393
  %v395 = vpop.xlane.xlu0 %394
  %v396 = vmul.f32 %v392, %v315
  %v397 = vmul.f32 %v395, %v315
  %v398 = vsub.f32 %v350, %v396
  %v399 = vsub.f32 %v351, %v397
  %v400 = vmul.f32 %v398, %v398
  %v401 = vmul.f32 %v399, %v399
  %v402 = vsel %vm307, %v400, 0.0
  %403 = vadd.xlane.f32.xlu0 %v402
  %v404 = vpop.xlane.xlu0 %403
  %v405 = vsel %vm311, %v401, 0.0
  %406 = vadd.xlane.f32.xlu0 %v405
  %v407 = vpop.xlane.xlu0 %406
  %v408 = vmul.f32 %v404, %v315
  %v409 = vmul.f32 %v407, %v315
  %v410 = vadd.f32 %v408, 1e-05
  %v411 = vadd.f32 %v409, 1e-05
  %v412 = vrsqrt.pop %v410
  %v413 = vrsqrt.pop %v411
  %v414 = vmul.f32 %v398, %v412
  %v415 = vmul.f32 %v399, %v413
  %v417 = vlaneseq
  %v418 = vshrl.u32 %v417, 7
  %v419 = vsub.s32 0, %v418
  %v420 = vrot.slane %v354, %v419
  %v422 = vmul.f32 %v414, %v420
  %v423 = vmul.f32 %v415, %v420
  %v425 = vlaneseq
  %v426 = vshrl.u32 %v425, 7
  %v427 = vsub.s32 0, %v426
  %v428 = vrot.slane %v355, %v427
  %v430 = vadd.f32 %v422, %v428
  %v431 = vadd.f32 %v423, %v428
  %v432 = vpack.c.bf16 %v431, %v430
  %v434 = vlaneseq
  %v435 = vshrl.u32 %v434, 7
  %v436 = vsub.s32 0, %v435
  %v437 = vrot.slane %v360, %v436
  %v443 = vunpack.c.l.b16 %v356
  %v444 = vunpack.c.l.b16 %v357
  %v445 = vunpack.c.l.b16 %v358
  %v446 = vunpack.c.l.b16 %v359
  %v447 = vpack.c.b16 %v444, %v443
  %v448 = vpack.c.b16 %v446, %v445
  %v452 = vsel %vm307, %v432, 0
  %454 = vmatprep.subr.bf16.mxu0 0
  %455 = vmatpush1.bf16.msra.mxu0 %v447
  %456 = vmatprep.subr.bf16.mxu0 0
  %457 = vmatpush1.bf16.msra.mxu0 %v448
  %458 = vmatprep.subr.bf16.mxu0 0
  %459 = vmatpush1.bf16.msra.mxu0 0
  %460 = vmatprep.subr.bf16.mxu0 0
  %461 = vmatpush1.bf16.msra.mxu0 0
  %462 = vmatprep.subr.bf16.mxu0 0
  %463 = vmatpush1.bf16.msra.mxu0 0
  %464 = vmatprep.subr.bf16.mxu0 0
  %465 = vmatpush1.bf16.msra.mxu0 0
  %466 = vmatprep.subr.bf16.mxu0 0
  %467 = vmatpush1.bf16.msra.mxu0 0
  %468 = vmatprep.subr.bf16.mxu0 0
  %469 = vmatpush1.bf16.msra.mxu0 0
  %470 = vmatprep.subr.bf16.mxu0 0
  %471 = vmatpush1.bf16.msra.mxu0 0
  %472 = vmatprep.subr.bf16.mxu0 0
  %473 = vmatpush1.bf16.msra.mxu0 0
  %474 = vmatprep.subr.bf16.mxu0 0
  %475 = vmatpush1.bf16.msra.mxu0 0
  %476 = vmatprep.subr.bf16.mxu0 0
  %477 = vmatpush1.bf16.msra.mxu0 0
  %478 = vmatprep.subr.bf16.mxu0 0
  %479 = vmatpush1.bf16.msra.mxu0 0
  %480 = vmatprep.subr.bf16.mxu0 0
  %481 = vmatpush1.bf16.msra.mxu0 0
  %482 = vmatprep.subr.bf16.mxu0 0
  %483 = vmatpush1.bf16.msra.mxu0 0
  %484 = vmatprep.subr.bf16.mxu0 0
  %485 = vmatpush1.bf16.msra.mxu0 0
  %486 = vmatprep.mubr.bf16.mxu0 0
  %487 = vmatmul.mubr.bf16.gmra.mrb[0].mxu0 %v452
  %v488 = vpop.f32.mrb[0].mxu0
  %v489 = vadd.f32 %v437, %v488
  %v490 = vpop.f32.mrb[0].mxu0
  %v491 = vpop.f32.mrb[0].mxu0
  %v492 = vadd.f32 %v437, %v491
  %v493 = vpop.f32.mrb[0].mxu0
  %494 = vdwg.mxu0
  %v495 = vpack.c.bf16 %v492, %v489
  %497 = vrot.lane.b32.xlu0 %v495, 96
  %v498 = vpop.permute.xlu0 %497
  %vm499 = vcmask 130048
  %v501 = vsel %vm499, %v495, 0
  %v504 = vsel %vm499, %v498, 0
  %506 = vmatprep.subr.bf16.mxu0 0
  %507 = vmatpush1.bf16.xpose.msra.mxu0 %v504
  %508 = vmatprep.subr.bf16.mxu0 0
  %509 = vmatpush1.bf16.xpose.msra.mxu0 0
  %510 = vmatprep.subr.bf16.mxu0 0
  %511 = vmatpush1.bf16.xpose.msra.mxu0 0
  %512 = vmatprep.subr.bf16.mxu0 0
  %513 = vmatpush1.bf16.xpose.msra.mxu0 0
  %514 = vmatprep.subr.bf16.mxu0 0
  %515 = vmatpush1.bf16.xpose.msra.mxu0 0
  %516 = vmatprep.subr.bf16.mxu0 0
  %517 = vmatpush1.bf16.xpose.msra.mxu0 0
  %518 = vmatprep.subr.bf16.mxu0 0
  %519 = vmatpush1.bf16.xpose.msra.mxu0 0
  %520 = vmatprep.subr.bf16.mxu0 0
  %521 = vmatpush1.bf16.xpose.msra.mxu0 0
  %522 = vmatprep.subr.bf16.mxu0 0
  %523 = vmatpush1.bf16.xpose.msra.mxu0 0
  %524 = vmatprep.subr.bf16.mxu0 0
  %525 = vmatpush1.bf16.xpose.msra.mxu0 0
  %526 = vmatprep.subr.bf16.mxu0 0
  %527 = vmatpush1.bf16.xpose.msra.mxu0 0
  %528 = vmatprep.subr.bf16.mxu0 0
  %529 = vmatpush1.bf16.xpose.msra.mxu0 0
  %530 = vmatprep.subr.bf16.mxu0 0
  %531 = vmatpush1.bf16.xpose.msra.mxu0 0
  %532 = vmatprep.subr.bf16.mxu0 0
  %533 = vmatpush1.bf16.xpose.msra.mxu0 0
  %534 = vmatprep.subr.bf16.mxu0 0
  %535 = vmatpush1.bf16.xpose.msra.mxu0 0
  %536 = vmatprep.subr.bf16.mxu0 0
  %537 = vmatpush1.bf16.xpose.msra.mxu0 0
  %538 = vmatprep.mubr.bf16.mxu0 0
  %539 = vmatmul.mubr.bf16.gmra.mrb[0].mxu0 %v501
  %v540 = vpop.f32.mrb[0].mxu0
  %v541 = vadd.f32 0.0, %v540
  %v542 = vpop.f32.mrb[0].mxu0
  %v543 = vpop.f32.mrb[0].mxu0
  %v544 = vadd.f32 0.0, %v543
  %v545 = vpop.f32.mrb[0].mxu0
  %546 = vdwg.mxu0
  %v547 = vmul.f32 %v541, 0.25
  %v548 = vmul.f32 %v544, 0.25
  %v549 = vadd.f32 %v547, %v352
  %v550 = vadd.f32 %v548, %v353
  %vm551 = vcmask 80896
  %v552 = vsel %vm551, %v549, -inf
  %553 = vmax.xlane.f32.xlu0 %v552
  %v554 = vpop.xlane.xlu0 %553
  %vm555 = vcmask 74752
  %v556 = vsel %vm555, %v550, -inf
  %557 = vmax.xlane.f32.xlu0 %v556
  %v558 = vpop.xlane.xlu0 %557
  %v559 = vsub.f32 %v549, %v554
  %v560 = vsub.f32 %v550, %v558
  %v561 = vmul.f32 %v559, 1.442695
  %v562 = vpow.pop %v561
  %v563 = vmul.f32 %v560, 1.442695
  %v564 = vpow.pop %v563
  %v565 = vsel %vm551, %v562, 0.0
  %566 = vadd.xlane.f32.xlu0 %v565
  %v567 = vpop.xlane.xlu0 %566
  %v568 = vsel %vm555, %v564, 0.0
  %569 = vadd.xlane.f32.xlu0 %v568
  %v570 = vpop.xlane.xlu0 %569
  %v571 = vrcp.pop %v567
  %v572 = vrcp.pop %v570
  %v573 = vmul.f32 %v562, %v571
  %v574 = vmul.f32 %v564, %v572
  %v575 = vpack.c.bf16 %v574, %v573
  %576 = vrot.lane.b32.xlu0 %v495, 64
  %v577 = vpop.permute.xlu0 %576
  %v579 = vsel %vm551, %v575, 0
  %vm581 = vcmask 1044480
  %v583 = vsel %vm581, %v577, 0
  %585 = vmatprep.subr.bf16.mxu0 0
  %586 = vmatpush1.bf16.msra.mxu0 %v583
  %587 = vmatprep.subr.bf16.mxu0 0
  %588 = vmatpush1.bf16.msra.mxu0 0
  %589 = vmatprep.subr.bf16.mxu0 0
  %590 = vmatpush1.bf16.msra.mxu0 0
  %591 = vmatprep.subr.bf16.mxu0 0
  %592 = vmatpush1.bf16.msra.mxu0 0
  %593 = vmatprep.subr.bf16.mxu0 0
  %594 = vmatpush1.bf16.msra.mxu0 0
  %595 = vmatprep.subr.bf16.mxu0 0
  %596 = vmatpush1.bf16.msra.mxu0 0
  %597 = vmatprep.subr.bf16.mxu0 0
  %598 = vmatpush1.bf16.msra.mxu0 0
  %599 = vmatprep.subr.bf16.mxu0 0
  %600 = vmatpush1.bf16.msra.mxu0 0
  %601 = vmatprep.subr.bf16.mxu0 0
  %602 = vmatpush1.bf16.msra.mxu0 0
  %603 = vmatprep.subr.bf16.mxu0 0
  %604 = vmatpush1.bf16.msra.mxu0 0
  %605 = vmatprep.subr.bf16.mxu0 0
  %606 = vmatpush1.bf16.msra.mxu0 0
  %607 = vmatprep.subr.bf16.mxu0 0
  %608 = vmatpush1.bf16.msra.mxu0 0
  %609 = vmatprep.subr.bf16.mxu0 0
  %610 = vmatpush1.bf16.msra.mxu0 0
  %611 = vmatprep.subr.bf16.mxu0 0
  %612 = vmatpush1.bf16.msra.mxu0 0
  %613 = vmatprep.subr.bf16.mxu0 0
  %614 = vmatpush1.bf16.msra.mxu0 0
  %615 = vmatprep.subr.bf16.mxu0 0
  %616 = vmatpush1.bf16.msra.mxu0 0
  %617 = vmatprep.mubr.bf16.mxu0 0
  %618 = vmatmul.mubr.bf16.gmra.mrb[0].mxu0 %v579
  %v619 = vpop.f32.mrb[0].mxu0
  %v620 = vadd.f32 0.0, %v619
  %v621 = vpop.f32.mrb[0].mxu0
  %v622 = vpop.f32.mrb[0].mxu0
  %v623 = vadd.f32 0.0, %v622
  %v624 = vpop.f32.mrb[0].mxu0
  %625 = vdwg.mxu0
  %v626 = vpack.c.bf16 %v623, %v620
  %627 = vrot.lane.b32.xlu0 %v495, 112
  %v628 = vpop.permute.xlu0 %627
  %629 = vrot.lane.b32.xlu0 %v495, 80
  %v630 = vpop.permute.xlu0 %629
  %v632 = vsel %vm499, %v628, 0
  %v635 = vsel %vm499, %v630, 0
  %637 = vmatprep.subr.bf16.mxu0 0
  %638 = vmatpush1.bf16.xpose.msra.mxu0 %v635
  %639 = vmatprep.subr.bf16.mxu0 0
  %640 = vmatpush1.bf16.xpose.msra.mxu0 0
  %641 = vmatprep.subr.bf16.mxu0 0
  %642 = vmatpush1.bf16.xpose.msra.mxu0 0
  %643 = vmatprep.subr.bf16.mxu0 0
  %644 = vmatpush1.bf16.xpose.msra.mxu0 0
  %645 = vmatprep.subr.bf16.mxu0 0
  %646 = vmatpush1.bf16.xpose.msra.mxu0 0
  %647 = vmatprep.subr.bf16.mxu0 0
  %648 = vmatpush1.bf16.xpose.msra.mxu0 0
  %649 = vmatprep.subr.bf16.mxu0 0
  %650 = vmatpush1.bf16.xpose.msra.mxu0 0
  %651 = vmatprep.subr.bf16.mxu0 0
  %652 = vmatpush1.bf16.xpose.msra.mxu0 0
  %653 = vmatprep.subr.bf16.mxu0 0
  %654 = vmatpush1.bf16.xpose.msra.mxu0 0
  %655 = vmatprep.subr.bf16.mxu0 0
  %656 = vmatpush1.bf16.xpose.msra.mxu0 0
  %657 = vmatprep.subr.bf16.mxu0 0
  %658 = vmatpush1.bf16.xpose.msra.mxu0 0
  %659 = vmatprep.subr.bf16.mxu0 0
  %660 = vmatpush1.bf16.xpose.msra.mxu0 0
  %661 = vmatprep.subr.bf16.mxu0 0
  %662 = vmatpush1.bf16.xpose.msra.mxu0 0
  %663 = vmatprep.subr.bf16.mxu0 0
  %664 = vmatpush1.bf16.xpose.msra.mxu0 0
  %665 = vmatprep.subr.bf16.mxu0 0
  %666 = vmatpush1.bf16.xpose.msra.mxu0 0
  %667 = vmatprep.subr.bf16.mxu0 0
  %668 = vmatpush1.bf16.xpose.msra.mxu0 0
  %669 = vmatprep.mubr.bf16.mxu0 0
  %670 = vmatmul.mubr.bf16.gmra.mrb[0].mxu0 %v632
  %v671 = vpop.f32.mrb[0].mxu0
  %v672 = vadd.f32 0.0, %v671
  %v673 = vpop.f32.mrb[0].mxu0
  %v674 = vpop.f32.mrb[0].mxu0
  %v675 = vadd.f32 0.0, %v674
  %v676 = vpop.f32.mrb[0].mxu0
  %677 = vdwg.mxu0
  %v678 = vmul.f32 %v672, 0.25
  %v679 = vmul.f32 %v675, 0.25
  %v680 = vadd.f32 %v678, %v352
  %v681 = vadd.f32 %v679, %v353
  %v682 = vsel %vm551, %v680, -inf
  %683 = vmax.xlane.f32.xlu0 %v682
  %v684 = vpop.xlane.xlu0 %683
  %v685 = vsel %vm555, %v681, -inf
  %686 = vmax.xlane.f32.xlu0 %v685
  %v687 = vpop.xlane.xlu0 %686
  %v688 = vsub.f32 %v680, %v684
  %v689 = vsub.f32 %v681, %v687
  %v690 = vmul.f32 %v688, 1.442695
  %v691 = vpow.pop %v690
  %v692 = vmul.f32 %v689, 1.442695
  %v693 = vpow.pop %v692
  %v694 = vsel %vm551, %v691, 0.0
  %695 = vadd.xlane.f32.xlu0 %v694
  %v696 = vpop.xlane.xlu0 %695
  %v697 = vsel %vm555, %v693, 0.0
  %698 = vadd.xlane.f32.xlu0 %v697
  %v699 = vpop.xlane.xlu0 %698
  %v700 = vrcp.pop %v696
  %v701 = vrcp.pop %v699
  %v702 = vmul.f32 %v691, %v700
  %v703 = vmul.f32 %v693, %v701
  %v704 = vpack.c.bf16 %v703, %v702
  %705 = vrot.lane.b32.xlu0 %v495, 48
  %v706 = vpop.permute.xlu0 %705
  %v708 = vsel %vm551, %v704, 0
  %v711 = vsel %vm581, %v706, 0
  %713 = vmatprep.subr.bf16.mxu0 0
  %714 = vmatpush1.bf16.msra.mxu0 %v711
  %715 = vmatprep.subr.bf16.mxu0 0
  %716 = vmatpush1.bf16.msra.mxu0 0
  %717 = vmatprep.subr.bf16.mxu0 0
  %718 = vmatpush1.bf16.msra.mxu0 0
  %719 = vmatprep.subr.bf16.mxu0 0
  %720 = vmatpush1.bf16.msra.mxu0 0
  %721 = vmatprep.subr.bf16.mxu0 0
  %722 = vmatpush1.bf16.msra.mxu0 0
  %723 = vmatprep.subr.bf16.mxu0 0
  %724 = vmatpush1.bf16.msra.mxu0 0
  %725 = vmatprep.subr.bf16.mxu0 0
  %726 = vmatpush1.bf16.msra.mxu0 0
  %727 = vmatprep.subr.bf16.mxu0 0
  %728 = vmatpush1.bf16.msra.mxu0 0
  %729 = vmatprep.subr.bf16.mxu0 0
  %730 = vmatpush1.bf16.msra.mxu0 0
  %731 = vmatprep.subr.bf16.mxu0 0
  %732 = vmatpush1.bf16.msra.mxu0 0
  %733 = vmatprep.subr.bf16.mxu0 0
  %734 = vmatpush1.bf16.msra.mxu0 0
  %735 = vmatprep.subr.bf16.mxu0 0
  %736 = vmatpush1.bf16.msra.mxu0 0
  %737 = vmatprep.subr.bf16.mxu0 0
  %738 = vmatpush1.bf16.msra.mxu0 0
  %739 = vmatprep.subr.bf16.mxu0 0
  %740 = vmatpush1.bf16.msra.mxu0 0
  %741 = vmatprep.subr.bf16.mxu0 0
  %742 = vmatpush1.bf16.msra.mxu0 0
  %743 = vmatprep.subr.bf16.mxu0 0
  %744 = vmatpush1.bf16.msra.mxu0 0
  %745 = vmatprep.mubr.bf16.mxu0 0
  %746 = vmatmul.mubr.bf16.gmra.mrb[0].mxu0 %v708
  %v747 = vpop.f32.mrb[0].mxu0
  %v748 = vadd.f32 0.0, %v747
  %v749 = vpop.f32.mrb[0].mxu0
  %v750 = vpop.f32.mrb[0].mxu0
  %v751 = vadd.f32 0.0, %v750
  %v752 = vpop.f32.mrb[0].mxu0
  %753 = vdwg.mxu0
  %v754 = vpack.c.bf16 %v751, %v748
  %v757 = vunpack.c.l.b16 %v363
  %v758 = vunpack.c.l.b16 %v364
  %v759 = vpack.c.b16 %v758, %v757
  %v762 = vsel %vm499, %v754, 0
  %764 = vmatprep.subr.bf16.mxu0 0
  %765 = vmatpush1.bf16.msra.mxu0 %v759
  %766 = vmatprep.subr.bf16.mxu0 0
  %767 = vmatpush1.bf16.msra.mxu0 0
  %768 = vmatprep.subr.bf16.mxu0 0
  %769 = vmatpush1.bf16.msra.mxu0 0
  %770 = vmatprep.subr.bf16.mxu0 0
  %771 = vmatpush1.bf16.msra.mxu0 0
  %772 = vmatprep.subr.bf16.mxu0 0
  %773 = vmatpush1.bf16.msra.mxu0 0
  %774 = vmatprep.subr.bf16.mxu0 0
  %775 = vmatpush1.bf16.msra.mxu0 0
  %776 = vmatprep.subr.bf16.mxu0 0
  %777 = vmatpush1.bf16.msra.mxu0 0
  %778 = vmatprep.subr.bf16.mxu0 0
  %779 = vmatpush1.bf16.msra.mxu0 0
  %780 = vmatprep.subr.bf16.mxu0 0
  %781 = vmatpush1.bf16.msra.mxu0 0
  %782 = vmatprep.subr.bf16.mxu0 0
  %783 = vmatpush1.bf16.msra.mxu0 0
  %784 = vmatprep.subr.bf16.mxu0 0
  %785 = vmatpush1.bf16.msra.mxu0 0
  %786 = vmatprep.subr.bf16.mxu0 0
  %787 = vmatpush1.bf16.msra.mxu0 0
  %788 = vmatprep.subr.bf16.mxu0 0
  %789 = vmatpush1.bf16.msra.mxu0 0
  %790 = vmatprep.subr.bf16.mxu0 0
  %791 = vmatpush1.bf16.msra.mxu0 0
  %792 = vmatprep.subr.bf16.mxu0 0
  %793 = vmatpush1.bf16.msra.mxu0 0
  %794 = vmatprep.subr.bf16.mxu0 0
  %795 = vmatpush1.bf16.msra.mxu0 0
  %796 = vmatprep.mubr.bf16.mxu0 0
  %797 = vmatmul.mubr.bf16.gmra.mrb[0].mxu0 %v762
  %v798 = vpop.f32.mrb[0].mxu0
  %v799 = vadd.f32 0.0, %v798
  %v800 = vpop.f32.mrb[0].mxu0
  %v801 = vpop.f32.mrb[0].mxu0
  %v802 = vadd.f32 0.0, %v801
  %v803 = vpop.f32.mrb[0].mxu0
  %804 = vdwg.mxu0
  %v807 = vunpack.c.l.b16 %v361
  %v808 = vunpack.c.l.b16 %v362
  %v809 = vpack.c.b16 %v808, %v807
  %v812 = vsel %vm499, %v626, 0
  %814 = vmatprep.subr.bf16.mxu0 0
  %815 = vmatpush1.bf16.msra.mxu0 %v809
  %816 = vmatprep.subr.bf16.mxu0 0
  %817 = vmatpush1.bf16.msra.mxu0 0
  %818 = vmatprep.subr.bf16.mxu0 0
  %819 = vmatpush1.bf16.msra.mxu0 0
  %820 = vmatprep.subr.bf16.mxu0 0
  %821 = vmatpush1.bf16.msra.mxu0 0
  %822 = vmatprep.subr.bf16.mxu0 0
  %823 = vmatpush1.bf16.msra.mxu0 0
  %824 = vmatprep.subr.bf16.mxu0 0
  %825 = vmatpush1.bf16.msra.mxu0 0
  %826 = vmatprep.subr.bf16.mxu0 0
  %827 = vmatpush1.bf16.msra.mxu0 0
  %828 = vmatprep.subr.bf16.mxu0 0
  %829 = vmatpush1.bf16.msra.mxu0 0
  %830 = vmatprep.subr.bf16.mxu0 0
  %831 = vmatpush1.bf16.msra.mxu0 0
  %832 = vmatprep.subr.bf16.mxu0 0
  %833 = vmatpush1.bf16.msra.mxu0 0
  %834 = vmatprep.subr.bf16.mxu0 0
  %835 = vmatpush1.bf16.msra.mxu0 0
  %836 = vmatprep.subr.bf16.mxu0 0
  %837 = vmatpush1.bf16.msra.mxu0 0
  %838 = vmatprep.subr.bf16.mxu0 0
  %839 = vmatpush1.bf16.msra.mxu0 0
  %840 = vmatprep.subr.bf16.mxu0 0
  %841 = vmatpush1.bf16.msra.mxu0 0
  %842 = vmatprep.subr.bf16.mxu0 0
  %843 = vmatpush1.bf16.msra.mxu0 0
  %844 = vmatprep.subr.bf16.mxu0 0
  %845 = vmatpush1.bf16.msra.mxu0 0
  %846 = vmatprep.mubr.bf16.mxu0 0
  %847 = vmatmul.mubr.bf16.gmra.mrb[0].mxu0 %v812
  %v848 = vpop.f32.mrb[0].mxu0
  %v849 = vadd.f32 %v799, %v848
  %v850 = vpop.f32.mrb[0].mxu0
  %v851 = vpop.f32.mrb[0].mxu0
  %v852 = vadd.f32 %v802, %v851
  %v853 = vpop.f32.mrb[0].mxu0
  %854 = vdwg.mxu0
  %v856 = vlaneseq
  %v857 = vshrl.u32 %v856, 7
  %v858 = vsub.s32 0, %v857
  %v859 = vrot.slane %v365, %v858
  %v861 = vadd.f32 %v849, %v859
  %v862 = vadd.f32 %v852, %v859
  %v863 = vadd.f32 %v350, %v861
  %v864 = vadd.f32 %v351, %v862
  %v865 = vsel %vm307, %v863, 0.0
  %866 = vadd.xlane.f32.xlu0 %v865
  %v867 = vpop.xlane.xlu0 %866
  %v868 = vsel %vm311, %v864, 0.0
  %869 = vadd.xlane.f32.xlu0 %v868
  %v870 = vpop.xlane.xlu0 %869
  %v871 = vmul.f32 %v867, %v315
  %v872 = vmul.f32 %v870, %v315
  %v873 = vsub.f32 %v863, %v871
  %v874 = vsub.f32 %v864, %v872
  %v875 = vmul.f32 %v873, %v873
  %v876 = vmul.f32 %v874, %v874
  %v877 = vsel %vm307, %v875, 0.0
  %878 = vadd.xlane.f32.xlu0 %v877
  %v879 = vpop.xlane.xlu0 %878
  %v880 = vsel %vm311, %v876, 0.0
  %881 = vadd.xlane.f32.xlu0 %v880
  %v882 = vpop.xlane.xlu0 %881
  %v883 = vmul.f32 %v879, %v315
  %v884 = vmul.f32 %v882, %v315
  %v885 = vadd.f32 %v883, 1e-05
  %v886 = vadd.f32 %v884, 1e-05
  %v887 = vrsqrt.pop %v885
  %v888 = vrsqrt.pop %v886
  %v889 = vmul.f32 %v873, %v887
  %v890 = vmul.f32 %v874, %v888
  %v892 = vlaneseq
  %v893 = vshrl.u32 %v892, 7
  %v894 = vsub.s32 0, %v893
  %v895 = vrot.slane %v366, %v894
  %v897 = vmul.f32 %v889, %v895
  %v898 = vmul.f32 %v890, %v895
  %v900 = vlaneseq
  %v901 = vshrl.u32 %v900, 7
  %v902 = vsub.s32 0, %v901
  %v903 = vrot.slane %v367, %v902
  %v905 = vadd.f32 %v897, %v903
  %v906 = vadd.f32 %v898, %v903
  %v907 = vpack.c.bf16 %v906, %v905
  %v909 = vlaneseq
  %v910 = vshrl.u32 %v909, 7
  %v911 = vsub.s32 0, %v910
  %v912 = vrot.slane %v372, %v911
  %v918 = vunpack.c.l.b16 %v368
  %v919 = vunpack.c.l.b16 %v369
  %v920 = vunpack.c.l.b16 %v370
  %v921 = vunpack.c.l.b16 %v371
  %v922 = vpack.c.b16 %v919, %v918
  %v923 = vpack.c.b16 %v921, %v920
  %v927 = vsel %vm307, %v907, 0
  %929 = vmatprep.subr.bf16.mxu0 0
  %930 = vmatpush1.bf16.msra.mxu0 %v922
  %931 = vmatprep.subr.bf16.mxu0 0
  %932 = vmatpush1.bf16.msra.mxu0 %v923
  %933 = vmatprep.subr.bf16.mxu0 0
  %934 = vmatpush1.bf16.msra.mxu0 0
  %935 = vmatprep.subr.bf16.mxu0 0
  %936 = vmatpush1.bf16.msra.mxu0 0
  %937 = vmatprep.subr.bf16.mxu0 0
  %938 = vmatpush1.bf16.msra.mxu0 0
  %939 = vmatprep.subr.bf16.mxu0 0
  %940 = vmatpush1.bf16.msra.mxu0 0
  %941 = vmatprep.subr.bf16.mxu0 0
  %942 = vmatpush1.bf16.msra.mxu0 0
  %943 = vmatprep.subr.bf16.mxu0 0
  %944 = vmatpush1.bf16.msra.mxu0 0
  %945 = vmatprep.subr.bf16.mxu0 0
  %946 = vmatpush1.bf16.msra.mxu0 0
  %947 = vmatprep.subr.bf16.mxu0 0
  %948 = vmatpush1.bf16.msra.mxu0 0
  %949 = vmatprep.subr.bf16.mxu0 0
  %950 = vmatpush1.bf16.msra.mxu0 0
  %951 = vmatprep.subr.bf16.mxu0 0
  %952 = vmatpush1.bf16.msra.mxu0 0
  %953 = vmatprep.subr.bf16.mxu0 0
  %954 = vmatpush1.bf16.msra.mxu0 0
  %955 = vmatprep.subr.bf16.mxu0 0
  %956 = vmatpush1.bf16.msra.mxu0 0
  %957 = vmatprep.subr.bf16.mxu0 0
  %958 = vmatpush1.bf16.msra.mxu0 0
  %959 = vmatprep.subr.bf16.mxu0 0
  %960 = vmatpush1.bf16.msra.mxu0 0
  %961 = vmatprep.mubr.bf16.mxu0 0
  %962 = vmatmul.mubr.bf16.gmra.mrb[0].mxu0 %v927
  %v963 = vpop.f32.mrb[0].mxu0
  %v964 = vadd.f32 %v912, %v963
  %v965 = vpop.f32.mrb[0].mxu0
  %v966 = vpop.f32.mrb[0].mxu0
  %v967 = vadd.f32 %v912, %v966
  %v968 = vpop.f32.mrb[0].mxu0
  %969 = vdwg.mxu0
  %v970 = vmul.f32 %v964, -1.702
  %v971 = vmul.f32 %v967, -1.702
  %v972 = vmul.f32 %v970, 1.442695
  %v973 = vpow.pop %v972
  %v974 = vmul.f32 %v971, 1.442695
  %v975 = vpow.pop %v974
  %v976 = vadd.f32 %v973, 1.0
  %v977 = vadd.f32 %v975, 1.0
  %v978 = vrcp.pop %v976
  %v979 = vrcp.pop %v977
  %v980 = vmul.f32 %v964, %v978
  %v981 = vmul.f32 %v967, %v979
  %v982 = vpack.c.bf16 %v981, %v980
  %v984 = vlaneseq
  %v985 = vshrl.u32 %v984, 7
  %v986 = vsub.s32 0, %v985
  %v987 = vrot.slane %v389, %v986
  %v1005 = vunpack.c.l.b16 %v373
  %v1006 = vunpack.c.l.b16 %v374
  %v1007 = vunpack.c.l.b16 %v375
  %v1008 = vunpack.c.l.b16 %v376
  %v1009 = vunpack.c.l.b16 %v377
  %v1010 = vunpack.c.l.b16 %v378
  %v1011 = vunpack.c.l.b16 %v379
  %v1012 = vunpack.c.l.b16 %v380
  %v1013 = vunpack.c.l.b16 %v381
  %v1014 = vunpack.c.l.b16 %v382
  %v1015 = vunpack.c.l.b16 %v383
  %v1016 = vunpack.c.l.b16 %v384
  %v1017 = vunpack.c.l.b16 %v385
  %v1018 = vunpack.c.l.b16 %v386
  %v1019 = vunpack.c.l.b16 %v387
  %v1020 = vunpack.c.l.b16 %v388
  %v1021 = vpack.c.b16 %v1006, %v1005
  %v1022 = vpack.c.b16 %v1008, %v1007
  %v1023 = vpack.c.b16 %v1010, %v1009
  %v1024 = vpack.c.b16 %v1012, %v1011
  %v1025 = vpack.c.b16 %v1014, %v1013
  %v1026 = vpack.c.b16 %v1016, %v1015
  %v1027 = vpack.c.b16 %v1018, %v1017
  %v1028 = vpack.c.b16 %v1020, %v1019
  %1037 = vmatprep.subr.bf16.mxu0 0
  %1038 = vmatpush1.bf16.msra.mxu0 %v1021
  %1039 = vmatprep.subr.bf16.mxu0 0
  %1040 = vmatpush1.bf16.msra.mxu0 %v1022
  %1041 = vmatprep.subr.bf16.mxu0 0
  %1042 = vmatpush1.bf16.msra.mxu0 %v1023
  %1043 = vmatprep.subr.bf16.mxu0 0
  %1044 = vmatpush1.bf16.msra.mxu0 %v1024
  %1045 = vmatprep.subr.bf16.mxu0 0
  %1046 = vmatpush1.bf16.msra.mxu0 %v1025
  %1047 = vmatprep.subr.bf16.mxu0 0
  %1048 = vmatpush1.bf16.msra.mxu0 %v1026
  %1049 = vmatprep.subr.bf16.mxu0 0
  %1050 = vmatpush1.bf16.msra.mxu0 %v1027
  %1051 = vmatprep.subr.bf16.mxu0 0
  %1052 = vmatpush1.bf16.msra.mxu0 %v1028
  %1053 = vmatprep.subr.bf16.mxu0 0
  %1054 = vmatpush1.bf16.msra.mxu0 0
  %1055 = vmatprep.subr.bf16.mxu0 0
  %1056 = vmatpush1.bf16.msra.mxu0 0
  %1057 = vmatprep.subr.bf16.mxu0 0
  %1058 = vmatpush1.bf16.msra.mxu0 0
  %1059 = vmatprep.subr.bf16.mxu0 0
  %1060 = vmatpush1.bf16.msra.mxu0 0
  %1061 = vmatprep.subr.bf16.mxu0 0
  %1062 = vmatpush1.bf16.msra.mxu0 0
  %1063 = vmatprep.subr.bf16.mxu0 0
  %1064 = vmatpush1.bf16.msra.mxu0 0
  %1065 = vmatprep.subr.bf16.mxu0 0
  %1066 = vmatpush1.bf16.msra.mxu0 0
  %1067 = vmatprep.subr.bf16.mxu0 0
  %1068 = vmatpush1.bf16.msra.mxu0 0
  %1069 = vmatprep.mubr.bf16.mxu0 0
  %1070 = vmatmul.mubr.bf16.gmra.mrb[0].mxu0 %v982
  %v1071 = vpop.f32.mrb[0].mxu0
  %v1072 = vadd.f32 %v987, %v1071
  %v1073 = vpop.f32.mrb[0].mxu0
  %v1074 = vpop.f32.mrb[0].mxu0
  %v1075 = vadd.f32 %v987, %v1074
  %v1076 = vpop.f32.mrb[0].mxu0
  %1077 = vdwg.mxu0
  %v1078 = vadd.f32 %v863, %v1072
  %v1079 = vadd.f32 %v864, %v1075
  %v1080 = vld [vmem:[%s4] sm:$0x3]
  %v1082 = vsel %vm551, %v1080, 0
  %vm1084 = vcmask 1041408
  %v1086 = vsel %vm1084, %v1079, 0
  %1088 = vmatprep.subr.mxu0 0.0
  %1089 = vmatpush1.msra.mxu0 %v1078
  %1090 = vmatprep.subr.mxu0 0.0
  %1091 = vmatpush1.msra.mxu0 %v1086
  %1092 = vmatprep.subr.mxu0 0.0
  %1093 = vmatpush1.msra.mxu0 0.0
  %1094 = vmatprep.subr.mxu0 0.0
  %1095 = vmatpush1.msra.mxu0 0.0
  %1096 = vmatprep.subr.mxu0 0.0
  %1097 = vmatpush1.msra.mxu0 0.0
  %1098 = vmatprep.subr.mxu0 0.0
  %1099 = vmatpush1.msra.mxu0 0.0
  %1100 = vmatprep.subr.mxu0 0.0
  %1101 = vmatpush1.msra.mxu0 0.0
  %1102 = vmatprep.subr.mxu0 0.0
  %1103 = vmatpush1.msra.mxu0 0.0
  %1104 = vmatprep.subr.mxu0 0.0
  %1105 = vmatpush1.msra.mxu0 0.0
  %1106 = vmatprep.subr.mxu0 0.0
  %1107 = vmatpush1.msra.mxu0 0.0
  %1108 = vmatprep.subr.mxu0 0.0
  %1109 = vmatpush1.msra.mxu0 0.0
  %1110 = vmatprep.subr.mxu0 0.0
  %1111 = vmatpush1.msra.mxu0 0.0
  %1112 = vmatprep.subr.mxu0 0.0
  %1113 = vmatpush1.msra.mxu0 0.0
  %1114 = vmatprep.subr.mxu0 0.0
  %1115 = vmatpush1.msra.mxu0 0.0
  %1116 = vmatprep.subr.mxu0 0.0
  %1117 = vmatpush1.msra.mxu0 0.0
  %1118 = vmatprep.subr.mxu0 0.0
  %1119 = vmatpush1.msra.mxu0 0.0
  %1120 = vmatprep.subr.mxu0 0.0
  %1121 = vmatpush1.msra.mxu0 0.0
  %1122 = vmatprep.subr.mxu0 0.0
  %1123 = vmatpush1.msra.mxu0 0.0
  %1124 = vmatprep.subr.mxu0 0.0
  %1125 = vmatpush1.msra.mxu0 0.0
  %1126 = vmatprep.subr.mxu0 0.0
  %1127 = vmatpush1.msra.mxu0 0.0
  %1128 = vmatprep.subr.mxu0 0.0
  %1129 = vmatpush1.msra.mxu0 0.0
  %1130 = vmatprep.subr.mxu0 0.0
  %1131 = vmatpush1.msra.mxu0 0.0
  %1132 = vmatprep.subr.mxu0 0.0
  %1133 = vmatpush1.msra.mxu0 0.0
  %1134 = vmatprep.subr.mxu0 0.0
  %1135 = vmatpush1.msra.mxu0 0.0
  %1136 = vmatprep.subr.mxu0 0.0
  %1137 = vmatpush1.msra.mxu0 0.0
  %1138 = vmatprep.subr.mxu0 0.0
  %1139 = vmatpush1.msra.mxu0 0.0
  %1140 = vmatprep.subr.mxu0 0.0
  %1141 = vmatpush1.msra.mxu0 0.0
  %1142 = vmatprep.subr.mxu0 0.0
  %1143 = vmatpush1.msra.mxu0 0.0
  %1144 = vmatprep.subr.mxu0 0.0
  %1145 = vmatpush1.msra.mxu0 0.0
  %1146 = vmatprep.subr.mxu0 0.0
  %1147 = vmatpush1.msra.mxu0 0.0
  %1148 = vmatprep.subr.mxu0 0.0
  %1149 = vmatpush1.msra.mxu0 0.0
  %1150 = vmatprep.subr.mxu0 0.0
  %1151 = vmatpush1.msra.mxu0 0.0
  %1152 = vmatprep.mubr.f32.mxu0 0.0
  %1153 = vmatmul.mubr.f32.gmra.mrb[0].mxu0 %v1082
  %v1154 = vpop.f32.mrb[0].mxu0
  %v1155 = vadd.f32 0.0, %v1154
  %v1156 = vpop.f32.mrb[0].mxu0
  %1157 = vdwg.mxu0
  %v1158 = vld [vmem:[%s20] sm:$0x1]
  %v1159 = vld [vmem:[%s21] sm:$0x1]
  %v1160 = vsel %vm311, %v1155, 0.0
  %1161 = vadd.xlane.f32.xlu0 %v1160
  %v1162 = vpop.xlane.xlu0 %1161
  %v1163 = vmul.f32 %v1162, %v315
  %v1164 = vsub.f32 %v1155, %v1163
  %v1165 = vmul.f32 %v1164, %v1164
  %v1166 = vsel %vm311, %v1165, 0.0
  %1167 = vadd.xlane.f32.xlu0 %v1166
  %v1168 = vpop.xlane.xlu0 %1167
  %v1169 = vmul.f32 %v1168, %v315
  %v1170 = vadd.f32 %v1169, 1e-05
  %v1171 = vrsqrt.pop %v1170
  %v1172 = vmul.f32 %v1164, %v1171
  %v1174 = vlaneseq
  %v1175 = vshrl.u32 %v1174, 7
  %v1176 = vsub.s32 0, %v1175
  %v1177 = vrot.slane %v1158, %v1176
  %v1179 = vmul.f32 %v1172, %v1177
  %v1181 = vlaneseq
  %v1182 = vshrl.u32 %v1181, 7
  %v1183 = vsub.s32 0, %v1182
  %v1184 = vrot.slane %v1159, %v1183
  %v1186 = vadd.f32 %v1179, %v1184
  %v1187 = vld [vmem:[%s22] sm:$0xf]
  %v1188 = vld [vmem:[%s22 + $0x4] sm:$0xf]
  %v1189 = vld [vmem:[%s22 + $0x8] sm:$0xf]
  %v1190 = vld [vmem:[%s22 + $0xc] sm:$0xf]
  %v1191 = vpack.c.bf16 %v1186, %v1186
  %v1196 = vunpack.c.l.b16 %v1187
  %v1197 = vunpack.c.l.b16 %v1188
  %v1198 = vunpack.c.l.b16 %v1189
  %v1199 = vunpack.c.l.b16 %v1190
  %v1200 = vpack.c.b16 %v1197, %v1196
  %v1201 = vpack.c.b16 %v1199, %v1198
  %v1205 = vsel %vm307, %v1191, 0
  %1207 = vmatprep.subr.bf16.mxu0 0
  %1208 = vmatpush1.bf16.msra.mxu0 %v1200
  %1209 = vmatprep.subr.bf16.mxu0 0
  %1210 = vmatpush1.bf16.msra.mxu0 %v1201
  %1211 = vmatprep.subr.bf16.mxu0 0
  %1212 = vmatpush1.bf16.msra.mxu0 0
  %1213 = vmatprep.subr.bf16.mxu0 0
  %1214 = vmatpush1.bf16.msra.mxu0 0
  %1215 = vmatprep.subr.bf16.mxu0 0
  %1216 = vmatpush1.bf16.msra.mxu0 0
  %1217 = vmatprep.subr.bf16.mxu0 0
  %1218 = vmatpush1.bf16.msra.mxu0 0
  %1219 = vmatprep.subr.bf16.mxu0 0
  %1220 = vmatpush1.bf16.msra.mxu0 0
  %1221 = vmatprep.subr.bf16.mxu0 0
  %1222 = vmatpush1.bf16.msra.mxu0 0
  %1223 = vmatprep.subr.bf16.mxu0 0
  %1224 = vmatpush1.bf16.msra.mxu0 0
  %1225 = vmatprep.subr.bf16.mxu0 0
  %1226 = vmatpush1.bf16.msra.mxu0 0
  %1227 = vmatprep.subr.bf16.mxu0 0
  %1228 = vmatpush1.bf16.msra.mxu0 0
  %1229 = vmatprep.subr.bf16.mxu0 0
  %1230 = vmatpush1.bf16.msra.mxu0 0
  %1231 = vmatprep.subr.bf16.mxu0 0
  %1232 = vmatpush1.bf16.msra.mxu0 0
  %1233 = vmatprep.subr.bf16.mxu0 0
  %1234 = vmatpush1.bf16.msra.mxu0 0
  %1235 = vmatprep.subr.bf16.mxu0 0
  %1236 = vmatpush1.bf16.msra.mxu0 0
  %1237 = vmatprep.subr.bf16.mxu0 0
  %1238 = vmatpush1.bf16.msra.mxu0 0
  %1239 = vmatprep.mubr.bf16.mxu0 0
  %1240 = vmatmul.mubr.bf16.gmra.mrb[0].mxu0 %v1205
  %v1241 = vpop.f32.mrb[0].mxu0
  %v1242 = vadd.f32 0.0, %v1241
  %v1243 = vpop.f32.mrb[0].mxu0
  %v1244 = vpop.f32.mrb[0].mxu0
  %v1245 = vpop.f32.mrb[0].mxu0
  %1246 = vdwg.mxu0
  %1247 = vst.msk [vmem:[%s23] sm:$0x3] %vm311, %v1242
  // Predicated region
  $region94: #{clip_forward.4} parent=0 // pred_check
    _
  $region95: #{clip_forward.4} parent=0 // pred_check_branch
    %1249 = sbr.rel (0) target = $region97
  $region96: #{clip_forward.4} parent=0 // pred_region
    _
  $region97: #{clip_forward.4} parent=0 // pred_fallthru
    _
  // Predicated region
  $region98: #{clip_forward.4} parent=0 // pred_check
    _
  $region99: #{clip_forward.4} parent=0 // pred_check_branch
    %1251 = sbr.rel (0) target = $region101
  $region100: #{clip_forward.4} parent=0 // pred_region
    _
  $region101: #{clip_forward.4} parent=0 // pred_fallthru
    _

</llo_original>
